<compile_context>
chip_gen: v7x
topology: tpu7x:2x2x1
jax: 0.10.0
libtpu: 0.0.40
codegen_flags: <defaults>
</compile_context>

<pallas_src>
import functools

import jax
import jax.numpy as jnp
from jax.experimental import pallas as pl
from jax.experimental.pallas import tpu as pltpu


# -----------------------------------------------------------------------------
# Model configuration (small deterministic ViT; structure matches ViTModel)
# -----------------------------------------------------------------------------
IMG = 16
PATCH = 8
CHANNELS = 3
HIDDEN = 32
N_HEADS = 2
HEAD_DIM = HIDDEN // N_HEADS
N_LAYERS = 2
MLP = 4 * HIDDEN
N_PATCHES = (IMG // PATCH) ** 2
SEQ = N_PATCHES + 1            # +1 for [CLS]
SEQ_PAD = 8                    # pad each image's sequence to one sublane tile
CPP = CHANNELS * PATCH * PATCH  # flattened patch size
LN_EPS = 1e-12                 # HF ViT layer_norm_eps

VROWS_PER_LAYER = 13           # rows in the vector slab per transformer layer


# -----------------------------------------------------------------------------
# Fused whole-encoder kernel (one grid step == BT images)
# -----------------------------------------------------------------------------
def _vit_encoder_kernel(
    tok_ref,     # (BT*SEQ_PAD, CPP)  bf16; per image: [0(cls slot), patches, 0-pad]
    add_ref,     # (BT*SEQ_PAD, HIDDEN) f32; per image: [cls+pos0, patch_b+pos1.., 0]
    w16_ref,     # (L*3*NH, HIDDEN, HEAD_DIM) bf16; per-head Wq/Wk/Wv
    w32_ref,     # (CPP + L*(NH*HEAD_DIM + MLP), HIDDEN) bf16; patch_w | wo(per head) | w2
    w128_ref,    # (L, HIDDEN, MLP) bf16; w1
    vec_ref,     # (L*13 + 2, 128) f32; gammas/betas/biases, one vector per row
    out_ref,     # (BT*SEQ_PAD, HIDDEN) f32
    *, bt, n_layers, n_heads, eps):

    h_dim = out_ref.shape[-1]
    dh = h_dim // n_heads
    m = bt * SEQ_PAD
    scale = 1.0 / float(dh) ** 0.5

    def vrow(i, width):                 # one packed parameter vector, (1, width)
        return vec_ref[i:i + 1, 0:width]

    def layernorm(x, g, b):
        mu = jnp.mean(x, axis=-1, keepdims=True)
        var = jnp.mean(jnp.square(x - mu), axis=-1, keepdims=True)
        return (x - mu) * jax.lax.rsqrt(var + eps) * g + b

    def mm(a, w):                       # bf16 MXU operands, f32 accumulation
        return jax.lax.dot_general(
            a.astype(jnp.bfloat16), w.astype(jnp.bfloat16),
            dimension_numbers=(((1,), (0,)), ((), ())),
            preferred_element_type=jnp.float32)

    # Key-column mask: padded sequence slots (col >= SEQ) never attended to.
    col = jax.lax.broadcasted_iota(jnp.int32, (SEQ_PAD, SEQ_PAD), 1)
    neg_mask = jnp.where(col >= SEQ, -1e9, 0.0)

    # Patch embedding for the whole slab; CLS / bias / position terms are folded
    # into add_ref (CLS token rows are zero, so matmul contributes nothing there).
    x = mm(tok_ref[...], w32_ref[0:CPP, :]) + add_ref[...]        # (m, HIDDEN) f32

    for l in range(n_layers):
        vl = l * VROWS_PER_LAYER
        base32 = CPP + l * (n_heads * dh + MLP)

        # ---------------- self-attention block (pre-LN) ----------------
        x2 = layernorm(x, vrow(vl + 0, h_dim), vrow(vl + 1, h_dim))
        attn = jnp.zeros_like(x)
        for h in range(n_heads):
            q = mm(x2, w16_ref[(l * 3 + 0) * n_heads + h]) + vrow(vl + 2 + 0 * n_heads + h, dh)
            k = mm(x2, w16_ref[(l * 3 + 1) * n_heads + h]) + vrow(vl + 2 + 1 * n_heads + h, dh)
            v = mm(x2, w16_ref[(l * 3 + 2) * n_heads + h]) + vrow(vl + 2 + 2 * n_heads + h, dh)
            # batch over the BT images in this step (8-row groups are
            # sublane-aligned, so these reshapes are pure layout)
            q3 = q.reshape(bt, SEQ_PAD, dh).astype(jnp.bfloat16)
            k3 = k.reshape(bt, SEQ_PAD, dh).astype(jnp.bfloat16)
            v3 = v.reshape(bt, SEQ_PAD, dh).astype(jnp.bfloat16)
            s = jnp.einsum("bqd,bkd->bqk", q3, k3,
                           preferred_element_type=jnp.float32) * scale + neg_mask
            # softmax; max-subtraction dropped (scores are small/bounded here)
            p = jnp.exp(s)
            p = p * pl.reciprocal(jnp.sum(p, axis=-1, keepdims=True), approx=True)
            ctx = jnp.einsum("bqk,bkd->bqd", p.astype(jnp.bfloat16), v3,
                             preferred_element_type=jnp.float32)
            ctx = ctx.reshape(m, dh)
            # fold this head's slice of the output projection in directly
            attn = attn + mm(ctx, w32_ref[base32 + h * dh: base32 + (h + 1) * dh, :])
        x = x + attn + vrow(vl + 8, h_dim)

        # ---------------- MLP block (pre-LN) ----------------
        x2 = layernorm(x, vrow(vl + 9, h_dim), vrow(vl + 10, h_dim))
        # TODO(synk): HF ViT default act is exact (erf) GELU; tanh approximation
        # is used here (EUP-friendly), numerically very close.
        hmid = jax.nn.gelu(mm(x2, w128_ref[l]) + vrow(vl + 11, MLP), approximate=True)
        w2_rows = base32 + n_heads * dh
        x = x + mm(hmid, w32_ref[w2_rows: w2_rows + MLP, :]) + vrow(vl + 12, h_dim)

    # --- final LayerNorm -> last_hidden_state rows for this step's images
    out_ref[...] = layernorm(x,
                             vrow(n_layers * VROWS_PER_LAYER + 0, h_dim),
                             vrow(n_layers * VROWS_PER_LAYER + 1, h_dim))


# -----------------------------------------------------------------------------
# Parameters in "natural" (HF-like) layout, then packed into a few VMEM slabs
# -----------------------------------------------------------------------------
def init_params(key):
    keys = iter(jax.random.split(key, 16))

    def w(shape, scale=0.02):
        return scale * jax.random.normal(next(keys), shape, dtype=jnp.float32)

    L = N_LAYERS
    return {
        "patch_w": w((CPP, HIDDEN)),
        "patch_b": jnp.zeros((1, HIDDEN), jnp.float32),
        "cls": w((1, HIDDEN)),
        "pos": w((SEQ, HIDDEN)),
        "ln1_g": jnp.ones((L, 1, HIDDEN), jnp.float32),
        "ln1_b": jnp.zeros((L, 1, HIDDEN), jnp.float32),
        "wqkv": w((L, HIDDEN, 3 * HIDDEN)),
        "bqkv": jnp.zeros((L, 1, 3 * HIDDEN), jnp.float32),
        "wo": w((L, HIDDEN, HIDDEN)),
        "bo": jnp.zeros((L, 1, HIDDEN), jnp.float32),
        "ln2_g": jnp.ones((L, 1, HIDDEN), jnp.float32),
        "ln2_b": jnp.zeros((L, 1, HIDDEN), jnp.float32),
        "w1": w((L, HIDDEN, MLP)),
        "b1": jnp.zeros((L, 1, MLP), jnp.float32),
        "w2": w((L, MLP, HIDDEN)),
        "b2": jnp.zeros((L, 1, HIDDEN), jnp.float32),
        "lnf_g": jnp.ones((1, HIDDEN), jnp.float32),
        "lnf_b": jnp.zeros((1, HIDDEN), jnp.float32),
    }


def pack_params(params):
    """One-time packing of the frozen encoder weights into a few dense slabs."""
    L, H, DH, NH = N_LAYERS, HIDDEN, HEAD_DIM, N_HEADS

    # w32: all matrices whose output width is HIDDEN, stacked along rows.
    rows32 = [params["patch_w"]]
    for l in range(L):
        wo = params["wo"][l]                               # (H, H)
        for h in range(NH):
            rows32.append(wo[h * DH:(h + 1) * DH, :])      # (DH, H)
        rows32.append(params["w2"][l])                     # (MLP, H)
    w32 = jnp.concatenate(rows32, axis=0).astype(jnp.bfloat16)

    # w16: per-head Wq/Wk/Wv projection weights, (L*3*NH, H, DH).
    mats16 = []
    for l in range(L):
        wqkv = params["wqkv"][l]                           # (H, 3H) = [q | k | v]
        for p in range(3):
            for h in range(NH):
                mats16.append(wqkv[:, p * H + h * DH: p * H + (h + 1) * DH])
    w16 = jnp.stack(mats16, axis=0).astype(jnp.bfloat16)

    # w128: MLP up-projection per layer.
    w128 = params["w1"].astype(jnp.bfloat16)               # (L, H, MLP)

    # vecs: every gamma/beta/bias as one 128-lane row.
    def row(v):
        v = v.reshape(-1).astype(jnp.float32)
        return jnp.pad(v, (0, 128 - v.shape[0]))

    vrows = []
    for l in range(L):
        vrows += [row(params["ln1_g"][l]), row(params["ln1_b"][l])]
        bqkv = params["bqkv"][l].reshape(-1)               # (3H,)
        for p in range(3):
            for h in range(NH):
                vrows.append(row(bqkv[p * H + h * DH: p * H + (h + 1) * DH]))
        vrows += [row(params["bo"][l]), row(params["ln2_g"][l]),
                  row(params["ln2_b"][l]), row(params["b1"][l]),
                  row(params["b2"][l])]
    vrows += [row(params["lnf_g"]), row(params["lnf_b"])]
    vecs = jnp.stack(vrows, axis=0)                        # (L*13 + 2, 128)

    # Per-image additive slab: CLS embedding, patch bias and position embedding
    # (padded sequence rows stay zero).
    add_img = jnp.zeros((SEQ_PAD, H), jnp.float32)
    add_img = add_img.at[0].set(params["cls"].reshape(H) + params["pos"][0])
    add_img = add_img.at[1:SEQ].set(params["patch_b"].reshape(1, H)
                                    + params["pos"][1:SEQ])

    return {"w16": w16, "w32": w32, "w128": w128, "vecs": vecs, "add_img": add_img}


# -----------------------------------------------------------------------------
# Forward wrapper: im2col glue + single fused pallas_call
# -----------------------------------------------------------------------------
def image_encoder_forward(images, packed):
    """images: NCHW float32 (B, C, IMG, IMG) -> last_hidden_state (B, SEQ, HIDDEN)."""
    B, C, H, W = images.shape
    nh, nw = H // PATCH, W // PATCH

    # Grid: at most 2 steps.  >=2 steps keeps both v7x TensorCores busy via
    # "parallel"; on single-TC v5e/v6e the extra step costs ~600 cycles only.
    n_steps = 2 if B >= 2 else 1
    bt = -(-B // n_steps)                 # images per grid step
    b_pad = n_steps * bt
    m = bt * SEQ_PAD

    # im2col patch extraction (channel-major flattening matches Conv2d weights).
    patches = (
        images.reshape(B, C, nh, PATCH, nw, PATCH)
        .transpose(0, 2, 4, 1, 3, 5)
        .reshape(B, N_PATCHES, CPP)
    )
    patches = jnp.pad(patches, ((0, b_pad - B), (0, 0), (0, 0)))
    # Per image: row 0 = zero placeholder for CLS, rows 1..4 = patches,
    # rows 5..7 = zero padding (masked out of attention inside the kernel).
    tok = jnp.pad(patches, ((0, 0), (1, SEQ_PAD - SEQ), (0, 0)))
    tok = tok.reshape(b_pad * SEQ_PAD, CPP).astype(jnp.bfloat16)

    add_slab = jnp.tile(packed["add_img"], (bt, 1))        # (m, HIDDEN) f32

    w16, w32, w128, vecs = packed["w16"], packed["w32"], packed["w128"], packed["vecs"]

    out = pl.pallas_call(
        functools.partial(_vit_encoder_kernel, bt=bt, n_layers=N_LAYERS,
                          n_heads=N_HEADS, eps=LN_EPS),
        grid=(n_steps,),
        in_specs=[
            pl.BlockSpec((m, CPP), lambda g: (g, 0)),          # tokens (per step)
            pl.BlockSpec((m, HIDDEN), lambda g: (0, 0)),       # add slab (const)
            pl.BlockSpec(w16.shape, lambda g: (0, 0, 0)),      # const weight slabs
            pl.BlockSpec(w32.shape, lambda g: (0, 0)),
            pl.BlockSpec(w128.shape, lambda g: (0, 0, 0)),
            pl.BlockSpec(vecs.shape, lambda g: (0, 0)),
        ],
        out_specs=pl.BlockSpec((m, HIDDEN), lambda g: (g, 0)),
        out_shape=jax.ShapeDtypeStruct((n_steps * m, HIDDEN), jnp.float32),
        compiler_params=pltpu.CompilerParams(
            dimension_semantics=("parallel",)),   # v7x: 2 TCs; v5e/v6e: no-op
    )(tok, add_slab, w16, w32, w128, vecs)

    out = out.reshape(b_pad, SEQ_PAD, HIDDEN)
    return out[:B, :SEQ, :]


if __name__ == "__main__":
    key = jax.random.PRNGKey(0)
    pkey, xkey = jax.random.split(key)
    params = init_params(pkey)
    packed = pack_params(params)          # one-time packing (encoder is frozen)

    batch = 2
    images = jax.random.normal(
        xkey, (batch, CHANNELS, IMG, IMG), dtype=jnp.float32)  # NCHW like PyTorch

    last_hidden_state = jax.jit(image_encoder_forward)(images, packed)
    jax.block_until_ready(last_hidden_state)

    assert last_hidden_state.shape == (batch, SEQ, HIDDEN)
    assert last_hidden_state.dtype == jnp.float32
    assert bool(jnp.all(jnp.isfinite(last_hidden_state)))
    print("KERNEL_OK")
</pallas_src>

<mosaic_0001>
module attributes {stable_mosaic.version = 11 : i64} {
  func.func @_vit_encoder_kernel(%arg0: i32, %arg1: memref<8x192xbf16, #tpu.memory_space<vmem>>, %arg2: memref<8x32xf32, #tpu.memory_space<vmem>>, %arg3: memref<12x32x16xbf16, #tpu.memory_space<vmem>>, %arg4: memref<512x32xbf16, #tpu.memory_space<vmem>>, %arg5: memref<2x32x128xbf16, #tpu.memory_space<vmem>>, %arg6: memref<28x128xf32, #tpu.memory_space<vmem>>, %arg7: memref<8x32xf32, #tpu.memory_space<vmem>>) attributes {dimension_semantics = [#tpu.dimension_semantics<parallel>], iteration_bounds = array<i64: 2>, scalar_prefetch = 0 : i64, scratch_operands = 0 : i64, tpu.core_type = #tpu.core_type<tc>, window_params = [{transform_indices = @transform_0, window_bounds = array<i64: 8, 192>}, {pipeline_mode = #tpu.pipeline_mode<synchronous>, transform_indices = @transform_1, window_bounds = array<i64: 8, 32>}, {pipeline_mode = #tpu.pipeline_mode<synchronous>, transform_indices = @transform_2, window_bounds = array<i64: 12, 32, 16>}, {pipeline_mode = #tpu.pipeline_mode<synchronous>, transform_indices = @transform_3, window_bounds = array<i64: 512, 32>}, {pipeline_mode = #tpu.pipeline_mode<synchronous>, transform_indices = @transform_4, window_bounds = array<i64: 2, 32, 128>}, {pipeline_mode = #tpu.pipeline_mode<synchronous>, transform_indices = @transform_5, window_bounds = array<i64: 28, 128>}, {transform_indices = @transform_6, window_bounds = array<i64: 8, 32>}]} {
    %0 = tpu.iota {dimensions = array<i32: 1>} : vector<8x8xi32>
    %c5_i32 = arith.constant 5 : i32
    %1 = vector.broadcast %c5_i32 : i32 to vector<8x8xi32>
    %2 = arith.cmpi sge, %0, %1 : vector<8x8xi32>
    %cst = arith.constant -1.000000e+09 : f32
    %cst_0 = arith.constant 0.000000e+00 : f32
    %3 = vector.broadcast %cst : f32 to vector<8x8xf32>
    %4 = vector.broadcast %cst_0 : f32 to vector<8x8xf32>
    %5 = arith.select %2, %3, %4 : vector<8x8xi1>, vector<8x8xf32>
    %c0 = arith.constant 0 : index
    %c0_1 = arith.constant 0 : index
    %6 = vector.load %arg1[%c0, %c0_1] : memref<8x192xbf16, #tpu.memory_space<vmem>>, vector<8x192xbf16>
    %c0_2 = arith.constant 0 : index
    %c0_3 = arith.constant 0 : index
    %7 = vector.load %arg4[%c0_2, %c0_3] : memref<512x32xbf16, #tpu.memory_space<vmem>>, vector<192x32xbf16>
    %cst_4 = arith.constant dense<0.000000e+00> : vector<8x32xf32>
    %8 = tpu.matmul %6, %7, %cst_4 {dimension_numbers = #tpu.dot_dimension_numbers<[1], [0], [0], [1], [0, 0, 1, 1], [], []>} : vector<8x192xbf16>, vector<192x32xbf16>, vector<8x32xf32> -> vector<8x32xf32>
    %c0_5 = arith.constant 0 : index
    %c0_6 = arith.constant 0 : index
    %9 = vector.load %arg2[%c0_5, %c0_6] : memref<8x32xf32, #tpu.memory_space<vmem>>, vector<8x32xf32>
    %10 = arith.addf %8, %9 : vector<8x32xf32>
    %c0_7 = arith.constant 0 : index
    %c0_8 = arith.constant 0 : index
    %11 = vector.load %arg6[%c0_7, %c0_8] : memref<28x128xf32, #tpu.memory_space<vmem>>, vector<1x32xf32>
    %c1 = arith.constant 1 : index
    %c0_9 = arith.constant 0 : index
    %12 = vector.load %arg6[%c1, %c0_9] : memref<28x128xf32, #tpu.memory_space<vmem>>, vector<1x32xf32>
    %cst_10 = arith.constant dense<0.000000e+00> : vector<8xf32>
    %13 = vector.multi_reduction <add>, %10, %cst_10 [1] : vector<8x32xf32> to vector<8xf32>
    %14 = vector.shape_cast %13 : vector<8xf32> to vector<8x1xf32>
    %cst_11 = arith.constant 3.200000e+01 : f32
    %15 = vector.broadcast %cst_11 : f32 to vector<8x1xf32>
    %16 = arith.divf %14, %15 : vector<8x1xf32>
    %17 = vector.broadcast %16 : vector<8x1xf32> to vector<8x32xf32>
    %18 = arith.subf %10, %17 : vector<8x32xf32>
    %19 = arith.mulf %18, %18 : vector<8x32xf32>
    %cst_12 = arith.constant dense<0.000000e+00> : vector<8xf32>
    %20 = vector.multi_reduction <add>, %19, %cst_12 [1] : vector<8x32xf32> to vector<8xf32>
    %21 = vector.shape_cast %20 : vector<8xf32> to vector<8x1xf32>
    %cst_13 = arith.constant 3.200000e+01 : f32
    %22 = vector.broadcast %cst_13 : f32 to vector<8x1xf32>
    %23 = arith.divf %21, %22 : vector<8x1xf32>
    %24 = vector.broadcast %16 : vector<8x1xf32> to vector<8x32xf32>
    %25 = arith.subf %10, %24 : vector<8x32xf32>
    %cst_14 = arith.constant 9.99999996E-13 : f32
    %26 = vector.broadcast %cst_14 : f32 to vector<8x1xf32>
    %27 = arith.addf %23, %26 : vector<8x1xf32>
    %28 = math.rsqrt %27 : vector<8x1xf32>
    %29 = vector.broadcast %28 : vector<8x1xf32> to vector<8x32xf32>
    %30 = arith.mulf %25, %29 : vector<8x32xf32>
    %31 = vector.broadcast %11 : vector<1x32xf32> to vector<8x32xf32>
    %32 = arith.mulf %30, %31 : vector<8x32xf32>
    %33 = vector.broadcast %12 : vector<1x32xf32> to vector<8x32xf32>
    %34 = arith.addf %32, %33 : vector<8x32xf32>
    %cst_15 = arith.constant 0.000000e+00 : f32
    %35 = vector.broadcast %cst_15 : f32 to vector<8x32xf32>
    %c0_16 = arith.constant 0 : index
    %c0_17 = arith.constant 0 : index
    %c0_18 = arith.constant 0 : index
    %36 = vector.load %arg3[%c0_16, %c0_17, %c0_18] : memref<12x32x16xbf16, #tpu.memory_space<vmem>>, vector<1x32x16xbf16>
    %37 = vector.shape_cast %36 : vector<1x32x16xbf16> to vector<32x16xbf16>
    %38 = arith.truncf %34 : vector<8x32xf32> to vector<8x32xbf16>
    %cst_19 = arith.constant dense<0.000000e+00> : vector<8x16xf32>
    %39 = tpu.matmul %38, %37, %cst_19 {dimension_numbers = #tpu.dot_dimension_numbers<[1], [0], [0], [1], [0, 0, 1, 1], [], []>} : vector<8x32xbf16>, vector<32x16xbf16>, vector<8x16xf32> -> vector<8x16xf32>
    %c2 = arith.constant 2 : index
    %c0_20 = arith.constant 0 : index
    %40 = vector.load %arg6[%c2, %c0_20] : memref<28x128xf32, #tpu.memory_space<vmem>>, vector<1x16xf32>
    %41 = vector.broadcast %40 : vector<1x16xf32> to vector<8x16xf32>
    %42 = arith.addf %39, %41 : vector<8x16xf32>
    %c2_21 = arith.constant 2 : index
    %c0_22 = arith.constant 0 : index
    %c0_23 = arith.constant 0 : index
    %43 = vector.load %arg3[%c2_21, %c0_22, %c0_23] : memref<12x32x16xbf16, #tpu.memory_space<vmem>>, vector<1x32x16xbf16>
    %44 = vector.shape_cast %43 : vector<1x32x16xbf16> to vector<32x16xbf16>
    %45 = arith.truncf %34 : vector<8x32xf32> to vector<8x32xbf16>
    %cst_24 = arith.constant dense<0.000000e+00> : vector<8x16xf32>
    %46 = tpu.matmul %45, %44, %cst_24 {dimension_numbers = #tpu.dot_dimension_numbers<[1], [0], [0], [1], [0, 0, 1, 1], [], []>} : vector<8x32xbf16>, vector<32x16xbf16>, vector<8x16xf32> -> vector<8x16xf32>
    %c4 = arith.constant 4 : index
    %c0_25 = arith.constant 0 : index
    %47 = vector.load %arg6[%c4, %c0_25] : memref<28x128xf32, #tpu.memory_space<vmem>>, vector<1x16xf32>
    %48 = vector.broadcast %47 : vector<1x16xf32> to vector<8x16xf32>
    %49 = arith.addf %46, %48 : vector<8x16xf32>
    %c4_26 = arith.constant 4 : index
    %c0_27 = arith.constant 0 : index
    %c0_28 = arith.constant 0 : index
    %50 = vector.load %arg3[%c4_26, %c0_27, %c0_28] : memref<12x32x16xbf16, #tpu.memory_space<vmem>>, vector<1x32x16xbf16>
    %51 = vector.shape_cast %50 : vector<1x32x16xbf16> to vector<32x16xbf16>
    %52 = arith.truncf %34 : vector<8x32xf32> to vector<8x32xbf16>
    %cst_29 = arith.constant dense<0.000000e+00> : vector<8x16xf32>
    %53 = tpu.matmul %52, %51, %cst_29 {dimension_numbers = #tpu.dot_dimension_numbers<[1], [0], [0], [1], [0, 0, 1, 1], [], []>} : vector<8x32xbf16>, vector<32x16xbf16>, vector<8x16xf32> -> vector<8x16xf32>
    %c6 = arith.constant 6 : index
    %c0_30 = arith.constant 0 : index
    %54 = vector.load %arg6[%c6, %c0_30] : memref<28x128xf32, #tpu.memory_space<vmem>>, vector<1x16xf32>
    %55 = vector.broadcast %54 : vector<1x16xf32> to vector<8x16xf32>
    %56 = arith.addf %53, %55 : vector<8x16xf32>
    %57 = vector.shape_cast %42 : vector<8x16xf32> to vector<1x8x16xf32>
    %58 = arith.truncf %57 : vector<1x8x16xf32> to vector<1x8x16xbf16>
    %59 = vector.shape_cast %49 : vector<8x16xf32> to vector<1x8x16xf32>
    %60 = arith.truncf %59 : vector<1x8x16xf32> to vector<1x8x16xbf16>
    %61 = vector.shape_cast %56 : vector<8x16xf32> to vector<1x8x16xf32>
    %62 = arith.truncf %61 : vector<1x8x16xf32> to vector<1x8x16xbf16>
    "tpu.trace_start"() <{level = 10 : i32, message = "bqd,bkd->bqk"}> : () -> ()
    %cst_31 = arith.constant dense<0.000000e+00> : vector<1x8x8xf32>
    %63 = tpu.matmul %58, %60, %cst_31 {dimension_numbers = #tpu.dot_dimension_numbers<[2], [2], [1], [1], [0, 0, 0, 1, 1, 1], [0], [0]>} : vector<1x8x16xbf16>, vector<1x8x16xbf16>, vector<1x8x8xf32> -> vector<1x8x8xf32>
    "tpu.trace_stop"() : () -> ()
    %cst_32 = arith.constant 2.500000e-01 : f32
    %64 = vector.broadcast %cst_32 : f32 to vector<1x8x8xf32>
    %65 = arith.mulf %63, %64 : vector<1x8x8xf32>
    %66 = vector.shape_cast %5 : vector<8x8xf32> to vector<1x8x8xf32>
    %67 = arith.addf %65, %66 : vector<1x8x8xf32>
    %68 = math.exp %67 : vector<1x8x8xf32>
    %cst_33 = arith.constant dense<0.000000e+00> : vector<1x8xf32>
    %69 = vector.multi_reduction <add>, %68, %cst_33 [2] : vector<1x8x8xf32> to vector<1x8xf32>
    %70 = vector.shape_cast %69 : vector<1x8xf32> to vector<1x8x1xf32>
    %71 = tpu.reciprocal %70 {approx = true} : vector<1x8x1xf32> -> vector<1x8x1xf32>
    %72 = vector.broadcast %71 : vector<1x8x1xf32> to vector<1x8x8xf32>
    %73 = arith.mulf %68, %72 : vector<1x8x8xf32>
    %74 = arith.truncf %73 : vector<1x8x8xf32> to vector<1x8x8xbf16>
    "tpu.trace_start"() <{level = 10 : i32, message = "bqk,bkd->bqd"}> : () -> ()
    %cst_34 = arith.constant dense<0.000000e+00> : vector<1x8x16xf32>
    %75 = tpu.matmul %74, %62, %cst_34 {dimension_numbers = #tpu.dot_dimension_numbers<[2], [1], [1], [2], [0, 0, 0, 1, 1, 2], [0], [0]>} : vector<1x8x8xbf16>, vector<1x8x16xbf16>, vector<1x8x16xf32> -> vector<1x8x16xf32>
    "tpu.trace_stop"() : () -> ()
    %76 = vector.shape_cast %75 : vector<1x8x16xf32> to vector<8x16xf32>
    %c192 = arith.constant 192 : index
    %c0_35 = arith.constant 0 : index
    %77 = vector.load %arg4[%c192, %c0_35] : memref<512x32xbf16, #tpu.memory_space<vmem>>, vector<16x32xbf16>
    %78 = arith.truncf %76 : vector<8x16xf32> to vector<8x16xbf16>
    %cst_36 = arith.constant dense<0.000000e+00> : vector<8x32xf32>
    %79 = tpu.matmul %78, %77, %cst_36 {dimension_numbers = #tpu.dot_dimension_numbers<[1], [0], [0], [1], [0, 0, 1, 1], [], []>} : vector<8x16xbf16>, vector<16x32xbf16>, vector<8x32xf32> -> vector<8x32xf32>
    %80 = arith.addf %35, %79 : vector<8x32xf32>
    %c1_37 = arith.constant 1 : index
    %c0_38 = arith.constant 0 : index
    %c0_39 = arith.constant 0 : index
    %81 = vector.load %arg3[%c1_37, %c0_38, %c0_39] : memref<12x32x16xbf16, #tpu.memory_space<vmem>>, vector<1x32x16xbf16>
    %82 = vector.shape_cast %81 : vector<1x32x16xbf16> to vector<32x16xbf16>
    %83 = arith.truncf %34 : vector<8x32xf32> to vector<8x32xbf16>
    %cst_40 = arith.constant dense<0.000000e+00> : vector<8x16xf32>
    %84 = tpu.matmul %83, %82, %cst_40 {dimension_numbers = #tpu.dot_dimension_numbers<[1], [0], [0], [1], [0, 0, 1, 1], [], []>} : vector<8x32xbf16>, vector<32x16xbf16>, vector<8x16xf32> -> vector<8x16xf32>
    %c3 = arith.constant 3 : index
    %c0_41 = arith.constant 0 : index
    %85 = vector.load %arg6[%c3, %c0_41] : memref<28x128xf32, #tpu.memory_space<vmem>>, vector<1x16xf32>
    %86 = vector.broadcast %85 : vector<1x16xf32> to vector<8x16xf32>
    %87 = arith.addf %84, %86 : vector<8x16xf32>
    %c3_42 = arith.constant 3 : index
    %c0_43 = arith.constant 0 : index
    %c0_44 = arith.constant 0 : index
    %88 = vector.load %arg3[%c3_42, %c0_43, %c0_44] : memref<12x32x16xbf16, #tpu.memory_space<vmem>>, vector<1x32x16xbf16>
    %89 = vector.shape_cast %88 : vector<1x32x16xbf16> to vector<32x16xbf16>
    %90 = arith.truncf %34 : vector<8x32xf32> to vector<8x32xbf16>
    %cst_45 = arith.constant dense<0.000000e+00> : vector<8x16xf32>
    %91 = tpu.matmul %90, %89, %cst_45 {dimension_numbers = #tpu.dot_dimension_numbers<[1], [0], [0], [1], [0, 0, 1, 1], [], []>} : vector<8x32xbf16>, vector<32x16xbf16>, vector<8x16xf32> -> vector<8x16xf32>
    %c5 = arith.constant 5 : index
    %c0_46 = arith.constant 0 : index
    %92 = vector.load %arg6[%c5, %c0_46] : memref<28x128xf32, #tpu.memory_space<vmem>>, vector<1x16xf32>
    %93 = vector.broadcast %92 : vector<1x16xf32> to vector<8x16xf32>
    %94 = arith.addf %91, %93 : vector<8x16xf32>
    %c5_47 = arith.constant 5 : index
    %c0_48 = arith.constant 0 : index
    %c0_49 = arith.constant 0 : index
    %95 = vector.load %arg3[%c5_47, %c0_48, %c0_49] : memref<12x32x16xbf16, #tpu.memory_space<vmem>>, vector<1x32x16xbf16>
    %96 = vector.shape_cast %95 : vector<1x32x16xbf16> to vector<32x16xbf16>
    %97 = arith.truncf %34 : vector<8x32xf32> to vector<8x32xbf16>
    %cst_50 = arith.constant dense<0.000000e+00> : vector<8x16xf32>
    %98 = tpu.matmul %97, %96, %cst_50 {dimension_numbers = #tpu.dot_dimension_numbers<[1], [0], [0], [1], [0, 0, 1, 1], [], []>} : vector<8x32xbf16>, vector<32x16xbf16>, vector<8x16xf32> -> vector<8x16xf32>
    %c7 = arith.constant 7 : index
    %c0_51 = arith.constant 0 : index
    %99 = vector.load %arg6[%c7, %c0_51] : memref<28x128xf32, #tpu.memory_space<vmem>>, vector<1x16xf32>
    %100 = vector.broadcast %99 : vector<1x16xf32> to vector<8x16xf32>
    %101 = arith.addf %98, %100 : vector<8x16xf32>
    %102 = vector.shape_cast %87 : vector<8x16xf32> to vector<1x8x16xf32>
    %103 = arith.truncf %102 : vector<1x8x16xf32> to vector<1x8x16xbf16>
    %104 = vector.shape_cast %94 : vector<8x16xf32> to vector<1x8x16xf32>
    %105 = arith.truncf %104 : vector<1x8x16xf32> to vector<1x8x16xbf16>
    %106 = vector.shape_cast %101 : vector<8x16xf32> to vector<1x8x16xf32>
    %107 = arith.truncf %106 : vector<1x8x16xf32> to vector<1x8x16xbf16>
    "tpu.trace_start"() <{level = 10 : i32, message = "bqd,bkd->bqk"}> : () -> ()
    %cst_52 = arith.constant dense<0.000000e+00> : vector<1x8x8xf32>
    %108 = tpu.matmul %103, %105, %cst_52 {dimension_numbers = #tpu.dot_dimension_numbers<[2], [2], [1], [1], [0, 0, 0, 1, 1, 1], [0], [0]>} : vector<1x8x16xbf16>, vector<1x8x16xbf16>, vector<1x8x8xf32> -> vector<1x8x8xf32>
    "tpu.trace_stop"() : () -> ()
    %cst_53 = arith.constant 2.500000e-01 : f32
    %109 = vector.broadcast %cst_53 : f32 to vector<1x8x8xf32>
    %110 = arith.mulf %108, %109 : vector<1x8x8xf32>
    %111 = vector.shape_cast %5 : vector<8x8xf32> to vector<1x8x8xf32>
    %112 = arith.addf %110, %111 : vector<1x8x8xf32>
    %113 = math.exp %112 : vector<1x8x8xf32>
    %cst_54 = arith.constant dense<0.000000e+00> : vector<1x8xf32>
    %114 = vector.multi_reduction <add>, %113, %cst_54 [2] : vector<1x8x8xf32> to vector<1x8xf32>
    %115 = vector.shape_cast %114 : vector<1x8xf32> to vector<1x8x1xf32>
    %116 = tpu.reciprocal %115 {approx = true} : vector<1x8x1xf32> -> vector<1x8x1xf32>
    %117 = vector.broadcast %116 : vector<1x8x1xf32> to vector<1x8x8xf32>
    %118 = arith.mulf %113, %117 : vector<1x8x8xf32>
    %119 = arith.truncf %118 : vector<1x8x8xf32> to vector<1x8x8xbf16>
    "tpu.trace_start"() <{level = 10 : i32, message = "bqk,bkd->bqd"}> : () -> ()
    %cst_55 = arith.constant dense<0.000000e+00> : vector<1x8x16xf32>
    %120 = tpu.matmul %119, %107, %cst_55 {dimension_numbers = #tpu.dot_dimension_numbers<[2], [1], [1], [2], [0, 0, 0, 1, 1, 2], [0], [0]>} : vector<1x8x8xbf16>, vector<1x8x16xbf16>, vector<1x8x16xf32> -> vector<1x8x16xf32>
    "tpu.trace_stop"() : () -> ()
    %121 = vector.shape_cast %120 : vector<1x8x16xf32> to vector<8x16xf32>
    %c208 = arith.constant 208 : index
    %c0_56 = arith.constant 0 : index
    %122 = vector.load %arg4[%c208, %c0_56] : memref<512x32xbf16, #tpu.memory_space<vmem>>, vector<16x32xbf16>
    %123 = arith.truncf %121 : vector<8x16xf32> to vector<8x16xbf16>
    %cst_57 = arith.constant dense<0.000000e+00> : vector<8x32xf32>
    %124 = tpu.matmul %123, %122, %cst_57 {dimension_numbers = #tpu.dot_dimension_numbers<[1], [0], [0], [1], [0, 0, 1, 1], [], []>} : vector<8x16xbf16>, vector<16x32xbf16>, vector<8x32xf32> -> vector<8x32xf32>
    %125 = arith.addf %80, %124 : vector<8x32xf32>
    %126 = arith.addf %10, %125 : vector<8x32xf32>
    %c8 = arith.constant 8 : index
    %c0_58 = arith.constant 0 : index
    %127 = vector.load %arg6[%c8, %c0_58] : memref<28x128xf32, #tpu.memory_space<vmem>>, vector<1x32xf32>
    %128 = vector.broadcast %127 : vector<1x32xf32> to vector<8x32xf32>
    %129 = arith.addf %126, %128 : vector<8x32xf32>
    %c9 = arith.constant 9 : index
    %c0_59 = arith.constant 0 : index
    %130 = vector.load %arg6[%c9, %c0_59] : memref<28x128xf32, #tpu.memory_space<vmem>>, vector<1x32xf32>
    %c10 = arith.constant 10 : index
    %c0_60 = arith.constant 0 : index
    %131 = vector.load %arg6[%c10, %c0_60] : memref<28x128xf32, #tpu.memory_space<vmem>>, vector<1x32xf32>
    %cst_61 = arith.constant dense<0.000000e+00> : vector<8xf32>
    %132 = vector.multi_reduction <add>, %129, %cst_61 [1] : vector<8x32xf32> to vector<8xf32>
    %133 = vector.shape_cast %132 : vector<8xf32> to vector<8x1xf32>
    %cst_62 = arith.constant 3.200000e+01 : f32
    %134 = vector.broadcast %cst_62 : f32 to vector<8x1xf32>
    %135 = arith.divf %133, %134 : vector<8x1xf32>
    %136 = vector.broadcast %135 : vector<8x1xf32> to vector<8x32xf32>
    %137 = arith.subf %129, %136 : vector<8x32xf32>
    %138 = arith.mulf %137, %137 : vector<8x32xf32>
    %cst_63 = arith.constant dense<0.000000e+00> : vector<8xf32>
    %139 = vector.multi_reduction <add>, %138, %cst_63 [1] : vector<8x32xf32> to vector<8xf32>
    %140 = vector.shape_cast %139 : vector<8xf32> to vector<8x1xf32>
    %cst_64 = arith.constant 3.200000e+01 : f32
    %141 = vector.broadcast %cst_64 : f32 to vector<8x1xf32>
    %142 = arith.divf %140, %141 : vector<8x1xf32>
    %143 = vector.broadcast %135 : vector<8x1xf32> to vector<8x32xf32>
    %144 = arith.subf %129, %143 : vector<8x32xf32>
    %cst_65 = arith.constant 9.99999996E-13 : f32
    %145 = vector.broadcast %cst_65 : f32 to vector<8x1xf32>
    %146 = arith.addf %142, %145 : vector<8x1xf32>
    %147 = math.rsqrt %146 : vector<8x1xf32>
    %148 = vector.broadcast %147 : vector<8x1xf32> to vector<8x32xf32>
    %149 = arith.mulf %144, %148 : vector<8x32xf32>
    %150 = vector.broadcast %130 : vector<1x32xf32> to vector<8x32xf32>
    %151 = arith.mulf %149, %150 : vector<8x32xf32>
    %152 = vector.broadcast %131 : vector<1x32xf32> to vector<8x32xf32>
    %153 = arith.addf %151, %152 : vector<8x32xf32>
    %c0_66 = arith.constant 0 : index
    %c0_67 = arith.constant 0 : index
    %c0_68 = arith.constant 0 : index
    %154 = vector.load %arg5[%c0_66, %c0_67, %c0_68] : memref<2x32x128xbf16, #tpu.memory_space<vmem>>, vector<1x32x128xbf16>
    %155 = vector.shape_cast %154 : vector<1x32x128xbf16> to vector<32x128xbf16>
    %156 = arith.truncf %153 : vector<8x32xf32> to vector<8x32xbf16>
    %cst_69 = arith.constant dense<0.000000e+00> : vector<8x128xf32>
    %157 = tpu.matmul %156, %155, %cst_69 {dimension_numbers = #tpu.dot_dimension_numbers<[1], [0], [0], [1], [0, 0, 1, 1], [], []>} : vector<8x32xbf16>, vector<32x128xbf16>, vector<8x128xf32> -> vector<8x128xf32>
    %c11 = arith.constant 11 : index
    %c0_70 = arith.constant 0 : index
    %158 = vector.load %arg6[%c11, %c0_70] : memref<28x128xf32, #tpu.memory_space<vmem>>, vector<1x128xf32>
    %159 = vector.broadcast %158 : vector<1x128xf32> to vector<8x128xf32>
    %160 = arith.addf %157, %159 : vector<8x128xf32>
    %161 = arith.mulf %160, %160 : vector<8x128xf32>
    %162 = arith.mulf %160, %161 : vector<8x128xf32>
    %cst_71 = arith.constant 4.471500e-02 : f32
    %163 = vector.broadcast %cst_71 : f32 to vector<8x128xf32>
    %164 = arith.mulf %163, %162 : vector<8x128xf32>
    %165 = arith.addf %160, %164 : vector<8x128xf32>
    %cst_72 = arith.constant 0.797884583 : f32
    %166 = vector.broadcast %cst_72 : f32 to vector<8x128xf32>
    %167 = arith.mulf %166, %165 : vector<8x128xf32>
    %168 = math.tanh %167 : vector<8x128xf32>
    %cst_73 = arith.constant 1.000000e+00 : f32
    %169 = vector.broadcast %cst_73 : f32 to vector<8x128xf32>
    %170 = arith.addf %169, %168 : vector<8x128xf32>
    %cst_74 = arith.constant 5.000000e-01 : f32
    %171 = vector.broadcast %cst_74 : f32 to vector<8x128xf32>
    %172 = arith.mulf %171, %170 : vector<8x128xf32>
    %173 = arith.mulf %160, %172 : vector<8x128xf32>
    %c224 = arith.constant 224 : index
    %c0_75 = arith.constant 0 : index
    %174 = vector.load %arg4[%c224, %c0_75] : memref<512x32xbf16, #tpu.memory_space<vmem>>, vector<128x32xbf16>
    %175 = arith.truncf %173 : vector<8x128xf32> to vector<8x128xbf16>
    %cst_76 = arith.constant dense<0.000000e+00> : vector<8x32xf32>
    %176 = tpu.matmul %175, %174, %cst_76 {dimension_numbers = #tpu.dot_dimension_numbers<[1], [0], [0], [1], [0, 0, 1, 1], [], []>} : vector<8x128xbf16>, vector<128x32xbf16>, vector<8x32xf32> -> vector<8x32xf32>
    %177 = arith.addf %129, %176 : vector<8x32xf32>
    %c12 = arith.constant 12 : index
    %c0_77 = arith.constant 0 : index
    %178 = vector.load %arg6[%c12, %c0_77] : memref<28x128xf32, #tpu.memory_space<vmem>>, vector<1x32xf32>
    %179 = vector.broadcast %178 : vector<1x32xf32> to vector<8x32xf32>
    %180 = arith.addf %177, %179 : vector<8x32xf32>
    %c13 = arith.constant 13 : index
    %c0_78 = arith.constant 0 : index
    %181 = vector.load %arg6[%c13, %c0_78] : memref<28x128xf32, #tpu.memory_space<vmem>>, vector<1x32xf32>
    %c14 = arith.constant 14 : index
    %c0_79 = arith.constant 0 : index
    %182 = vector.load %arg6[%c14, %c0_79] : memref<28x128xf32, #tpu.memory_space<vmem>>, vector<1x32xf32>
    %cst_80 = arith.constant dense<0.000000e+00> : vector<8xf32>
    %183 = vector.multi_reduction <add>, %180, %cst_80 [1] : vector<8x32xf32> to vector<8xf32>
    %184 = vector.shape_cast %183 : vector<8xf32> to vector<8x1xf32>
    %cst_81 = arith.constant 3.200000e+01 : f32
    %185 = vector.broadcast %cst_81 : f32 to vector<8x1xf32>
    %186 = arith.divf %184, %185 : vector<8x1xf32>
    %187 = vector.broadcast %186 : vector<8x1xf32> to vector<8x32xf32>
    %188 = arith.subf %180, %187 : vector<8x32xf32>
    %189 = arith.mulf %188, %188 : vector<8x32xf32>
    %cst_82 = arith.constant dense<0.000000e+00> : vector<8xf32>
    %190 = vector.multi_reduction <add>, %189, %cst_82 [1] : vector<8x32xf32> to vector<8xf32>
    %191 = vector.shape_cast %190 : vector<8xf32> to vector<8x1xf32>
    %cst_83 = arith.constant 3.200000e+01 : f32
    %192 = vector.broadcast %cst_83 : f32 to vector<8x1xf32>
    %193 = arith.divf %191, %192 : vector<8x1xf32>
    %194 = vector.broadcast %186 : vector<8x1xf32> to vector<8x32xf32>
    %195 = arith.subf %180, %194 : vector<8x32xf32>
    %cst_84 = arith.constant 9.99999996E-13 : f32
    %196 = vector.broadcast %cst_84 : f32 to vector<8x1xf32>
    %197 = arith.addf %193, %196 : vector<8x1xf32>
    %198 = math.rsqrt %197 : vector<8x1xf32>
    %199 = vector.broadcast %198 : vector<8x1xf32> to vector<8x32xf32>
    %200 = arith.mulf %195, %199 : vector<8x32xf32>
    %201 = vector.broadcast %181 : vector<1x32xf32> to vector<8x32xf32>
    %202 = arith.mulf %200, %201 : vector<8x32xf32>
    %203 = vector.broadcast %182 : vector<1x32xf32> to vector<8x32xf32>
    %204 = arith.addf %202, %203 : vector<8x32xf32>
    %cst_85 = arith.constant 0.000000e+00 : f32
    %205 = vector.broadcast %cst_85 : f32 to vector<8x32xf32>
    %c6_86 = arith.constant 6 : index
    %c0_87 = arith.constant 0 : index
    %c0_88 = arith.constant 0 : index
    %206 = vector.load %arg3[%c6_86, %c0_87, %c0_88] : memref<12x32x16xbf16, #tpu.memory_space<vmem>>, vector<1x32x16xbf16>
    %207 = vector.shape_cast %206 : vector<1x32x16xbf16> to vector<32x16xbf16>
    %208 = arith.truncf %204 : vector<8x32xf32> to vector<8x32xbf16>
    %cst_89 = arith.constant dense<0.000000e+00> : vector<8x16xf32>
    %209 = tpu.matmul %208, %207, %cst_89 {dimension_numbers = #tpu.dot_dimension_numbers<[1], [0], [0], [1], [0, 0, 1, 1], [], []>} : vector<8x32xbf16>, vector<32x16xbf16>, vector<8x16xf32> -> vector<8x16xf32>
    %c15 = arith.constant 15 : index
    %c0_90 = arith.constant 0 : index
    %210 = vector.load %arg6[%c15, %c0_90] : memref<28x128xf32, #tpu.memory_space<vmem>>, vector<1x16xf32>
    %211 = vector.broadcast %210 : vector<1x16xf32> to vector<8x16xf32>
    %212 = arith.addf %209, %211 : vector<8x16xf32>
    %c8_91 = arith.constant 8 : index
    %c0_92 = arith.constant 0 : index
    %c0_93 = arith.constant 0 : index
    %213 = vector.load %arg3[%c8_91, %c0_92, %c0_93] : memref<12x32x16xbf16, #tpu.memory_space<vmem>>, vector<1x32x16xbf16>
    %214 = vector.shape_cast %213 : vector<1x32x16xbf16> to vector<32x16xbf16>
    %215 = arith.truncf %204 : vector<8x32xf32> to vector<8x32xbf16>
    %cst_94 = arith.constant dense<0.000000e+00> : vector<8x16xf32>
    %216 = tpu.matmul %215, %214, %cst_94 {dimension_numbers = #tpu.dot_dimension_numbers<[1], [0], [0], [1], [0, 0, 1, 1], [], []>} : vector<8x32xbf16>, vector<32x16xbf16>, vector<8x16xf32> -> vector<8x16xf32>
    %c17 = arith.constant 17 : index
    %c0_95 = arith.constant 0 : index
    %217 = vector.load %arg6[%c17, %c0_95] : memref<28x128xf32, #tpu.memory_space<vmem>>, vector<1x16xf32>
    %218 = vector.broadcast %217 : vector<1x16xf32> to vector<8x16xf32>
    %219 = arith.addf %216, %218 : vector<8x16xf32>
    %c10_96 = arith.constant 10 : index
    %c0_97 = arith.constant 0 : index
    %c0_98 = arith.constant 0 : index
    %220 = vector.load %arg3[%c10_96, %c0_97, %c0_98] : memref<12x32x16xbf16, #tpu.memory_space<vmem>>, vector<1x32x16xbf16>
    %221 = vector.shape_cast %220 : vector<1x32x16xbf16> to vector<32x16xbf16>
    %222 = arith.truncf %204 : vector<8x32xf32> to vector<8x32xbf16>
    %cst_99 = arith.constant dense<0.000000e+00> : vector<8x16xf32>
    %223 = tpu.matmul %222, %221, %cst_99 {dimension_numbers = #tpu.dot_dimension_numbers<[1], [0], [0], [1], [0, 0, 1, 1], [], []>} : vector<8x32xbf16>, vector<32x16xbf16>, vector<8x16xf32> -> vector<8x16xf32>
    %c19 = arith.constant 19 : index
    %c0_100 = arith.constant 0 : index
    %224 = vector.load %arg6[%c19, %c0_100] : memref<28x128xf32, #tpu.memory_space<vmem>>, vector<1x16xf32>
    %225 = vector.broadcast %224 : vector<1x16xf32> to vector<8x16xf32>
    %226 = arith.addf %223, %225 : vector<8x16xf32>
    %227 = vector.shape_cast %212 : vector<8x16xf32> to vector<1x8x16xf32>
    %228 = arith.truncf %227 : vector<1x8x16xf32> to vector<1x8x16xbf16>
    %229 = vector.shape_cast %219 : vector<8x16xf32> to vector<1x8x16xf32>
    %230 = arith.truncf %229 : vector<1x8x16xf32> to vector<1x8x16xbf16>
    %231 = vector.shape_cast %226 : vector<8x16xf32> to vector<1x8x16xf32>
    %232 = arith.truncf %231 : vector<1x8x16xf32> to vector<1x8x16xbf16>
    "tpu.trace_start"() <{level = 10 : i32, message = "bqd,bkd->bqk"}> : () -> ()
    %cst_101 = arith.constant dense<0.000000e+00> : vector<1x8x8xf32>
    %233 = tpu.matmul %228, %230, %cst_101 {dimension_numbers = #tpu.dot_dimension_numbers<[2], [2], [1], [1], [0, 0, 0, 1, 1, 1], [0], [0]>} : vector<1x8x16xbf16>, vector<1x8x16xbf16>, vector<1x8x8xf32> -> vector<1x8x8xf32>
    "tpu.trace_stop"() : () -> ()
    %cst_102 = arith.constant 2.500000e-01 : f32
    %234 = vector.broadcast %cst_102 : f32 to vector<1x8x8xf32>
    %235 = arith.mulf %233, %234 : vector<1x8x8xf32>
    %236 = vector.shape_cast %5 : vector<8x8xf32> to vector<1x8x8xf32>
    %237 = arith.addf %235, %236 : vector<1x8x8xf32>
    %238 = math.exp %237 : vector<1x8x8xf32>
    %cst_103 = arith.constant dense<0.000000e+00> : vector<1x8xf32>
    %239 = vector.multi_reduction <add>, %238, %cst_103 [2] : vector<1x8x8xf32> to vector<1x8xf32>
    %240 = vector.shape_cast %239 : vector<1x8xf32> to vector<1x8x1xf32>
    %241 = tpu.reciprocal %240 {approx = true} : vector<1x8x1xf32> -> vector<1x8x1xf32>
    %242 = vector.broadcast %241 : vector<1x8x1xf32> to vector<1x8x8xf32>
    %243 = arith.mulf %238, %242 : vector<1x8x8xf32>
    %244 = arith.truncf %243 : vector<1x8x8xf32> to vector<1x8x8xbf16>
    "tpu.trace_start"() <{level = 10 : i32, message = "bqk,bkd->bqd"}> : () -> ()
    %cst_104 = arith.constant dense<0.000000e+00> : vector<1x8x16xf32>
    %245 = tpu.matmul %244, %232, %cst_104 {dimension_numbers = #tpu.dot_dimension_numbers<[2], [1], [1], [2], [0, 0, 0, 1, 1, 2], [0], [0]>} : vector<1x8x8xbf16>, vector<1x8x16xbf16>, vector<1x8x16xf32> -> vector<1x8x16xf32>
    "tpu.trace_stop"() : () -> ()
    %246 = vector.shape_cast %245 : vector<1x8x16xf32> to vector<8x16xf32>
    %c352 = arith.constant 352 : index
    %c0_105 = arith.constant 0 : index
    %247 = vector.load %arg4[%c352, %c0_105] : memref<512x32xbf16, #tpu.memory_space<vmem>>, vector<16x32xbf16>
    %248 = arith.truncf %246 : vector<8x16xf32> to vector<8x16xbf16>
    %cst_106 = arith.constant dense<0.000000e+00> : vector<8x32xf32>
    %249 = tpu.matmul %248, %247, %cst_106 {dimension_numbers = #tpu.dot_dimension_numbers<[1], [0], [0], [1], [0, 0, 1, 1], [], []>} : vector<8x16xbf16>, vector<16x32xbf16>, vector<8x32xf32> -> vector<8x32xf32>
    %250 = arith.addf %205, %249 : vector<8x32xf32>
    %c7_107 = arith.constant 7 : index
    %c0_108 = arith.constant 0 : index
    %c0_109 = arith.constant 0 : index
    %251 = vector.load %arg3[%c7_107, %c0_108, %c0_109] : memref<12x32x16xbf16, #tpu.memory_space<vmem>>, vector<1x32x16xbf16>
    %252 = vector.shape_cast %251 : vector<1x32x16xbf16> to vector<32x16xbf16>
    %253 = arith.truncf %204 : vector<8x32xf32> to vector<8x32xbf16>
    %cst_110 = arith.constant dense<0.000000e+00> : vector<8x16xf32>
    %254 = tpu.matmul %253, %252, %cst_110 {dimension_numbers = #tpu.dot_dimension_numbers<[1], [0], [0], [1], [0, 0, 1, 1], [], []>} : vector<8x32xbf16>, vector<32x16xbf16>, vector<8x16xf32> -> vector<8x16xf32>
    %c16 = arith.constant 16 : index
    %c0_111 = arith.constant 0 : index
    %255 = vector.load %arg6[%c16, %c0_111] : memref<28x128xf32, #tpu.memory_space<vmem>>, vector<1x16xf32>
    %256 = vector.broadcast %255 : vector<1x16xf32> to vector<8x16xf32>
    %257 = arith.addf %254, %256 : vector<8x16xf32>
    %c9_112 = arith.constant 9 : index
    %c0_113 = arith.constant 0 : index
    %c0_114 = arith.constant 0 : index
    %258 = vector.load %arg3[%c9_112, %c0_113, %c0_114] : memref<12x32x16xbf16, #tpu.memory_space<vmem>>, vector<1x32x16xbf16>
    %259 = vector.shape_cast %258 : vector<1x32x16xbf16> to vector<32x16xbf16>
    %260 = arith.truncf %204 : vector<8x32xf32> to vector<8x32xbf16>
    %cst_115 = arith.constant dense<0.000000e+00> : vector<8x16xf32>
    %261 = tpu.matmul %260, %259, %cst_115 {dimension_numbers = #tpu.dot_dimension_numbers<[1], [0], [0], [1], [0, 0, 1, 1], [], []>} : vector<8x32xbf16>, vector<32x16xbf16>, vector<8x16xf32> -> vector<8x16xf32>
    %c18 = arith.constant 18 : index
    %c0_116 = arith.constant 0 : index
    %262 = vector.load %arg6[%c18, %c0_116] : memref<28x128xf32, #tpu.memory_space<vmem>>, vector<1x16xf32>
    %263 = vector.broadcast %262 : vector<1x16xf32> to vector<8x16xf32>
    %264 = arith.addf %261, %263 : vector<8x16xf32>
    %c11_117 = arith.constant 11 : index
    %c0_118 = arith.constant 0 : index
    %c0_119 = arith.constant 0 : index
    %265 = vector.load %arg3[%c11_117, %c0_118, %c0_119] : memref<12x32x16xbf16, #tpu.memory_space<vmem>>, vector<1x32x16xbf16>
    %266 = vector.shape_cast %265 : vector<1x32x16xbf16> to vector<32x16xbf16>
    %267 = arith.truncf %204 : vector<8x32xf32> to vector<8x32xbf16>
    %cst_120 = arith.constant dense<0.000000e+00> : vector<8x16xf32>
    %268 = tpu.matmul %267, %266, %cst_120 {dimension_numbers = #tpu.dot_dimension_numbers<[1], [0], [0], [1], [0, 0, 1, 1], [], []>} : vector<8x32xbf16>, vector<32x16xbf16>, vector<8x16xf32> -> vector<8x16xf32>
    %c20 = arith.constant 20 : index
    %c0_121 = arith.constant 0 : index
    %269 = vector.load %arg6[%c20, %c0_121] : memref<28x128xf32, #tpu.memory_space<vmem>>, vector<1x16xf32>
    %270 = vector.broadcast %269 : vector<1x16xf32> to vector<8x16xf32>
    %271 = arith.addf %268, %270 : vector<8x16xf32>
    %272 = vector.shape_cast %257 : vector<8x16xf32> to vector<1x8x16xf32>
    %273 = arith.truncf %272 : vector<1x8x16xf32> to vector<1x8x16xbf16>
    %274 = vector.shape_cast %264 : vector<8x16xf32> to vector<1x8x16xf32>
    %275 = arith.truncf %274 : vector<1x8x16xf32> to vector<1x8x16xbf16>
    %276 = vector.shape_cast %271 : vector<8x16xf32> to vector<1x8x16xf32>
    %277 = arith.truncf %276 : vector<1x8x16xf32> to vector<1x8x16xbf16>
    "tpu.trace_start"() <{level = 10 : i32, message = "bqd,bkd->bqk"}> : () -> ()
    %cst_122 = arith.constant dense<0.000000e+00> : vector<1x8x8xf32>
    %278 = tpu.matmul %273, %275, %cst_122 {dimension_numbers = #tpu.dot_dimension_numbers<[2], [2], [1], [1], [0, 0, 0, 1, 1, 1], [0], [0]>} : vector<1x8x16xbf16>, vector<1x8x16xbf16>, vector<1x8x8xf32> -> vector<1x8x8xf32>
    "tpu.trace_stop"() : () -> ()
    %cst_123 = arith.constant 2.500000e-01 : f32
    %279 = vector.broadcast %cst_123 : f32 to vector<1x8x8xf32>
    %280 = arith.mulf %278, %279 : vector<1x8x8xf32>
    %281 = vector.shape_cast %5 : vector<8x8xf32> to vector<1x8x8xf32>
    %282 = arith.addf %280, %281 : vector<1x8x8xf32>
    %283 = math.exp %282 : vector<1x8x8xf32>
    %cst_124 = arith.constant dense<0.000000e+00> : vector<1x8xf32>
    %284 = vector.multi_reduction <add>, %283, %cst_124 [2] : vector<1x8x8xf32> to vector<1x8xf32>
    %285 = vector.shape_cast %284 : vector<1x8xf32> to vector<1x8x1xf32>
    %286 = tpu.reciprocal %285 {approx = true} : vector<1x8x1xf32> -> vector<1x8x1xf32>
    %287 = vector.broadcast %286 : vector<1x8x1xf32> to vector<1x8x8xf32>
    %288 = arith.mulf %283, %287 : vector<1x8x8xf32>
    %289 = arith.truncf %288 : vector<1x8x8xf32> to vector<1x8x8xbf16>
    "tpu.trace_start"() <{level = 10 : i32, message = "bqk,bkd->bqd"}> : () -> ()
    %cst_125 = arith.constant dense<0.000000e+00> : vector<1x8x16xf32>
    %290 = tpu.matmul %289, %277, %cst_125 {dimension_numbers = #tpu.dot_dimension_numbers<[2], [1], [1], [2], [0, 0, 0, 1, 1, 2], [0], [0]>} : vector<1x8x8xbf16>, vector<1x8x16xbf16>, vector<1x8x16xf32> -> vector<1x8x16xf32>
    "tpu.trace_stop"() : () -> ()
    %291 = vector.shape_cast %290 : vector<1x8x16xf32> to vector<8x16xf32>
    %c368 = arith.constant 368 : index
    %c0_126 = arith.constant 0 : index
    %292 = vector.load %arg4[%c368, %c0_126] : memref<512x32xbf16, #tpu.memory_space<vmem>>, vector<16x32xbf16>
    %293 = arith.truncf %291 : vector<8x16xf32> to vector<8x16xbf16>
    %cst_127 = arith.constant dense<0.000000e+00> : vector<8x32xf32>
    %294 = tpu.matmul %293, %292, %cst_127 {dimension_numbers = #tpu.dot_dimension_numbers<[1], [0], [0], [1], [0, 0, 1, 1], [], []>} : vector<8x16xbf16>, vector<16x32xbf16>, vector<8x32xf32> -> vector<8x32xf32>
    %295 = arith.addf %250, %294 : vector<8x32xf32>
    %296 = arith.addf %180, %295 : vector<8x32xf32>
    %c21 = arith.constant 21 : index
    %c0_128 = arith.constant 0 : index
    %297 = vector.load %arg6[%c21, %c0_128] : memref<28x128xf32, #tpu.memory_space<vmem>>, vector<1x32xf32>
    %298 = vector.broadcast %297 : vector<1x32xf32> to vector<8x32xf32>
    %299 = arith.addf %296, %298 : vector<8x32xf32>
    %c22 = arith.constant 22 : index
    %c0_129 = arith.constant 0 : index
    %300 = vector.load %arg6[%c22, %c0_129] : memref<28x128xf32, #tpu.memory_space<vmem>>, vector<1x32xf32>
    %c23 = arith.constant 23 : index
    %c0_130 = arith.constant 0 : index
    %301 = vector.load %arg6[%c23, %c0_130] : memref<28x128xf32, #tpu.memory_space<vmem>>, vector<1x32xf32>
    %cst_131 = arith.constant dense<0.000000e+00> : vector<8xf32>
    %302 = vector.multi_reduction <add>, %299, %cst_131 [1] : vector<8x32xf32> to vector<8xf32>
    %303 = vector.shape_cast %302 : vector<8xf32> to vector<8x1xf32>
    %cst_132 = arith.constant 3.200000e+01 : f32
    %304 = vector.broadcast %cst_132 : f32 to vector<8x1xf32>
    %305 = arith.divf %303, %304 : vector<8x1xf32>
    %306 = vector.broadcast %305 : vector<8x1xf32> to vector<8x32xf32>
    %307 = arith.subf %299, %306 : vector<8x32xf32>
    %308 = arith.mulf %307, %307 : vector<8x32xf32>
    %cst_133 = arith.constant dense<0.000000e+00> : vector<8xf32>
    %309 = vector.multi_reduction <add>, %308, %cst_133 [1] : vector<8x32xf32> to vector<8xf32>
    %310 = vector.shape_cast %309 : vector<8xf32> to vector<8x1xf32>
    %cst_134 = arith.constant 3.200000e+01 : f32
    %311 = vector.broadcast %cst_134 : f32 to vector<8x1xf32>
    %312 = arith.divf %310, %311 : vector<8x1xf32>
    %313 = vector.broadcast %305 : vector<8x1xf32> to vector<8x32xf32>
    %314 = arith.subf %299, %313 : vector<8x32xf32>
    %cst_135 = arith.constant 9.99999996E-13 : f32
    %315 = vector.broadcast %cst_135 : f32 to vector<8x1xf32>
    %316 = arith.addf %312, %315 : vector<8x1xf32>
    %317 = math.rsqrt %316 : vector<8x1xf32>
    %318 = vector.broadcast %317 : vector<8x1xf32> to vector<8x32xf32>
    %319 = arith.mulf %314, %318 : vector<8x32xf32>
    %320 = vector.broadcast %300 : vector<1x32xf32> to vector<8x32xf32>
    %321 = arith.mulf %319, %320 : vector<8x32xf32>
    %322 = vector.broadcast %301 : vector<1x32xf32> to vector<8x32xf32>
    %323 = arith.addf %321, %322 : vector<8x32xf32>
    %c1_136 = arith.constant 1 : index
    %c0_137 = arith.constant 0 : index
    %c0_138 = arith.constant 0 : index
    %324 = vector.load %arg5[%c1_136, %c0_137, %c0_138] : memref<2x32x128xbf16, #tpu.memory_space<vmem>>, vector<1x32x128xbf16>
    %325 = vector.shape_cast %324 : vector<1x32x128xbf16> to vector<32x128xbf16>
    %326 = arith.truncf %323 : vector<8x32xf32> to vector<8x32xbf16>
    %cst_139 = arith.constant dense<0.000000e+00> : vector<8x128xf32>
    %327 = tpu.matmul %326, %325, %cst_139 {dimension_numbers = #tpu.dot_dimension_numbers<[1], [0], [0], [1], [0, 0, 1, 1], [], []>} : vector<8x32xbf16>, vector<32x128xbf16>, vector<8x128xf32> -> vector<8x128xf32>
    %c24 = arith.constant 24 : index
    %c0_140 = arith.constant 0 : index
    %328 = vector.load %arg6[%c24, %c0_140] : memref<28x128xf32, #tpu.memory_space<vmem>>, vector<1x128xf32>
    %329 = vector.broadcast %328 : vector<1x128xf32> to vector<8x128xf32>
    %330 = arith.addf %327, %329 : vector<8x128xf32>
    %331 = arith.mulf %330, %330 : vector<8x128xf32>
    %332 = arith.mulf %330, %331 : vector<8x128xf32>
    %cst_141 = arith.constant 4.471500e-02 : f32
    %333 = vector.broadcast %cst_141 : f32 to vector<8x128xf32>
    %334 = arith.mulf %333, %332 : vector<8x128xf32>
    %335 = arith.addf %330, %334 : vector<8x128xf32>
    %cst_142 = arith.constant 0.797884583 : f32
    %336 = vector.broadcast %cst_142 : f32 to vector<8x128xf32>
    %337 = arith.mulf %336, %335 : vector<8x128xf32>
    %338 = math.tanh %337 : vector<8x128xf32>
    %cst_143 = arith.constant 1.000000e+00 : f32
    %339 = vector.broadcast %cst_143 : f32 to vector<8x128xf32>
    %340 = arith.addf %339, %338 : vector<8x128xf32>
    %cst_144 = arith.constant 5.000000e-01 : f32
    %341 = vector.broadcast %cst_144 : f32 to vector<8x128xf32>
    %342 = arith.mulf %341, %340 : vector<8x128xf32>
    %343 = arith.mulf %330, %342 : vector<8x128xf32>
    %c384 = arith.constant 384 : index
    %c0_145 = arith.constant 0 : index
    %344 = vector.load %arg4[%c384, %c0_145] : memref<512x32xbf16, #tpu.memory_space<vmem>>, vector<128x32xbf16>
    %345 = arith.truncf %343 : vector<8x128xf32> to vector<8x128xbf16>
    %cst_146 = arith.constant dense<0.000000e+00> : vector<8x32xf32>
    %346 = tpu.matmul %345, %344, %cst_146 {dimension_numbers = #tpu.dot_dimension_numbers<[1], [0], [0], [1], [0, 0, 1, 1], [], []>} : vector<8x128xbf16>, vector<128x32xbf16>, vector<8x32xf32> -> vector<8x32xf32>
    %347 = arith.addf %299, %346 : vector<8x32xf32>
    %c25 = arith.constant 25 : index
    %c0_147 = arith.constant 0 : index
    %348 = vector.load %arg6[%c25, %c0_147] : memref<28x128xf32, #tpu.memory_space<vmem>>, vector<1x32xf32>
    %349 = vector.broadcast %348 : vector<1x32xf32> to vector<8x32xf32>
    %350 = arith.addf %347, %349 : vector<8x32xf32>
    %c26 = arith.constant 26 : index
    %c0_148 = arith.constant 0 : index
    %351 = vector.load %arg6[%c26, %c0_148] : memref<28x128xf32, #tpu.memory_space<vmem>>, vector<1x32xf32>
    %c27 = arith.constant 27 : index
    %c0_149 = arith.constant 0 : index
    %352 = vector.load %arg6[%c27, %c0_149] : memref<28x128xf32, #tpu.memory_space<vmem>>, vector<1x32xf32>
    %cst_150 = arith.constant dense<0.000000e+00> : vector<8xf32>
    %353 = vector.multi_reduction <add>, %350, %cst_150 [1] : vector<8x32xf32> to vector<8xf32>
    %354 = vector.shape_cast %353 : vector<8xf32> to vector<8x1xf32>
    %cst_151 = arith.constant 3.200000e+01 : f32
    %355 = vector.broadcast %cst_151 : f32 to vector<8x1xf32>
    %356 = arith.divf %354, %355 : vector<8x1xf32>
    %357 = vector.broadcast %356 : vector<8x1xf32> to vector<8x32xf32>
    %358 = arith.subf %350, %357 : vector<8x32xf32>
    %359 = arith.mulf %358, %358 : vector<8x32xf32>
    %cst_152 = arith.constant dense<0.000000e+00> : vector<8xf32>
    %360 = vector.multi_reduction <add>, %359, %cst_152 [1] : vector<8x32xf32> to vector<8xf32>
    %361 = vector.shape_cast %360 : vector<8xf32> to vector<8x1xf32>
    %cst_153 = arith.constant 3.200000e+01 : f32
    %362 = vector.broadcast %cst_153 : f32 to vector<8x1xf32>
    %363 = arith.divf %361, %362 : vector<8x1xf32>
    %364 = vector.broadcast %356 : vector<8x1xf32> to vector<8x32xf32>
    %365 = arith.subf %350, %364 : vector<8x32xf32>
    %cst_154 = arith.constant 9.99999996E-13 : f32
    %366 = vector.broadcast %cst_154 : f32 to vector<8x1xf32>
    %367 = arith.addf %363, %366 : vector<8x1xf32>
    %368 = math.rsqrt %367 : vector<8x1xf32>
    %369 = vector.broadcast %368 : vector<8x1xf32> to vector<8x32xf32>
    %370 = arith.mulf %365, %369 : vector<8x32xf32>
    %371 = vector.broadcast %351 : vector<1x32xf32> to vector<8x32xf32>
    %372 = arith.mulf %370, %371 : vector<8x32xf32>
    %373 = vector.broadcast %352 : vector<1x32xf32> to vector<8x32xf32>
    %374 = arith.addf %372, %373 : vector<8x32xf32>
    %c0_155 = arith.constant 0 : index
    %c0_156 = arith.constant 0 : index
    %375 = vector.load %arg7[%c0_155, %c0_156] : memref<8x32xf32, #tpu.memory_space<vmem>>, vector<8x32xf32>
    tpu.vector_store %arg7[%c0_155, %c0_156], %374 {strides = array<i32>} : memref<8x32xf32, #tpu.memory_space<vmem>>, vector<8x32xf32>,
    return
  }
  func.func @transform_0(%arg0: i32) -> (i32, i32) {
    %c0_i32 = arith.constant 0 : i32
    %c0_i32_0 = arith.constant 0 : i32
    return %arg0, %c0_i32 : i32, i32
  }
  func.func @transform_1(%arg0: i32) -> (i32, i32) {
    %c0_i32 = arith.constant 0 : i32
    %c0_i32_0 = arith.constant 0 : i32
    %c0_i32_1 = arith.constant 0 : i32
    return %c0_i32, %c0_i32_0 : i32, i32
  }
  func.func @transform_2(%arg0: i32) -> (i32, i32, i32) {
    %c0_i32 = arith.constant 0 : i32
    %c0_i32_0 = arith.constant 0 : i32
    %c0_i32_1 = arith.constant 0 : i32
    %c0_i32_2 = arith.constant 0 : i32
    return %c0_i32, %c0_i32_0, %c0_i32_1 : i32, i32, i32
  }
  func.func @transform_3(%arg0: i32) -> (i32, i32) {
    %c0_i32 = arith.constant 0 : i32
    %c0_i32_0 = arith.constant 0 : i32
    %c0_i32_1 = arith.constant 0 : i32
    return %c0_i32, %c0_i32_0 : i32, i32
  }
  func.func @transform_4(%arg0: i32) -> (i32, i32, i32) {
    %c0_i32 = arith.constant 0 : i32
    %c0_i32_0 = arith.constant 0 : i32
    %c0_i32_1 = arith.constant 0 : i32
    %c0_i32_2 = arith.constant 0 : i32
    return %c0_i32, %c0_i32_0, %c0_i32_1 : i32, i32, i32
  }
  func.func @transform_5(%arg0: i32) -> (i32, i32) {
    %c0_i32 = arith.constant 0 : i32
    %c0_i32_0 = arith.constant 0 : i32
    %c0_i32_1 = arith.constant 0 : i32
    return %c0_i32, %c0_i32_0 : i32, i32
  }
  func.func @transform_6(%arg0: i32) -> (i32, i32) {
    %c0_i32 = arith.constant 0 : i32
    %c0_i32_0 = arith.constant 0 : i32
    return %arg0, %c0_i32 : i32, i32
  }
}

</mosaic_0001>

<llo_original>
// kernel: image_encoder_forward.1
$region0: #{image_encoder_forward.1}
  #allocation0 [shape = 'u32[]', space=smem, size = 0x4, offset = 0x4, fixed_abs, tag = 'smem constant byte address 0x4 - core index']
  #allocation1 [shape = 'u32[144,128]{1,0:T(1,128)}', space=vmem, size = 0x12000, scoped, tag = 'internal scratch']
  %s0 = inlined_call_operand.vmem [shape: bf16[16,192], index: 0, kind: input, shape index: {}]
  %s1 = inlined_call_operand.vmem [shape: f32[8,32], index: 1, kind: input, shape index: {}]
  %s2 = inlined_call_operand.vmem [shape: bf16[12,32,16], index: 2, kind: input, shape index: {}]
  %s3 = inlined_call_operand.vmem [shape: bf16[512,32], index: 3, kind: input, shape index: {}]
  %s4 = inlined_call_operand.vmem [shape: bf16[2,32,128], index: 4, kind: input, shape index: {}]
  %s5 = inlined_call_operand.vmem [shape: f32[28,128], index: 5, kind: input, shape index: {}]
  %s6 = inlined_call_operand.vmem [shape: f32[16,32], index: 6, kind: output, shape index: {}]
  %s7 = sld [smem:[#allocation0]]
  $region57: #{image_encoder_forward.1} parent=0
    _
  %s9 = ssub.s32 1, %s7
  %s10 = scalar_select 0, %s9, %s7
  loop: start=0, step=1, limit=4
  $region2: #{image_encoder_forward.1} parent=0 // loop_pre_header
    _
  $region3: #{image_encoder_forward.1} parent=0 // loop_header
    %s12 = sphi 0, %s16
    %p13 = scmp.ge.s32.totalorder %s12, 4
    %s22 = sphi 0, %s24
    %s25 = sphi 0, %s22
    %s26 = sphi 0, %s25
    %s42 = sphi 0, %s26
    %s46 = sphi 0, %s46
    %s48 = sphi 0, %s46
    %s49 = sphi 0, %s48
    %s63 = sphi 0, %s49
    %s67 = sphi 0, %s67
    %s69 = sphi 0, %s67
    %s70 = sphi 0, %s69
    %s84 = sphi 0, %s70
    %s88 = sphi 0, %s88
    %s90 = sphi 0, %s88
    %s91 = sphi 0, %s90
    %s105 = sphi 0, %s91
    %s109 = sphi 0, %s109
    %s111 = sphi 0, %s109
    %s112 = sphi 0, %s111
    %s126 = sphi 0, %s112
    %s130 = sphi 0, %s130
    %s132 = sphi 0, %s130
    %s133 = sphi 0, %s132
    %s147 = sphi 0, %s133
    %s153 = sphi 0, %s155
    %s156 = sphi 0, %s153
    %s157 = sphi 0, %s156
    %s173 = sphi 0, %s157
  $region4: #{image_encoder_forward.1} parent=0 // loop_header_branch
    %15 = sbr.rel (%p13) target = $region8
  $region5: #{image_encoder_forward.1} parent=0 // loop_body
    %s17 = ssub.s32 %s12, 1
    %s18 = ssub.s32 %s12, 2
    %s19 = sadd.s32 %s12, 1
    %s20 = ssub.s32 %s12, %s19
    %p21 = scmp.eq.s32.totalorder %s20, 0
    %s23 = sadd.s32 %s22, 1
    %s24 = scalar_select %p21, %s22, %s23
    %p27 = pneg %p21
    %p28 = scmp.eq.s32.totalorder %s12, 1
    %p29 = por %p27, %p28
    %p30 = scmp.ne.s32.totalorder %s22, %s25
    %p31 = scmp.eq.s32.totalorder %s12, 0
    %p32 = por %p30, %p31
    %p33 = scmp.ne.s32.totalorder %s22, %s25
    %p34 = scmp.eq.s32.totalorder %s17, 1
    %p35 = por %p33, %p34
    %p36 = scmp.ne.s32.totalorder %s25, %s26
    %p37 = scmp.eq.s32.totalorder %s17, 0
    %p38 = por %p36, %p37
    %p39 = scmp.ne.s32.totalorder %s25, %s26
    %p40 = scmp.eq.s32.totalorder %s18, 1
    %p41 = por %p39, %p40
    %p43 = scmp.ne.s32.totalorder %s26, %s42
    %p44 = scmp.eq.s32.totalorder %s18, 0
    %p45 = por %p43, %p44
    %s47 = sadd.s32 %s46, 1
    %p50 = scmp.eq.s32.totalorder %s12, 1
    %p51 = scmp.ne.s32.totalorder %s46, %s48
    %p52 = scmp.eq.s32.totalorder %s12, 0
    %p53 = por %p51, %p52
    %p54 = scmp.ne.s32.totalorder %s46, %s48
    %p55 = scmp.eq.s32.totalorder %s17, 1
    %p56 = por %p54, %p55
    %p57 = scmp.ne.s32.totalorder %s48, %s49
    %p58 = scmp.eq.s32.totalorder %s17, 0
    %p59 = por %p57, %p58
    %p60 = scmp.ne.s32.totalorder %s48, %s49
    %p61 = scmp.eq.s32.totalorder %s18, 1
    %p62 = por %p60, %p61
    %p64 = scmp.ne.s32.totalorder %s49, %s63
    %p65 = scmp.eq.s32.totalorder %s18, 0
    %p66 = por %p64, %p65
    %s68 = sadd.s32 %s67, 1
    %p71 = scmp.eq.s32.totalorder %s12, 1
    %p72 = scmp.ne.s32.totalorder %s67, %s69
    %p73 = scmp.eq.s32.totalorder %s12, 0
    %p74 = por %p72, %p73
    %p75 = scmp.ne.s32.totalorder %s67, %s69
    %p76 = scmp.eq.s32.totalorder %s17, 1
    %p77 = por %p75, %p76
    %p78 = scmp.ne.s32.totalorder %s69, %s70
    %p79 = scmp.eq.s32.totalorder %s17, 0
    %p80 = por %p78, %p79
    %p81 = scmp.ne.s32.totalorder %s69, %s70
    %p82 = scmp.eq.s32.totalorder %s18, 1
    %p83 = por %p81, %p82
    %p85 = scmp.ne.s32.totalorder %s70, %s84
    %p86 = scmp.eq.s32.totalorder %s18, 0
    %p87 = por %p85, %p86
    %s89 = sadd.s32 %s88, 1
    %p92 = scmp.eq.s32.totalorder %s12, 1
    %p93 = scmp.ne.s32.totalorder %s88, %s90
    %p94 = scmp.eq.s32.totalorder %s12, 0
    %p95 = por %p93, %p94
    %p96 = scmp.ne.s32.totalorder %s88, %s90
    %p97 = scmp.eq.s32.totalorder %s17, 1
    %p98 = por %p96, %p97
    %p99 = scmp.ne.s32.totalorder %s90, %s91
    %p100 = scmp.eq.s32.totalorder %s17, 0
    %p101 = por %p99, %p100
    %p102 = scmp.ne.s32.totalorder %s90, %s91
    %p103 = scmp.eq.s32.totalorder %s18, 1
    %p104 = por %p102, %p103
    %p106 = scmp.ne.s32.totalorder %s91, %s105
    %p107 = scmp.eq.s32.totalorder %s18, 0
    %p108 = por %p106, %p107
    %s110 = sadd.s32 %s109, 1
    %p113 = scmp.eq.s32.totalorder %s12, 1
    %p114 = scmp.ne.s32.totalorder %s109, %s111
    %p115 = scmp.eq.s32.totalorder %s12, 0
    %p116 = por %p114, %p115
    %p117 = scmp.ne.s32.totalorder %s109, %s111
    %p118 = scmp.eq.s32.totalorder %s17, 1
    %p119 = por %p117, %p118
    %p120 = scmp.ne.s32.totalorder %s111, %s112
    %p121 = scmp.eq.s32.totalorder %s17, 0
    %p122 = por %p120, %p121
    %p123 = scmp.ne.s32.totalorder %s111, %s112
    %p124 = scmp.eq.s32.totalorder %s18, 1
    %p125 = por %p123, %p124
    %p127 = scmp.ne.s32.totalorder %s112, %s126
    %p128 = scmp.eq.s32.totalorder %s18, 0
    %p129 = por %p127, %p128
    %s131 = sadd.s32 %s130, 1
    %p134 = scmp.eq.s32.totalorder %s12, 1
    %p135 = scmp.ne.s32.totalorder %s130, %s132
    %p136 = scmp.eq.s32.totalorder %s12, 0
    %p137 = por %p135, %p136
    %p138 = scmp.ne.s32.totalorder %s130, %s132
    %p139 = scmp.eq.s32.totalorder %s17, 1
    %p140 = por %p138, %p139
    %p141 = scmp.ne.s32.totalorder %s132, %s133
    %p142 = scmp.eq.s32.totalorder %s17, 0
    %p143 = por %p141, %p142
    %p144 = scmp.ne.s32.totalorder %s132, %s133
    %p145 = scmp.eq.s32.totalorder %s18, 1
    %p146 = por %p144, %p145
    %p148 = scmp.ne.s32.totalorder %s133, %s147
    %p149 = scmp.eq.s32.totalorder %s18, 0
    %p150 = por %p148, %p149
    %s151 = ssub.s32 %s12, %s19
    %p152 = scmp.eq.s32.totalorder %s151, 0
    %s154 = sadd.s32 %s153, 1
    %s155 = scalar_select %p152, %s153, %s154
    %p158 = pneg %p152
    %p159 = scmp.eq.s32.totalorder %s12, 1
    %p160 = por %p158, %p159
    %p161 = scmp.ne.s32.totalorder %s153, %s156
    %p162 = scmp.eq.s32.totalorder %s12, 0
    %p163 = por %p161, %p162
    %p164 = scmp.ne.s32.totalorder %s153, %s156
    %p165 = scmp.eq.s32.totalorder %s17, 1
    %p166 = por %p164, %p165
    %p167 = scmp.ne.s32.totalorder %s156, %s157
    %p168 = scmp.eq.s32.totalorder %s17, 0
    %p169 = por %p167, %p168
    %p170 = scmp.ne.s32.totalorder %s156, %s157
    %p171 = scmp.eq.s32.totalorder %s18, 1
    %p172 = por %p170, %p171
    %p174 = scmp.ne.s32.totalorder %s157, %s173
    %p175 = scmp.eq.s32.totalorder %s18, 0
    %p176 = por %p174, %p175
    %p177 = scmp.le.s32.totalorder 1, %s12
    %p178 = scmp.lt.s32.totalorder %s12, 3
    %p179 = pnand %p177, %p178
    %p180 = pneg %p179
    // Predicated region
    $region9: #{image_encoder_forward.1} parent=5 // pred_check
      _
    $region10: #{image_encoder_forward.1} parent=5 // pred_check_branch
      %182 = sbr.rel (%p179) target = $region12
    $region11: #{image_encoder_forward.1} parent=5 // pred_region
      %s183 = ssub.s32 %s12, 1
      // Predicated region
      $region13: #{image_encoder_forward.1} parent=11 // pred_check
        %p184 = pneg %p59
      $region14: #{image_encoder_forward.1} parent=11 // pred_check_branch
        %186 = sbr.rel (%p184) target = $region16
      $region15: #{image_encoder_forward.1} parent=11 // pred_region
        _
      $region16: #{image_encoder_forward.1} parent=11 // pred_fallthru
        _
      // Predicated region
      $region17: #{image_encoder_forward.1} parent=11 // pred_check
        %p187 = pneg %p80
      $region18: #{image_encoder_forward.1} parent=11 // pred_check_branch
        %189 = sbr.rel (%p187) target = $region20
      $region19: #{image_encoder_forward.1} parent=11 // pred_region
        _
      $region20: #{image_encoder_forward.1} parent=11 // pred_fallthru
        _
      // Predicated region
      $region21: #{image_encoder_forward.1} parent=11 // pred_check
        %p190 = pneg %p101
      $region22: #{image_encoder_forward.1} parent=11 // pred_check_branch
        %192 = sbr.rel (%p190) target = $region24
      $region23: #{image_encoder_forward.1} parent=11 // pred_region
        _
      $region24: #{image_encoder_forward.1} parent=11 // pred_fallthru
        _
      // Predicated region
      $region25: #{image_encoder_forward.1} parent=11 // pred_check
        %p193 = pneg %p122
      $region26: #{image_encoder_forward.1} parent=11 // pred_check_branch
        %195 = sbr.rel (%p193) target = $region28
      $region27: #{image_encoder_forward.1} parent=11 // pred_region
        _
      $region28: #{image_encoder_forward.1} parent=11 // pred_fallthru
        _
      // Predicated region
      $region29: #{image_encoder_forward.1} parent=11 // pred_check
        %p196 = pneg %p143
      $region30: #{image_encoder_forward.1} parent=11 // pred_check_branch
        %198 = sbr.rel (%p196) target = $region32
      $region31: #{image_encoder_forward.1} parent=11 // pred_region
        _
      $region32: #{image_encoder_forward.1} parent=11 // pred_fallthru
        _
    $region12: #{image_encoder_forward.1} parent=5 // pred_fallthru
      _
    %p199 = scmp.lt.s32.totalorder %s12, 2
    // Predicated region
    $region33: #{image_encoder_forward.1} parent=5 // pred_check
      %p200 = pneg %p199
    $region34: #{image_encoder_forward.1} parent=5 // pred_check_branch
      %202 = sbr.rel (%p200) target = $region36
    $region35: #{image_encoder_forward.1} parent=5 // pred_region
      // Predicated region
      $region37: #{image_encoder_forward.1} parent=35 // pred_check
        %p203 = pneg %p32
      $region38: #{image_encoder_forward.1} parent=35 // pred_check_branch
        %205 = sbr.rel (%p203) target = $region40
      $region39: #{image_encoder_forward.1} parent=35 // pred_region
        %p206 = scmp.lt.s32.totalorder %s12, 1
        %s207 = scalar_select %p206, %s12, 1
        %s208 = smul.addr %s207, 2
        %s209 = smul.addr %s208, 4
        %s210 = scalar_lea.vmem %s0, %s209
      $region40: #{image_encoder_forward.1} parent=35 // pred_fallthru
        _
    $region36: #{image_encoder_forward.1} parent=5 // pred_fallthru
      _
    %p211 = scmp.le.s32.totalorder 1, %s12
    %p212 = scmp.lt.s32.totalorder %s12, 3
    %p213 = pnand %p211, %p212
    %p214 = pneg %p213
    // Predicated region
    $region41: #{image_encoder_forward.1} parent=5 // pred_check
      _
    $region42: #{image_encoder_forward.1} parent=5 // pred_check_branch
      %216 = sbr.rel (%p213) target = $region44
    $region43: #{image_encoder_forward.1} parent=5 // pred_region
      %s217 = ssub.s32 %s12, 1
      %p218 = scmp.lt.s32.totalorder %s17, 1
      %s219 = scalar_select %p218, %s17, 1
      %s220 = smul.addr %s219, 2
      %s221 = smul.addr %s220, 4
      %s222 = scalar_lea.vmem %s0, %s221
      %p223 = pneg %p38
      %p224 = pneg %p35
      %p225 = pneg %p59
      %p226 = pneg %p56
      %p227 = pneg %p80
      %p228 = pneg %p77
      %p229 = pneg %p101
      %p230 = pneg %p98
      %p231 = pneg %p122
      %p232 = pneg %p119
      %p233 = pneg %p143
      %p234 = pneg %p140
      %p235 = pneg %p169
      %p236 = pneg %p166
      %p237 = scmp.lt.s32.totalorder %s17, 1
      %s238 = scalar_select %p237, %s17, 1
      %s239 = smul.addr %s238, 8
      %s240 = scalar_lea.vmem %s6, %s239
      %p241 = scmp.lt.s32.totalorder %s17, 1
      %s242 = scalar_select %p241, %s17, 1
      %s243 = smul.addr %s242, 2
      %s244 = smul.addr %s243, 4
      %s245 = scalar_lea.vmem %s0, %s244
      %p246 = scmp.lt.s32.totalorder %s17, 1
      %s247 = scalar_select %p246, %s17, 1
      %s248 = smul.addr %s247, 8
      %s249 = scalar_lea.vmem %s6, %s248
      %v251 = vlaneseq
      %v252 = vand.u32 %v251, 127
      %vm253 = vcmp.ge.s32.totalorder %v252, 5
      %v254 = vsel %vm253, -1e+09, 0.0
      %v255 = vld [vmem:[%s245] sm:$0xff]
      %v256 = vld [vmem:[%s3] sm:$0xf]
      %v257 = vld [vmem:[%s3 + $0x4] sm:$0xf]
      %v258 = vld [vmem:[%s3 + $0x8] sm:$0xf]
      %v259 = vld [vmem:[%s3 + $0xc] sm:$0xf]
      %v260 = vld [vmem:[%s3 + $0x10] sm:$0xf]
      %v261 = vld [vmem:[%s3 + $0x14] sm:$0xf]
      %v262 = vld [vmem:[%s3 + $0x18] sm:$0xf]
      %v263 = vld [vmem:[%s3 + $0x1c] sm:$0xf]
      %v264 = vld [vmem:[%s3 + $0x20] sm:$0xf]
      %v265 = vld [vmem:[%s3 + $0x24] sm:$0xf]
      %v266 = vld [vmem:[%s3 + $0x28] sm:$0xf]
      %v267 = vld [vmem:[%s3 + $0x2c] sm:$0xf]
      %v268 = vld [vmem:[%s3 + $0x30] sm:$0xf]
      %v269 = vld [vmem:[%s3 + $0x34] sm:$0xf]
      %v270 = vld [vmem:[%s3 + $0x38] sm:$0xf]
      %v271 = vld [vmem:[%s3 + $0x3c] sm:$0xf]
      %v272 = vld [vmem:[%s3 + $0x40] sm:$0xf]
      %v273 = vld [vmem:[%s3 + $0x44] sm:$0xf]
      %v274 = vld [vmem:[%s3 + $0x48] sm:$0xf]
      %v275 = vld [vmem:[%s3 + $0x4c] sm:$0xf]
      %v276 = vld [vmem:[%s3 + $0x50] sm:$0xf]
      %v277 = vld [vmem:[%s3 + $0x54] sm:$0xf]
      %v278 = vld [vmem:[%s3 + $0x58] sm:$0xf]
      %v279 = vld [vmem:[%s3 + $0x5c] sm:$0xf]
      %v280 = vld [vmem:[%s1] sm:$0xff]
      %v282 = vunpack.c.l.b16 %v255
      %v283 = vunpack.c.h.b16 %v255
      %v284 = vpack.c.b16 %v282, %v282
      %v285 = vpack.c.b16 %v283, %v283
      %v311 = vunpack.c.l.b16 %v256
      %v312 = vunpack.c.l.b16 %v257
      %v313 = vunpack.c.l.b16 %v258
      %v314 = vunpack.c.l.b16 %v259
      %v315 = vunpack.c.l.b16 %v260
      %v316 = vunpack.c.l.b16 %v261
      %v317 = vunpack.c.l.b16 %v262
      %v318 = vunpack.c.l.b16 %v263
      %v319 = vunpack.c.l.b16 %v264
      %v320 = vunpack.c.l.b16 %v265
      %v321 = vunpack.c.l.b16 %v266
      %v322 = vunpack.c.l.b16 %v267
      %v323 = vunpack.c.l.b16 %v268
      %v324 = vunpack.c.l.b16 %v269
      %v325 = vunpack.c.l.b16 %v270
      %v326 = vunpack.c.l.b16 %v271
      %v327 = vunpack.c.l.b16 %v272
      %v328 = vunpack.c.l.b16 %v273
      %v329 = vunpack.c.l.b16 %v274
      %v330 = vunpack.c.l.b16 %v275
      %v331 = vunpack.c.l.b16 %v276
      %v332 = vunpack.c.l.b16 %v277
      %v333 = vunpack.c.l.b16 %v278
      %v334 = vunpack.c.l.b16 %v279
      %v335 = vpack.c.b16 %v312, %v311
      %v336 = vpack.c.b16 %v314, %v313
      %v337 = vpack.c.b16 %v316, %v315
      %v338 = vpack.c.b16 %v318, %v317
      %v339 = vpack.c.b16 %v320, %v319
      %v340 = vpack.c.b16 %v322, %v321
      %v341 = vpack.c.b16 %v324, %v323
      %v342 = vpack.c.b16 %v326, %v325
      %v343 = vpack.c.b16 %v328, %v327
      %v344 = vpack.c.b16 %v330, %v329
      %v345 = vpack.c.b16 %v332, %v331
      %v346 = vpack.c.b16 %v334, %v333
      %vm359 = vcmask 523264
      %v361 = vsel %vm359, %v285, 0
      %363 = vmatprep.subr.bf16.mxu0 0
      %364 = vmatpush1.bf16.msra.mxu0 %v335
      %365 = vmatprep.subr.bf16.mxu0 0
      %366 = vmatpush1.bf16.msra.mxu0 %v336
      %367 = vmatprep.subr.bf16.mxu0 0
      %368 = vmatpush1.bf16.msra.mxu0 %v337
      %369 = vmatprep.subr.bf16.mxu0 0
      %370 = vmatpush1.bf16.msra.mxu0 %v338
      %371 = vmatprep.subr.bf16.mxu0 0
      %372 = vmatpush1.bf16.msra.mxu0 %v339
      %373 = vmatprep.subr.bf16.mxu0 0
      %374 = vmatpush1.bf16.msra.mxu0 %v340
      %375 = vmatprep.subr.bf16.mxu0 0
      %376 = vmatpush1.bf16.msra.mxu0 %v341
      %377 = vmatprep.subr.bf16.mxu0 0
      %378 = vmatpush1.bf16.msra.mxu0 %v342
      %379 = vmatprep.subr.bf16.mxu0 0
      %380 = vmatpush1.bf16.msra.mxu0 %v343
      %381 = vmatprep.subr.bf16.mxu0 0
      %382 = vmatpush1.bf16.msra.mxu0 %v344
      %383 = vmatprep.subr.bf16.mxu0 0
      %384 = vmatpush1.bf16.msra.mxu0 %v345
      %385 = vmatprep.subr.bf16.mxu0 0
      %386 = vmatpush1.bf16.msra.mxu0 %v346
      %387 = vmatprep.subr.bf16.mxu0 0
      %388 = vmatpush1.bf16.msra.mxu0 0
      %389 = vmatprep.subr.bf16.mxu0 0
      %390 = vmatpush1.bf16.msra.mxu0 0
      %391 = vmatprep.subr.bf16.mxu0 0
      %392 = vmatpush1.bf16.msra.mxu0 0
      %393 = vmatprep.subr.bf16.mxu0 0
      %394 = vmatpush1.bf16.msra.mxu0 0
      %395 = vmatprep.mubr.bf16.mxu0 %v361
      %396 = vmatmul.mubr.bf16.gmra.mrb[0].mxu0 %v284
      %v397 = vpop.f32.mrb[0].mxu0
      %v398 = vadd.f32 %v280, %v397
      %v399 = vpop.f32.mrb[0].mxu0
      %v400 = vpop.f32.mrb[0].mxu0
      %v401 = vpop.f32.mrb[0].mxu0
      %402 = vdwg.mxu0
      %v403 = vld [vmem:[%s5] sm:$0x1]
      %v404 = vld [vmem:[%s5 + $0x1] sm:$0x1]
      %vm405 = vcmask 261120
      %v406 = vsel %vm405, %v398, 0.0
      %407 = vadd.xlane.f32.xlu0 %v406
      %v408 = vpop.xlane.xlu0 %407
      %v409 = vrcp.pop 32.0
      %v410 = vmul.f32 %v408, %v409
      %v411 = vsub.f32 %v398, %v410
      %v412 = vmul.f32 %v411, %v411
      %v413 = vsel %vm405, %v412, 0.0
      %414 = vadd.xlane.f32.xlu0 %v413
      %v415 = vpop.xlane.xlu0 %414
      %v416 = vmul.f32 %v415, %v409
      %v417 = vadd.f32 %v416, 1e-12
      %v418 = vrsqrt.pop %v417
      %v419 = vmul.f32 %v411, %v418
      %v420 = vlaneseq
      %v421 = vshrl.u32 %v420, 7
      %v422 = vsub.s32 0, %v421
      %v423 = vrot.slane %v403, %v422
      %v424 = vmul.f32 %v419, %v423
      %v425 = vlaneseq
      %v426 = vshrl.u32 %v425, 7
      %v427 = vsub.s32 0, %v426
      %v428 = vrot.slane %v404, %v427
      %v429 = vadd.f32 %v424, %v428
      %v430 = vld [vmem:[%s2] sm:$0xf]
      %v431 = vld [vmem:[%s2 + $0x4] sm:$0xf]
      %v432 = vld [vmem:[%s2 + $0x8] sm:$0xf]
      %v433 = vld [vmem:[%s2 + $0xc] sm:$0xf]
      %v434 = vpack.c.bf16 %v429, %v429
      %v435 = vld [vmem:[%s5 + $0x2] sm:$0x1]
      %v436 = vlaneseq
      %v437 = vshrl.u32 %v436, 7
      %v438 = vsub.s32 0, %v437
      %v439 = vrot.slane %v435, %v438
      %v444 = vunpack.c.l.b16 %v430
      %v445 = vunpack.c.l.b16 %v431
      %v446 = vunpack.c.l.b16 %v432
      %v447 = vunpack.c.l.b16 %v433
      %v448 = vpack.c.b16 %v445, %v444
      %v449 = vpack.c.b16 %v447, %v446
      %v453 = vsel %vm405, %v434, 0
      %455 = vmatprep.subr.bf16.mxu0 0
      %456 = vmatpush1.bf16.msra.mxu0 %v448
      %457 = vmatprep.subr.bf16.mxu0 0
      %458 = vmatpush1.bf16.msra.mxu0 %v449
      %459 = vmatprep.subr.bf16.mxu0 0
      %460 = vmatpush1.bf16.msra.mxu0 0
      %461 = vmatprep.subr.bf16.mxu0 0
      %462 = vmatpush1.bf16.msra.mxu0 0
      %463 = vmatprep.subr.bf16.mxu0 0
      %464 = vmatpush1.bf16.msra.mxu0 0
      %465 = vmatprep.subr.bf16.mxu0 0
      %466 = vmatpush1.bf16.msra.mxu0 0
      %467 = vmatprep.subr.bf16.mxu0 0
      %468 = vmatpush1.bf16.msra.mxu0 0
      %469 = vmatprep.subr.bf16.mxu0 0
      %470 = vmatpush1.bf16.msra.mxu0 0
      %471 = vmatprep.subr.bf16.mxu0 0
      %472 = vmatpush1.bf16.msra.mxu0 0
      %473 = vmatprep.subr.bf16.mxu0 0
      %474 = vmatpush1.bf16.msra.mxu0 0
      %475 = vmatprep.subr.bf16.mxu0 0
      %476 = vmatpush1.bf16.msra.mxu0 0
      %477 = vmatprep.subr.bf16.mxu0 0
      %478 = vmatpush1.bf16.msra.mxu0 0
      %479 = vmatprep.subr.bf16.mxu0 0
      %480 = vmatpush1.bf16.msra.mxu0 0
      %481 = vmatprep.subr.bf16.mxu0 0
      %482 = vmatpush1.bf16.msra.mxu0 0
      %483 = vmatprep.subr.bf16.mxu0 0
      %484 = vmatpush1.bf16.msra.mxu0 0
      %485 = vmatprep.subr.bf16.mxu0 0
      %486 = vmatpush1.bf16.msra.mxu0 0
      %487 = vmatprep.mubr.bf16.mxu0 0
      %488 = vmatmul.mubr.bf16.gmra.mrb[0].mxu0 %v453
      %v489 = vpop.f32.mrb[0].mxu0
      %v490 = vadd.f32 %v439, %v489
      %v491 = vpop.f32.mrb[0].mxu0
      %v492 = vpop.f32.mrb[0].mxu0
      %v493 = vpop.f32.mrb[0].mxu0
      %494 = vdwg.mxu0
      %s495 = scalar_lea.vmem %s2, 32
      %v496 = vld [vmem:[%s495] sm:$0xf]
      %v497 = vld [vmem:[%s495 + $0x4] sm:$0xf]
      %v498 = vld [vmem:[%s495 + $0x8] sm:$0xf]
      %v499 = vld [vmem:[%s495 + $0xc] sm:$0xf]
      %v500 = vld [vmem:[%s5 + $0x4] sm:$0x1]
      %v501 = vlaneseq
      %v502 = vshrl.u32 %v501, 7
      %v503 = vsub.s32 0, %v502
      %v504 = vrot.slane %v500, %v503
      %v509 = vunpack.c.l.b16 %v496
      %v510 = vunpack.c.l.b16 %v497
      %v511 = vunpack.c.l.b16 %v498
      %v512 = vunpack.c.l.b16 %v499
      %v513 = vpack.c.b16 %v510, %v509
      %v514 = vpack.c.b16 %v512, %v511
      %517 = vmatprep.subr.bf16.mxu0 0
      %518 = vmatpush1.bf16.msra.mxu0 %v513
      %519 = vmatprep.subr.bf16.mxu0 0
      %520 = vmatpush1.bf16.msra.mxu0 %v514
      %521 = vmatprep.subr.bf16.mxu0 0
      %522 = vmatpush1.bf16.msra.mxu0 0
      %523 = vmatprep.subr.bf16.mxu0 0
      %524 = vmatpush1.bf16.msra.mxu0 0
      %525 = vmatprep.subr.bf16.mxu0 0
      %526 = vmatpush1.bf16.msra.mxu0 0
      %527 = vmatprep.subr.bf16.mxu0 0
      %528 = vmatpush1.bf16.msra.mxu0 0
      %529 = vmatprep.subr.bf16.mxu0 0
      %530 = vmatpush1.bf16.msra.mxu0 0
      %531 = vmatprep.subr.bf16.mxu0 0
      %532 = vmatpush1.bf16.msra.mxu0 0
      %533 = vmatprep.subr.bf16.mxu0 0
      %534 = vmatpush1.bf16.msra.mxu0 0
      %535 = vmatprep.subr.bf16.mxu0 0
      %536 = vmatpush1.bf16.msra.mxu0 0
      %537 = vmatprep.subr.bf16.mxu0 0
      %538 = vmatpush1.bf16.msra.mxu0 0
      %539 = vmatprep.subr.bf16.mxu0 0
      %540 = vmatpush1.bf16.msra.mxu0 0
      %541 = vmatprep.subr.bf16.mxu0 0
      %542 = vmatpush1.bf16.msra.mxu0 0
      %543 = vmatprep.subr.bf16.mxu0 0
      %544 = vmatpush1.bf16.msra.mxu0 0
      %545 = vmatprep.subr.bf16.mxu0 0
      %546 = vmatpush1.bf16.msra.mxu0 0
      %547 = vmatprep.subr.bf16.mxu0 0
      %548 = vmatpush1.bf16.msra.mxu0 0
      %549 = vmatprep.mubr.bf16.mxu0 0
      %550 = vmatmul.mubr.bf16.gmra.mrb[0].mxu0 %v453
      %v551 = vpop.f32.mrb[0].mxu0
      %v552 = vadd.f32 %v504, %v551
      %v553 = vpop.f32.mrb[0].mxu0
      %v554 = vpop.f32.mrb[0].mxu0
      %v555 = vpop.f32.mrb[0].mxu0
      %556 = vdwg.mxu0
      %s557 = scalar_lea.vmem %s2, 64
      %v558 = vld [vmem:[%s557] sm:$0xf]
      %v559 = vld [vmem:[%s557 + $0x4] sm:$0xf]
      %v560 = vld [vmem:[%s557 + $0x8] sm:$0xf]
      %v561 = vld [vmem:[%s557 + $0xc] sm:$0xf]
      %v562 = vld [vmem:[%s5 + $0x6] sm:$0x1]
      %v563 = vlaneseq
      %v564 = vshrl.u32 %v563, 7
      %v565 = vsub.s32 0, %v564
      %v566 = vrot.slane %v562, %v565
      %v571 = vunpack.c.l.b16 %v558
      %v572 = vunpack.c.l.b16 %v559
      %v573 = vunpack.c.l.b16 %v560
      %v574 = vunpack.c.l.b16 %v561
      %v575 = vpack.c.b16 %v572, %v571
      %v576 = vpack.c.b16 %v574, %v573
      %579 = vmatprep.subr.bf16.mxu0 0
      %580 = vmatpush1.bf16.msra.mxu0 %v575
      %581 = vmatprep.subr.bf16.mxu0 0
      %582 = vmatpush1.bf16.msra.mxu0 %v576
      %583 = vmatprep.subr.bf16.mxu0 0
      %584 = vmatpush1.bf16.msra.mxu0 0
      %585 = vmatprep.subr.bf16.mxu0 0
      %586 = vmatpush1.bf16.msra.mxu0 0
      %587 = vmatprep.subr.bf16.mxu0 0
      %588 = vmatpush1.bf16.msra.mxu0 0
      %589 = vmatprep.subr.bf16.mxu0 0
      %590 = vmatpush1.bf16.msra.mxu0 0
      %591 = vmatprep.subr.bf16.mxu0 0
      %592 = vmatpush1.bf16.msra.mxu0 0
      %593 = vmatprep.subr.bf16.mxu0 0
      %594 = vmatpush1.bf16.msra.mxu0 0
      %595 = vmatprep.subr.bf16.mxu0 0
      %596 = vmatpush1.bf16.msra.mxu0 0
      %597 = vmatprep.subr.bf16.mxu0 0
      %598 = vmatpush1.bf16.msra.mxu0 0
      %599 = vmatprep.subr.bf16.mxu0 0
      %600 = vmatpush1.bf16.msra.mxu0 0
      %601 = vmatprep.subr.bf16.mxu0 0
      %602 = vmatpush1.bf16.msra.mxu0 0
      %603 = vmatprep.subr.bf16.mxu0 0
      %604 = vmatpush1.bf16.msra.mxu0 0
      %605 = vmatprep.subr.bf16.mxu0 0
      %606 = vmatpush1.bf16.msra.mxu0 0
      %607 = vmatprep.subr.bf16.mxu0 0
      %608 = vmatpush1.bf16.msra.mxu0 0
      %609 = vmatprep.subr.bf16.mxu0 0
      %610 = vmatpush1.bf16.msra.mxu0 0
      %611 = vmatprep.mubr.bf16.mxu0 0
      %612 = vmatmul.mubr.bf16.gmra.mrb[0].mxu0 %v453
      %v613 = vpop.f32.mrb[0].mxu0
      %v614 = vadd.f32 %v566, %v613
      %v615 = vpop.f32.mrb[0].mxu0
      %v616 = vpop.f32.mrb[0].mxu0
      %v617 = vpop.f32.mrb[0].mxu0
      %618 = vdwg.mxu0
      %v619 = vpack.c.bf16 %v490, %v490
      %v620 = vpack.c.bf16 %v552, %v552
      %v621 = vpack.c.bf16 %v614, %v614
      %vm622 = vcmask 130048
      %v624 = vsel %vm622, %v619, 0
      %v627 = vsel %vm622, %v620, 0
      %629 = vmatprep.subr.bf16.mxu0 0
      %630 = vmatpush1.bf16.xpose.msra.mxu0 %v627
      %631 = vmatprep.subr.bf16.mxu0 0
      %632 = vmatpush1.bf16.xpose.msra.mxu0 0
      %633 = vmatprep.subr.bf16.mxu0 0
      %634 = vmatpush1.bf16.xpose.msra.mxu0 0
      %635 = vmatprep.subr.bf16.mxu0 0
      %636 = vmatpush1.bf16.xpose.msra.mxu0 0
      %637 = vmatprep.subr.bf16.mxu0 0
      %638 = vmatpush1.bf16.xpose.msra.mxu0 0
      %639 = vmatprep.subr.bf16.mxu0 0
      %640 = vmatpush1.bf16.xpose.msra.mxu0 0
      %641 = vmatprep.subr.bf16.mxu0 0
      %642 = vmatpush1.bf16.xpose.msra.mxu0 0
      %643 = vmatprep.subr.bf16.mxu0 0
      %644 = vmatpush1.bf16.xpose.msra.mxu0 0
      %645 = vmatprep.subr.bf16.mxu0 0
      %646 = vmatpush1.bf16.xpose.msra.mxu0 0
      %647 = vmatprep.subr.bf16.mxu0 0
      %648 = vmatpush1.bf16.xpose.msra.mxu0 0
      %649 = vmatprep.subr.bf16.mxu0 0
      %650 = vmatpush1.bf16.xpose.msra.mxu0 0
      %651 = vmatprep.subr.bf16.mxu0 0
      %652 = vmatpush1.bf16.xpose.msra.mxu0 0
      %653 = vmatprep.subr.bf16.mxu0 0
      %654 = vmatpush1.bf16.xpose.msra.mxu0 0
      %655 = vmatprep.subr.bf16.mxu0 0
      %656 = vmatpush1.bf16.xpose.msra.mxu0 0
      %657 = vmatprep.subr.bf16.mxu0 0
      %658 = vmatpush1.bf16.xpose.msra.mxu0 0
      %659 = vmatprep.subr.bf16.mxu0 0
      %660 = vmatpush1.bf16.xpose.msra.mxu0 0
      %661 = vmatprep.mubr.bf16.mxu0 0
      %662 = vmatmul.mubr.bf16.gmra.mrb[0].mxu0 %v624
      %v663 = vpop.f32.mrb[0].mxu0
      %v664 = vadd.f32 0.0, %v663
      %v665 = vpop.f32.mrb[0].mxu0
      %v666 = vpop.f32.mrb[0].mxu0
      %v667 = vpop.f32.mrb[0].mxu0
      %668 = vdwg.mxu0
      %v669 = vmul.f32 %v664, 0.25
      %v670 = vadd.f32 %v669, %v254
      %v671 = vmul.f32 %v670, 1.442695
      %v672 = vpow.pop %v671
      %vm673 = vcmask 64512
      %v674 = vsel %vm673, %v672, 0.0
      %675 = vadd.xlane.f32.xlu0 %v674
      %v676 = vpop.xlane.xlu0 %675
      %v677 = vrcp.pop %v676
      %v678 = vmul.f32 %v672, %v677
      %v679 = vpack.c.bf16 %v678, %v678
      %v681 = vsel %vm673, %v679, 0
      %vm683 = vcmask 1043456
      %v685 = vsel %vm683, %v621, 0
      %687 = vmatprep.subr.bf16.mxu0 0
      %688 = vmatpush1.bf16.msra.mxu0 %v685
      %689 = vmatprep.subr.bf16.mxu0 0
      %690 = vmatpush1.bf16.msra.mxu0 0
      %691 = vmatprep.subr.bf16.mxu0 0
      %692 = vmatpush1.bf16.msra.mxu0 0
      %693 = vmatprep.subr.bf16.mxu0 0
      %694 = vmatpush1.bf16.msra.mxu0 0
      %695 = vmatprep.subr.bf16.mxu0 0
      %696 = vmatpush1.bf16.msra.mxu0 0
      %697 = vmatprep.subr.bf16.mxu0 0
      %698 = vmatpush1.bf16.msra.mxu0 0
      %699 = vmatprep.subr.bf16.mxu0 0
      %700 = vmatpush1.bf16.msra.mxu0 0
      %701 = vmatprep.subr.bf16.mxu0 0
      %702 = vmatpush1.bf16.msra.mxu0 0
      %703 = vmatprep.subr.bf16.mxu0 0
      %704 = vmatpush1.bf16.msra.mxu0 0
      %705 = vmatprep.subr.bf16.mxu0 0
      %706 = vmatpush1.bf16.msra.mxu0 0
      %707 = vmatprep.subr.bf16.mxu0 0
      %708 = vmatpush1.bf16.msra.mxu0 0
      %709 = vmatprep.subr.bf16.mxu0 0
      %710 = vmatpush1.bf16.msra.mxu0 0
      %711 = vmatprep.subr.bf16.mxu0 0
      %712 = vmatpush1.bf16.msra.mxu0 0
      %713 = vmatprep.subr.bf16.mxu0 0
      %714 = vmatpush1.bf16.msra.mxu0 0
      %715 = vmatprep.subr.bf16.mxu0 0
      %716 = vmatpush1.bf16.msra.mxu0 0
      %717 = vmatprep.subr.bf16.mxu0 0
      %718 = vmatpush1.bf16.msra.mxu0 0
      %719 = vmatprep.mubr.bf16.mxu0 0
      %720 = vmatmul.mubr.bf16.gmra.mrb[0].mxu0 %v681
      %v721 = vpop.f32.mrb[0].mxu0
      %v722 = vadd.f32 0.0, %v721
      %v723 = vpop.f32.mrb[0].mxu0
      %v724 = vpop.f32.mrb[0].mxu0
      %v725 = vpop.f32.mrb[0].mxu0
      %726 = vdwg.mxu0
      %v727 = vld [vmem:[%s3 + $0x60] sm:$0xf]
      %v728 = vld [vmem:[%s3 + $0x64] sm:$0xf]
      %v729 = vpack.c.bf16 %v722, %v722
      %s730 = scalar_lea.vmem %s2, 16
      %v731 = vld [vmem:[%s730] sm:$0xf]
      %v732 = vld [vmem:[%s730 + $0x4] sm:$0xf]
      %v733 = vld [vmem:[%s730 + $0x8] sm:$0xf]
      %v734 = vld [vmem:[%s730 + $0xc] sm:$0xf]
      %v735 = vld [vmem:[%s5 + $0x3] sm:$0x1]
      %v736 = vlaneseq
      %v737 = vshrl.u32 %v736, 7
      %v738 = vsub.s32 0, %v737
      %v739 = vrot.slane %v735, %v738
      %v744 = vunpack.c.l.b16 %v731
      %v745 = vunpack.c.l.b16 %v732
      %v746 = vunpack.c.l.b16 %v733
      %v747 = vunpack.c.l.b16 %v734
      %v748 = vpack.c.b16 %v745, %v744
      %v749 = vpack.c.b16 %v747, %v746
      %752 = vmatprep.subr.bf16.mxu0 0
      %753 = vmatpush1.bf16.msra.mxu0 %v748
      %754 = vmatprep.subr.bf16.mxu0 0
      %755 = vmatpush1.bf16.msra.mxu0 %v749
      %756 = vmatprep.subr.bf16.mxu0 0
      %757 = vmatpush1.bf16.msra.mxu0 0
      %758 = vmatprep.subr.bf16.mxu0 0
      %759 = vmatpush1.bf16.msra.mxu0 0
      %760 = vmatprep.subr.bf16.mxu0 0
      %761 = vmatpush1.bf16.msra.mxu0 0
      %762 = vmatprep.subr.bf16.mxu0 0
      %763 = vmatpush1.bf16.msra.mxu0 0
      %764 = vmatprep.subr.bf16.mxu0 0
      %765 = vmatpush1.bf16.msra.mxu0 0
      %766 = vmatprep.subr.bf16.mxu0 0
      %767 = vmatpush1.bf16.msra.mxu0 0
      %768 = vmatprep.subr.bf16.mxu0 0
      %769 = vmatpush1.bf16.msra.mxu0 0
      %770 = vmatprep.subr.bf16.mxu0 0
      %771 = vmatpush1.bf16.msra.mxu0 0
      %772 = vmatprep.subr.bf16.mxu0 0
      %773 = vmatpush1.bf16.msra.mxu0 0
      %774 = vmatprep.subr.bf16.mxu0 0
      %775 = vmatpush1.bf16.msra.mxu0 0
      %776 = vmatprep.subr.bf16.mxu0 0
      %777 = vmatpush1.bf16.msra.mxu0 0
      %778 = vmatprep.subr.bf16.mxu0 0
      %779 = vmatpush1.bf16.msra.mxu0 0
      %780 = vmatprep.subr.bf16.mxu0 0
      %781 = vmatpush1.bf16.msra.mxu0 0
      %782 = vmatprep.subr.bf16.mxu0 0
      %783 = vmatpush1.bf16.msra.mxu0 0
      %784 = vmatprep.mubr.bf16.mxu0 0
      %785 = vmatmul.mubr.bf16.gmra.mrb[0].mxu0 %v453
      %v786 = vpop.f32.mrb[0].mxu0
      %v787 = vadd.f32 %v739, %v786
      %v788 = vpop.f32.mrb[0].mxu0
      %v789 = vpop.f32.mrb[0].mxu0
      %v790 = vpop.f32.mrb[0].mxu0
      %791 = vdwg.mxu0
      %s792 = scalar_lea.vmem %s2, 48
      %v793 = vld [vmem:[%s792] sm:$0xf]
      %v794 = vld [vmem:[%s792 + $0x4] sm:$0xf]
      %v795 = vld [vmem:[%s792 + $0x8] sm:$0xf]
      %v796 = vld [vmem:[%s792 + $0xc] sm:$0xf]
      %v797 = vld [vmem:[%s5 + $0x5] sm:$0x1]
      %v798 = vlaneseq
      %v799 = vshrl.u32 %v798, 7
      %v800 = vsub.s32 0, %v799
      %v801 = vrot.slane %v797, %v800
      %v806 = vunpack.c.l.b16 %v793
      %v807 = vunpack.c.l.b16 %v794
      %v808 = vunpack.c.l.b16 %v795
      %v809 = vunpack.c.l.b16 %v796
      %v810 = vpack.c.b16 %v807, %v806
      %v811 = vpack.c.b16 %v809, %v808
      %814 = vmatprep.subr.bf16.mxu0 0
      %815 = vmatpush1.bf16.msra.mxu0 %v810
      %816 = vmatprep.subr.bf16.mxu0 0
      %817 = vmatpush1.bf16.msra.mxu0 %v811
      %818 = vmatprep.subr.bf16.mxu0 0
      %819 = vmatpush1.bf16.msra.mxu0 0
      %820 = vmatprep.subr.bf16.mxu0 0
      %821 = vmatpush1.bf16.msra.mxu0 0
      %822 = vmatprep.subr.bf16.mxu0 0
      %823 = vmatpush1.bf16.msra.mxu0 0
      %824 = vmatprep.subr.bf16.mxu0 0
      %825 = vmatpush1.bf16.msra.mxu0 0
      %826 = vmatprep.subr.bf16.mxu0 0
      %827 = vmatpush1.bf16.msra.mxu0 0
      %828 = vmatprep.subr.bf16.mxu0 0
      %829 = vmatpush1.bf16.msra.mxu0 0
      %830 = vmatprep.subr.bf16.mxu0 0
      %831 = vmatpush1.bf16.msra.mxu0 0
      %832 = vmatprep.subr.bf16.mxu0 0
      %833 = vmatpush1.bf16.msra.mxu0 0
      %834 = vmatprep.subr.bf16.mxu0 0
      %835 = vmatpush1.bf16.msra.mxu0 0
      %836 = vmatprep.subr.bf16.mxu0 0
      %837 = vmatpush1.bf16.msra.mxu0 0
      %838 = vmatprep.subr.bf16.mxu0 0
      %839 = vmatpush1.bf16.msra.mxu0 0
      %840 = vmatprep.subr.bf16.mxu0 0
      %841 = vmatpush1.bf16.msra.mxu0 0
      %842 = vmatprep.subr.bf16.mxu0 0
      %843 = vmatpush1.bf16.msra.mxu0 0
      %844 = vmatprep.subr.bf16.mxu0 0
      %845 = vmatpush1.bf16.msra.mxu0 0
      %846 = vmatprep.mubr.bf16.mxu0 0
      %847 = vmatmul.mubr.bf16.gmra.mrb[0].mxu0 %v453
      %v848 = vpop.f32.mrb[0].mxu0
      %v849 = vadd.f32 %v801, %v848
      %v850 = vpop.f32.mrb[0].mxu0
      %v851 = vpop.f32.mrb[0].mxu0
      %v852 = vpop.f32.mrb[0].mxu0
      %853 = vdwg.mxu0
      %s854 = scalar_lea.vmem %s2, 80
      %v855 = vld [vmem:[%s854] sm:$0xf]
      %v856 = vld [vmem:[%s854 + $0x4] sm:$0xf]
      %v857 = vld [vmem:[%s854 + $0x8] sm:$0xf]
      %v858 = vld [vmem:[%s854 + $0xc] sm:$0xf]
      %v859 = vld [vmem:[%s5 + $0x7] sm:$0x1]
      %v860 = vlaneseq
      %v861 = vshrl.u32 %v860, 7
      %v862 = vsub.s32 0, %v861
      %v863 = vrot.slane %v859, %v862
      %v868 = vunpack.c.l.b16 %v855
      %v869 = vunpack.c.l.b16 %v856
      %v870 = vunpack.c.l.b16 %v857
      %v871 = vunpack.c.l.b16 %v858
      %v872 = vpack.c.b16 %v869, %v868
      %v873 = vpack.c.b16 %v871, %v870
      %876 = vmatprep.subr.bf16.mxu0 0
      %877 = vmatpush1.bf16.msra.mxu0 %v872
      %878 = vmatprep.subr.bf16.mxu0 0
      %879 = vmatpush1.bf16.msra.mxu0 %v873
      %880 = vmatprep.subr.bf16.mxu0 0
      %881 = vmatpush1.bf16.msra.mxu0 0
      %882 = vmatprep.subr.bf16.mxu0 0
      %883 = vmatpush1.bf16.msra.mxu0 0
      %884 = vmatprep.subr.bf16.mxu0 0
      %885 = vmatpush1.bf16.msra.mxu0 0
      %886 = vmatprep.subr.bf16.mxu0 0
      %887 = vmatpush1.bf16.msra.mxu0 0
      %888 = vmatprep.subr.bf16.mxu0 0
      %889 = vmatpush1.bf16.msra.mxu0 0
      %890 = vmatprep.subr.bf16.mxu0 0
      %891 = vmatpush1.bf16.msra.mxu0 0
      %892 = vmatprep.subr.bf16.mxu0 0
      %893 = vmatpush1.bf16.msra.mxu0 0
      %894 = vmatprep.subr.bf16.mxu0 0
      %895 = vmatpush1.bf16.msra.mxu0 0
      %896 = vmatprep.subr.bf16.mxu0 0
      %897 = vmatpush1.bf16.msra.mxu0 0
      %898 = vmatprep.subr.bf16.mxu0 0
      %899 = vmatpush1.bf16.msra.mxu0 0
      %900 = vmatprep.subr.bf16.mxu0 0
      %901 = vmatpush1.bf16.msra.mxu0 0
      %902 = vmatprep.subr.bf16.mxu0 0
      %903 = vmatpush1.bf16.msra.mxu0 0
      %904 = vmatprep.subr.bf16.mxu0 0
      %905 = vmatpush1.bf16.msra.mxu0 0
      %906 = vmatprep.subr.bf16.mxu0 0
      %907 = vmatpush1.bf16.msra.mxu0 0
      %908 = vmatprep.mubr.bf16.mxu0 0
      %909 = vmatmul.mubr.bf16.gmra.mrb[0].mxu0 %v453
      %v910 = vpop.f32.mrb[0].mxu0
      %v911 = vadd.f32 %v863, %v910
      %v912 = vpop.f32.mrb[0].mxu0
      %v913 = vpop.f32.mrb[0].mxu0
      %v914 = vpop.f32.mrb[0].mxu0
      %915 = vdwg.mxu0
      %v916 = vpack.c.bf16 %v787, %v787
      %v917 = vpack.c.bf16 %v849, %v849
      %v918 = vpack.c.bf16 %v911, %v911
      %v920 = vsel %vm622, %v916, 0
      %v923 = vsel %vm622, %v917, 0
      %925 = vmatprep.subr.bf16.mxu0 0
      %926 = vmatpush1.bf16.xpose.msra.mxu0 %v923
      %927 = vmatprep.subr.bf16.mxu0 0
      %928 = vmatpush1.bf16.xpose.msra.mxu0 0
      %929 = vmatprep.subr.bf16.mxu0 0
      %930 = vmatpush1.bf16.xpose.msra.mxu0 0
      %931 = vmatprep.subr.bf16.mxu0 0
      %932 = vmatpush1.bf16.xpose.msra.mxu0 0
      %933 = vmatprep.subr.bf16.mxu0 0
      %934 = vmatpush1.bf16.xpose.msra.mxu0 0
      %935 = vmatprep.subr.bf16.mxu0 0
      %936 = vmatpush1.bf16.xpose.msra.mxu0 0
      %937 = vmatprep.subr.bf16.mxu0 0
      %938 = vmatpush1.bf16.xpose.msra.mxu0 0
      %939 = vmatprep.subr.bf16.mxu0 0
      %940 = vmatpush1.bf16.xpose.msra.mxu0 0
      %941 = vmatprep.subr.bf16.mxu0 0
      %942 = vmatpush1.bf16.xpose.msra.mxu0 0
      %943 = vmatprep.subr.bf16.mxu0 0
      %944 = vmatpush1.bf16.xpose.msra.mxu0 0
      %945 = vmatprep.subr.bf16.mxu0 0
      %946 = vmatpush1.bf16.xpose.msra.mxu0 0
      %947 = vmatprep.subr.bf16.mxu0 0
      %948 = vmatpush1.bf16.xpose.msra.mxu0 0
      %949 = vmatprep.subr.bf16.mxu0 0
      %950 = vmatpush1.bf16.xpose.msra.mxu0 0
      %951 = vmatprep.subr.bf16.mxu0 0
      %952 = vmatpush1.bf16.xpose.msra.mxu0 0
      %953 = vmatprep.subr.bf16.mxu0 0
      %954 = vmatpush1.bf16.xpose.msra.mxu0 0
      %955 = vmatprep.subr.bf16.mxu0 0
      %956 = vmatpush1.bf16.xpose.msra.mxu0 0
      %957 = vmatprep.mubr.bf16.mxu0 0
      %958 = vmatmul.mubr.bf16.gmra.mrb[0].mxu0 %v920
      %v959 = vpop.f32.mrb[0].mxu0
      %v960 = vadd.f32 0.0, %v959
      %v961 = vpop.f32.mrb[0].mxu0
      %v962 = vpop.f32.mrb[0].mxu0
      %v963 = vpop.f32.mrb[0].mxu0
      %964 = vdwg.mxu0
      %v965 = vmul.f32 %v960, 0.25
      %v966 = vadd.f32 %v965, %v254
      %v967 = vmul.f32 %v966, 1.442695
      %v968 = vpow.pop %v967
      %v969 = vsel %vm673, %v968, 0.0
      %970 = vadd.xlane.f32.xlu0 %v969
      %v971 = vpop.xlane.xlu0 %970
      %v972 = vrcp.pop %v971
      %v973 = vmul.f32 %v968, %v972
      %v974 = vpack.c.bf16 %v973, %v973
      %v976 = vsel %vm673, %v974, 0
      %v979 = vsel %vm683, %v918, 0
      %981 = vmatprep.subr.bf16.mxu0 0
      %982 = vmatpush1.bf16.msra.mxu0 %v979
      %983 = vmatprep.subr.bf16.mxu0 0
      %984 = vmatpush1.bf16.msra.mxu0 0
      %985 = vmatprep.subr.bf16.mxu0 0
      %986 = vmatpush1.bf16.msra.mxu0 0
      %987 = vmatprep.subr.bf16.mxu0 0
      %988 = vmatpush1.bf16.msra.mxu0 0
      %989 = vmatprep.subr.bf16.mxu0 0
      %990 = vmatpush1.bf16.msra.mxu0 0
      %991 = vmatprep.subr.bf16.mxu0 0
      %992 = vmatpush1.bf16.msra.mxu0 0
      %993 = vmatprep.subr.bf16.mxu0 0
      %994 = vmatpush1.bf16.msra.mxu0 0
      %995 = vmatprep.subr.bf16.mxu0 0
      %996 = vmatpush1.bf16.msra.mxu0 0
      %997 = vmatprep.subr.bf16.mxu0 0
      %998 = vmatpush1.bf16.msra.mxu0 0
      %999 = vmatprep.subr.bf16.mxu0 0
      %1000 = vmatpush1.bf16.msra.mxu0 0
      %1001 = vmatprep.subr.bf16.mxu0 0
      %1002 = vmatpush1.bf16.msra.mxu0 0
      %1003 = vmatprep.subr.bf16.mxu0 0
      %1004 = vmatpush1.bf16.msra.mxu0 0
      %1005 = vmatprep.subr.bf16.mxu0 0
      %1006 = vmatpush1.bf16.msra.mxu0 0
      %1007 = vmatprep.subr.bf16.mxu0 0
      %1008 = vmatpush1.bf16.msra.mxu0 0
      %1009 = vmatprep.subr.bf16.mxu0 0
      %1010 = vmatpush1.bf16.msra.mxu0 0
      %1011 = vmatprep.subr.bf16.mxu0 0
      %1012 = vmatpush1.bf16.msra.mxu0 0
      %1013 = vmatprep.mubr.bf16.mxu0 0
      %1014 = vmatmul.mubr.bf16.gmra.mrb[0].mxu0 %v976
      %v1015 = vpop.f32.mrb[0].mxu0
      %v1016 = vadd.f32 0.0, %v1015
      %v1017 = vpop.f32.mrb[0].mxu0
      %v1018 = vpop.f32.mrb[0].mxu0
      %v1019 = vpop.f32.mrb[0].mxu0
      %1020 = vdwg.mxu0
      %v1021 = vld [vmem:[%s3 + $0x68] sm:$0xf]
      %v1022 = vld [vmem:[%s3 + $0x6c] sm:$0xf]
      %v1023 = vpack.c.bf16 %v1016, %v1016
      %v1026 = vunpack.c.l.b16 %v1021
      %v1027 = vunpack.c.l.b16 %v1022
      %v1028 = vpack.c.b16 %v1027, %v1026
      %v1031 = vsel %vm622, %v1023, 0
      %1033 = vmatprep.subr.bf16.mxu0 0
      %1034 = vmatpush1.bf16.msra.mxu0 %v1028
      %1035 = vmatprep.subr.bf16.mxu0 0
      %1036 = vmatpush1.bf16.msra.mxu0 0
      %1037 = vmatprep.subr.bf16.mxu0 0
      %1038 = vmatpush1.bf16.msra.mxu0 0
      %1039 = vmatprep.subr.bf16.mxu0 0
      %1040 = vmatpush1.bf16.msra.mxu0 0
      %1041 = vmatprep.subr.bf16.mxu0 0
      %1042 = vmatpush1.bf16.msra.mxu0 0
      %1043 = vmatprep.subr.bf16.mxu0 0
      %1044 = vmatpush1.bf16.msra.mxu0 0
      %1045 = vmatprep.subr.bf16.mxu0 0
      %1046 = vmatpush1.bf16.msra.mxu0 0
      %1047 = vmatprep.subr.bf16.mxu0 0
      %1048 = vmatpush1.bf16.msra.mxu0 0
      %1049 = vmatprep.subr.bf16.mxu0 0
      %1050 = vmatpush1.bf16.msra.mxu0 0
      %1051 = vmatprep.subr.bf16.mxu0 0
      %1052 = vmatpush1.bf16.msra.mxu0 0
      %1053 = vmatprep.subr.bf16.mxu0 0
      %1054 = vmatpush1.bf16.msra.mxu0 0
      %1055 = vmatprep.subr.bf16.mxu0 0
      %1056 = vmatpush1.bf16.msra.mxu0 0
      %1057 = vmatprep.subr.bf16.mxu0 0
      %1058 = vmatpush1.bf16.msra.mxu0 0
      %1059 = vmatprep.subr.bf16.mxu0 0
      %1060 = vmatpush1.bf16.msra.mxu0 0
      %1061 = vmatprep.subr.bf16.mxu0 0
      %1062 = vmatpush1.bf16.msra.mxu0 0
      %1063 = vmatprep.subr.bf16.mxu0 0
      %1064 = vmatpush1.bf16.msra.mxu0 0
      %1065 = vmatprep.mubr.bf16.mxu0 0
      %1066 = vmatmul.mubr.bf16.gmra.mrb[0].mxu0 %v1031
      %v1067 = vpop.f32.mrb[0].mxu0
      %v1068 = vadd.f32 0.0, %v1067
      %v1069 = vpop.f32.mrb[0].mxu0
      %v1070 = vpop.f32.mrb[0].mxu0
      %v1071 = vpop.f32.mrb[0].mxu0
      %1072 = vdwg.mxu0
      %v1075 = vunpack.c.l.b16 %v727
      %v1076 = vunpack.c.l.b16 %v728
      %v1077 = vpack.c.b16 %v1076, %v1075
      %v1080 = vsel %vm622, %v729, 0
      %1082 = vmatprep.subr.bf16.mxu0 0
      %1083 = vmatpush1.bf16.msra.mxu0 %v1077
      %1084 = vmatprep.subr.bf16.mxu0 0
      %1085 = vmatpush1.bf16.msra.mxu0 0
      %1086 = vmatprep.subr.bf16.mxu0 0
      %1087 = vmatpush1.bf16.msra.mxu0 0
      %1088 = vmatprep.subr.bf16.mxu0 0
      %1089 = vmatpush1.bf16.msra.mxu0 0
      %1090 = vmatprep.subr.bf16.mxu0 0
      %1091 = vmatpush1.bf16.msra.mxu0 0
      %1092 = vmatprep.subr.bf16.mxu0 0
      %1093 = vmatpush1.bf16.msra.mxu0 0
      %1094 = vmatprep.subr.bf16.mxu0 0
      %1095 = vmatpush1.bf16.msra.mxu0 0
      %1096 = vmatprep.subr.bf16.mxu0 0
      %1097 = vmatpush1.bf16.msra.mxu0 0
      %1098 = vmatprep.subr.bf16.mxu0 0
      %1099 = vmatpush1.bf16.msra.mxu0 0
      %1100 = vmatprep.subr.bf16.mxu0 0
      %1101 = vmatpush1.bf16.msra.mxu0 0
      %1102 = vmatprep.subr.bf16.mxu0 0
      %1103 = vmatpush1.bf16.msra.mxu0 0
      %1104 = vmatprep.subr.bf16.mxu0 0
      %1105 = vmatpush1.bf16.msra.mxu0 0
      %1106 = vmatprep.subr.bf16.mxu0 0
      %1107 = vmatpush1.bf16.msra.mxu0 0
      %1108 = vmatprep.subr.bf16.mxu0 0
      %1109 = vmatpush1.bf16.msra.mxu0 0
      %1110 = vmatprep.subr.bf16.mxu0 0
      %1111 = vmatpush1.bf16.msra.mxu0 0
      %1112 = vmatprep.subr.bf16.mxu0 0
      %1113 = vmatpush1.bf16.msra.mxu0 0
      %1114 = vmatprep.mubr.bf16.mxu0 0
      %1115 = vmatmul.mubr.bf16.gmra.mrb[0].mxu0 %v1080
      %v1116 = vpop.f32.mrb[0].mxu0
      %v1117 = vadd.f32 %v1068, %v1116
      %v1118 = vpop.f32.mrb[0].mxu0
      %v1119 = vpop.f32.mrb[0].mxu0
      %v1120 = vpop.f32.mrb[0].mxu0
      %1121 = vdwg.mxu0
      %v1122 = vadd.f32 %v398, %v1117
      %v1123 = vld [vmem:[%s5 + $0x8] sm:$0x1]
      %v1124 = vlaneseq
      %v1125 = vshrl.u32 %v1124, 7
      %v1126 = vsub.s32 0, %v1125
      %v1127 = vrot.slane %v1123, %v1126
      %v1128 = vadd.f32 %v1122, %v1127
      %v1129 = vld [vmem:[%s5 + $0x9] sm:$0x1]
      %v1130 = vld [vmem:[%s5 + $0xa] sm:$0x1]
      %v1131 = vsel %vm405, %v1128, 0.0
      %1132 = vadd.xlane.f32.xlu0 %v1131
      %v1133 = vpop.xlane.xlu0 %1132
      %v1134 = vmul.f32 %v1133, %v409
      %v1135 = vsub.f32 %v1128, %v1134
      %v1136 = vmul.f32 %v1135, %v1135
      %v1137 = vsel %vm405, %v1136, 0.0
      %1138 = vadd.xlane.f32.xlu0 %v1137
      %v1139 = vpop.xlane.xlu0 %1138
      %v1140 = vmul.f32 %v1139, %v409
      %v1141 = vadd.f32 %v1140, 1e-12
      %v1142 = vrsqrt.pop %v1141
      %v1143 = vmul.f32 %v1135, %v1142
      %v1144 = vlaneseq
      %v1145 = vshrl.u32 %v1144, 7
      %v1146 = vsub.s32 0, %v1145
      %v1147 = vrot.slane %v1129, %v1146
      %v1148 = vmul.f32 %v1143, %v1147
      %v1149 = vlaneseq
      %v1150 = vshrl.u32 %v1149, 7
      %v1151 = vsub.s32 0, %v1150
      %v1152 = vrot.slane %v1130, %v1151
      %v1153 = vadd.f32 %v1148, %v1152
      %v1154 = vld [vmem:[%s4] sm:$0xf]
      %v1155 = vld [vmem:[%s4 + $0x4] sm:$0xf]
      %v1156 = vld [vmem:[%s4 + $0x8] sm:$0xf]
      %v1157 = vld [vmem:[%s4 + $0xc] sm:$0xf]
      %v1158 = vpack.c.bf16 %v1153, %v1153
      %v1159 = vld [vmem:[%s5 + $0xb] sm:$0x1]
      %v1160 = vlaneseq
      %v1161 = vshrl.u32 %v1160, 7
      %v1162 = vsub.s32 0, %v1161
      %v1163 = vrot.slane %v1159, %v1162
      %v1168 = vunpack.c.l.b16 %v1154
      %v1169 = vunpack.c.l.b16 %v1155
      %v1170 = vunpack.c.l.b16 %v1156
      %v1171 = vunpack.c.l.b16 %v1157
      %v1172 = vpack.c.b16 %v1169, %v1168
      %v1173 = vpack.c.b16 %v1171, %v1170
      %v1177 = vsel %vm405, %v1158, 0
      %1179 = vmatprep.subr.bf16.mxu0 0
      %1180 = vmatpush1.bf16.msra.mxu0 %v1172
      %1181 = vmatprep.subr.bf16.mxu0 0
      %1182 = vmatpush1.bf16.msra.mxu0 %v1173
      %1183 = vmatprep.subr.bf16.mxu0 0
      %1184 = vmatpush1.bf16.msra.mxu0 0
      %1185 = vmatprep.subr.bf16.mxu0 0
      %1186 = vmatpush1.bf16.msra.mxu0 0
      %1187 = vmatprep.subr.bf16.mxu0 0
      %1188 = vmatpush1.bf16.msra.mxu0 0
      %1189 = vmatprep.subr.bf16.mxu0 0
      %1190 = vmatpush1.bf16.msra.mxu0 0
      %1191 = vmatprep.subr.bf16.mxu0 0
      %1192 = vmatpush1.bf16.msra.mxu0 0
      %1193 = vmatprep.subr.bf16.mxu0 0
      %1194 = vmatpush1.bf16.msra.mxu0 0
      %1195 = vmatprep.subr.bf16.mxu0 0
      %1196 = vmatpush1.bf16.msra.mxu0 0
      %1197 = vmatprep.subr.bf16.mxu0 0
      %1198 = vmatpush1.bf16.msra.mxu0 0
      %1199 = vmatprep.subr.bf16.mxu0 0
      %1200 = vmatpush1.bf16.msra.mxu0 0
      %1201 = vmatprep.subr.bf16.mxu0 0
      %1202 = vmatpush1.bf16.msra.mxu0 0
      %1203 = vmatprep.subr.bf16.mxu0 0
      %1204 = vmatpush1.bf16.msra.mxu0 0
      %1205 = vmatprep.subr.bf16.mxu0 0
      %1206 = vmatpush1.bf16.msra.mxu0 0
      %1207 = vmatprep.subr.bf16.mxu0 0
      %1208 = vmatpush1.bf16.msra.mxu0 0
      %1209 = vmatprep.subr.bf16.mxu0 0
      %1210 = vmatpush1.bf16.msra.mxu0 0
      %1211 = vmatprep.mubr.bf16.mxu0 0
      %1212 = vmatmul.mubr.bf16.gmra.mrb[0].mxu0 %v1177
      %v1213 = vpop.f32.mrb[0].mxu0
      %v1214 = vadd.f32 %v1163, %v1213
      %v1215 = vpop.f32.mrb[0].mxu0
      %v1216 = vpop.f32.mrb[0].mxu0
      %v1217 = vpop.f32.mrb[0].mxu0
      %1218 = vdwg.mxu0
      %v1219 = vmul.f32 %v1214, %v1214
      %v1220 = vmul.f32 %v1214, %v1219
      %v1221 = vmul.f32 %v1220, 0.044715
      %v1222 = vadd.f32 %v1214, %v1221
      %v1223 = vmul.f32 %v1222, 0.7978846
      %v1224 = vtanh.pop %v1223
      %v1225 = vadd.f32 %v1224, 1.0
      %v1226 = vmul.f32 %v1225, 0.5
      %v1227 = vmul.f32 %v1214, %v1226
      %v1228 = vld [vmem:[%s3 + $0x70] sm:$0xf]
      %v1229 = vld [vmem:[%s3 + $0x74] sm:$0xf]
      %v1230 = vld [vmem:[%s3 + $0x78] sm:$0xf]
      %v1231 = vld [vmem:[%s3 + $0x7c] sm:$0xf]
      %v1232 = vld [vmem:[%s3 + $0x80] sm:$0xf]
      %v1233 = vld [vmem:[%s3 + $0x84] sm:$0xf]
      %v1234 = vld [vmem:[%s3 + $0x88] sm:$0xf]
      %v1235 = vld [vmem:[%s3 + $0x8c] sm:$0xf]
      %v1236 = vld [vmem:[%s3 + $0x90] sm:$0xf]
      %v1237 = vld [vmem:[%s3 + $0x94] sm:$0xf]
      %v1238 = vld [vmem:[%s3 + $0x98] sm:$0xf]
      %v1239 = vld [vmem:[%s3 + $0x9c] sm:$0xf]
      %v1240 = vld [vmem:[%s3 + $0xa0] sm:$0xf]
      %v1241 = vld [vmem:[%s3 + $0xa4] sm:$0xf]
      %v1242 = vld [vmem:[%s3 + $0xa8] sm:$0xf]
      %v1243 = vld [vmem:[%s3 + $0xac] sm:$0xf]
      %v1244 = vpack.c.bf16 %v1227, %v1227
      %v1261 = vunpack.c.l.b16 %v1228
      %v1262 = vunpack.c.l.b16 %v1229
      %v1263 = vunpack.c.l.b16 %v1230
      %v1264 = vunpack.c.l.b16 %v1231
      %v1265 = vunpack.c.l.b16 %v1232
      %v1266 = vunpack.c.l.b16 %v1233
      %v1267 = vunpack.c.l.b16 %v1234
      %v1268 = vunpack.c.l.b16 %v1235
      %v1269 = vunpack.c.l.b16 %v1236
      %v1270 = vunpack.c.l.b16 %v1237
      %v1271 = vunpack.c.l.b16 %v1238
      %v1272 = vunpack.c.l.b16 %v1239
      %v1273 = vunpack.c.l.b16 %v1240
      %v1274 = vunpack.c.l.b16 %v1241
      %v1275 = vunpack.c.l.b16 %v1242
      %v1276 = vunpack.c.l.b16 %v1243
      %v1277 = vpack.c.b16 %v1262, %v1261
      %v1278 = vpack.c.b16 %v1264, %v1263
      %v1279 = vpack.c.b16 %v1266, %v1265
      %v1280 = vpack.c.b16 %v1268, %v1267
      %v1281 = vpack.c.b16 %v1270, %v1269
      %v1282 = vpack.c.b16 %v1272, %v1271
      %v1283 = vpack.c.b16 %v1274, %v1273
      %v1284 = vpack.c.b16 %v1276, %v1275
      %1293 = vmatprep.subr.bf16.mxu0 0
      %1294 = vmatpush1.bf16.msra.mxu0 %v1277
      %1295 = vmatprep.subr.bf16.mxu0 0
      %1296 = vmatpush1.bf16.msra.mxu0 %v1278
      %1297 = vmatprep.subr.bf16.mxu0 0
      %1298 = vmatpush1.bf16.msra.mxu0 %v1279
      %1299 = vmatprep.subr.bf16.mxu0 0
      %1300 = vmatpush1.bf16.msra.mxu0 %v1280
      %1301 = vmatprep.subr.bf16.mxu0 0
      %1302 = vmatpush1.bf16.msra.mxu0 %v1281
      %1303 = vmatprep.subr.bf16.mxu0 0
      %1304 = vmatpush1.bf16.msra.mxu0 %v1282
      %1305 = vmatprep.subr.bf16.mxu0 0
      %1306 = vmatpush1.bf16.msra.mxu0 %v1283
      %1307 = vmatprep.subr.bf16.mxu0 0
      %1308 = vmatpush1.bf16.msra.mxu0 %v1284
      %1309 = vmatprep.subr.bf16.mxu0 0
      %1310 = vmatpush1.bf16.msra.mxu0 0
      %1311 = vmatprep.subr.bf16.mxu0 0
      %1312 = vmatpush1.bf16.msra.mxu0 0
      %1313 = vmatprep.subr.bf16.mxu0 0
      %1314 = vmatpush1.bf16.msra.mxu0 0
      %1315 = vmatprep.subr.bf16.mxu0 0
      %1316 = vmatpush1.bf16.msra.mxu0 0
      %1317 = vmatprep.subr.bf16.mxu0 0
      %1318 = vmatpush1.bf16.msra.mxu0 0
      %1319 = vmatprep.subr.bf16.mxu0 0
      %1320 = vmatpush1.bf16.msra.mxu0 0
      %1321 = vmatprep.subr.bf16.mxu0 0
      %1322 = vmatpush1.bf16.msra.mxu0 0
      %1323 = vmatprep.subr.bf16.mxu0 0
      %1324 = vmatpush1.bf16.msra.mxu0 0
      %1325 = vmatprep.mubr.bf16.mxu0 0
      %1326 = vmatmul.mubr.bf16.gmra.mrb[0].mxu0 %v1244
      %v1327 = vpop.f32.mrb[0].mxu0
      %v1328 = vadd.f32 0.0, %v1327
      %v1329 = vpop.f32.mrb[0].mxu0
      %v1330 = vpop.f32.mrb[0].mxu0
      %v1331 = vpop.f32.mrb[0].mxu0
      %1332 = vdwg.mxu0
      %v1333 = vadd.f32 %v1128, %v1328
      %v1334 = vld [vmem:[%s5 + $0xc] sm:$0x1]
      %v1335 = vlaneseq
      %v1336 = vshrl.u32 %v1335, 7
      %v1337 = vsub.s32 0, %v1336
      %v1338 = vrot.slane %v1334, %v1337
      %v1339 = vadd.f32 %v1333, %v1338
      %v1340 = vld [vmem:[%s5 + $0xd] sm:$0x1]
      %v1341 = vld [vmem:[%s5 + $0xe] sm:$0x1]
      %v1342 = vsel %vm405, %v1339, 0.0
      %1343 = vadd.xlane.f32.xlu0 %v1342
      %v1344 = vpop.xlane.xlu0 %1343
      %v1345 = vmul.f32 %v1344, %v409
      %v1346 = vsub.f32 %v1339, %v1345
      %v1347 = vmul.f32 %v1346, %v1346
      %v1348 = vsel %vm405, %v1347, 0.0
      %1349 = vadd.xlane.f32.xlu0 %v1348
      %v1350 = vpop.xlane.xlu0 %1349
      %v1351 = vmul.f32 %v1350, %v409
      %v1352 = vadd.f32 %v1351, 1e-12
      %v1353 = vrsqrt.pop %v1352
      %v1354 = vmul.f32 %v1346, %v1353
      %v1355 = vlaneseq
      %v1356 = vshrl.u32 %v1355, 7
      %v1357 = vsub.s32 0, %v1356
      %v1358 = vrot.slane %v1340, %v1357
      %v1359 = vmul.f32 %v1354, %v1358
      %v1360 = vlaneseq
      %v1361 = vshrl.u32 %v1360, 7
      %v1362 = vsub.s32 0, %v1361
      %v1363 = vrot.slane %v1341, %v1362
      %v1364 = vadd.f32 %v1359, %v1363
      %s1365 = scalar_lea.vmem %s2, 96
      %v1366 = vld [vmem:[%s1365] sm:$0xf]
      %v1367 = vld [vmem:[%s1365 + $0x4] sm:$0xf]
      %v1368 = vld [vmem:[%s1365 + $0x8] sm:$0xf]
      %v1369 = vld [vmem:[%s1365 + $0xc] sm:$0xf]
      %v1370 = vpack.c.bf16 %v1364, %v1364
      %v1371 = vld [vmem:[%s5 + $0xf] sm:$0x1]
      %v1372 = vlaneseq
      %v1373 = vshrl.u32 %v1372, 7
      %v1374 = vsub.s32 0, %v1373
      %v1375 = vrot.slane %v1371, %v1374
      %v1380 = vunpack.c.l.b16 %v1366
      %v1381 = vunpack.c.l.b16 %v1367
      %v1382 = vunpack.c.l.b16 %v1368
      %v1383 = vunpack.c.l.b16 %v1369
      %v1384 = vpack.c.b16 %v1381, %v1380
      %v1385 = vpack.c.b16 %v1383, %v1382
      %v1389 = vsel %vm405, %v1370, 0
      %1391 = vmatprep.subr.bf16.mxu0 0
      %1392 = vmatpush1.bf16.msra.mxu0 %v1384
      %1393 = vmatprep.subr.bf16.mxu0 0
      %1394 = vmatpush1.bf16.msra.mxu0 %v1385
      %1395 = vmatprep.subr.bf16.mxu0 0
      %1396 = vmatpush1.bf16.msra.mxu0 0
      %1397 = vmatprep.subr.bf16.mxu0 0
      %1398 = vmatpush1.bf16.msra.mxu0 0
      %1399 = vmatprep.subr.bf16.mxu0 0
      %1400 = vmatpush1.bf16.msra.mxu0 0
      %1401 = vmatprep.subr.bf16.mxu0 0
      %1402 = vmatpush1.bf16.msra.mxu0 0
      %1403 = vmatprep.subr.bf16.mxu0 0
      %1404 = vmatpush1.bf16.msra.mxu0 0
      %1405 = vmatprep.subr.bf16.mxu0 0
      %1406 = vmatpush1.bf16.msra.mxu0 0
      %1407 = vmatprep.subr.bf16.mxu0 0
      %1408 = vmatpush1.bf16.msra.mxu0 0
      %1409 = vmatprep.subr.bf16.mxu0 0
      %1410 = vmatpush1.bf16.msra.mxu0 0
      %1411 = vmatprep.subr.bf16.mxu0 0
      %1412 = vmatpush1.bf16.msra.mxu0 0
      %1413 = vmatprep.subr.bf16.mxu0 0
      %1414 = vmatpush1.bf16.msra.mxu0 0
      %1415 = vmatprep.subr.bf16.mxu0 0
      %1416 = vmatpush1.bf16.msra.mxu0 0
      %1417 = vmatprep.subr.bf16.mxu0 0
      %1418 = vmatpush1.bf16.msra.mxu0 0
      %1419 = vmatprep.subr.bf16.mxu0 0
      %1420 = vmatpush1.bf16.msra.mxu0 0
      %1421 = vmatprep.subr.bf16.mxu0 0
      %1422 = vmatpush1.bf16.msra.mxu0 0
      %1423 = vmatprep.mubr.bf16.mxu0 0
      %1424 = vmatmul.mubr.bf16.gmra.mrb[0].mxu0 %v1389
      %v1425 = vpop.f32.mrb[0].mxu0
      %v1426 = vadd.f32 %v1375, %v1425
      %v1427 = vpop.f32.mrb[0].mxu0
      %v1428 = vpop.f32.mrb[0].mxu0
      %v1429 = vpop.f32.mrb[0].mxu0
      %1430 = vdwg.mxu0
      %s1431 = scalar_lea.vmem %s2, 128
      %v1432 = vld [vmem:[%s1431] sm:$0xf]
      %v1433 = vld [vmem:[%s1431 + $0x4] sm:$0xf]
      %v1434 = vld [vmem:[%s1431 + $0x8] sm:$0xf]
      %v1435 = vld [vmem:[%s1431 + $0xc] sm:$0xf]
      %v1436 = vld [vmem:[%s5 + $0x11] sm:$0x1]
      %v1437 = vlaneseq
      %v1438 = vshrl.u32 %v1437, 7
      %v1439 = vsub.s32 0, %v1438
      %v1440 = vrot.slane %v1436, %v1439
      %v1445 = vunpack.c.l.b16 %v1432
      %v1446 = vunpack.c.l.b16 %v1433
      %v1447 = vunpack.c.l.b16 %v1434
      %v1448 = vunpack.c.l.b16 %v1435
      %v1449 = vpack.c.b16 %v1446, %v1445
      %v1450 = vpack.c.b16 %v1448, %v1447
      %1453 = vmatprep.subr.bf16.mxu0 0
      %1454 = vmatpush1.bf16.msra.mxu0 %v1449
      %1455 = vmatprep.subr.bf16.mxu0 0
      %1456 = vmatpush1.bf16.msra.mxu0 %v1450
      %1457 = vmatprep.subr.bf16.mxu0 0
      %1458 = vmatpush1.bf16.msra.mxu0 0
      %1459 = vmatprep.subr.bf16.mxu0 0
      %1460 = vmatpush1.bf16.msra.mxu0 0
      %1461 = vmatprep.subr.bf16.mxu0 0
      %1462 = vmatpush1.bf16.msra.mxu0 0
      %1463 = vmatprep.subr.bf16.mxu0 0
      %1464 = vmatpush1.bf16.msra.mxu0 0
      %1465 = vmatprep.subr.bf16.mxu0 0
      %1466 = vmatpush1.bf16.msra.mxu0 0
      %1467 = vmatprep.subr.bf16.mxu0 0
      %1468 = vmatpush1.bf16.msra.mxu0 0
      %1469 = vmatprep.subr.bf16.mxu0 0
      %1470 = vmatpush1.bf16.msra.mxu0 0
      %1471 = vmatprep.subr.bf16.mxu0 0
      %1472 = vmatpush1.bf16.msra.mxu0 0
      %1473 = vmatprep.subr.bf16.mxu0 0
      %1474 = vmatpush1.bf16.msra.mxu0 0
      %1475 = vmatprep.subr.bf16.mxu0 0
      %1476 = vmatpush1.bf16.msra.mxu0 0
      %1477 = vmatprep.subr.bf16.mxu0 0
      %1478 = vmatpush1.bf16.msra.mxu0 0
      %1479 = vmatprep.subr.bf16.mxu0 0
      %1480 = vmatpush1.bf16.msra.mxu0 0
      %1481 = vmatprep.subr.bf16.mxu0 0
      %1482 = vmatpush1.bf16.msra.mxu0 0
      %1483 = vmatprep.subr.bf16.mxu0 0
      %1484 = vmatpush1.bf16.msra.mxu0 0
      %1485 = vmatprep.mubr.bf16.mxu0 0
      %1486 = vmatmul.mubr.bf16.gmra.mrb[0].mxu0 %v1389
      %v1487 = vpop.f32.mrb[0].mxu0
      %v1488 = vadd.f32 %v1440, %v1487
      %v1489 = vpop.f32.mrb[0].mxu0
      %v1490 = vpop.f32.mrb[0].mxu0
      %v1491 = vpop.f32.mrb[0].mxu0
      %1492 = vdwg.mxu0
      %s1493 = scalar_lea.vmem %s2, 160
      %v1494 = vld [vmem:[%s1493] sm:$0xf]
      %v1495 = vld [vmem:[%s1493 + $0x4] sm:$0xf]
      %v1496 = vld [vmem:[%s1493 + $0x8] sm:$0xf]
      %v1497 = vld [vmem:[%s1493 + $0xc] sm:$0xf]
      %v1498 = vld [vmem:[%s5 + $0x13] sm:$0x1]
      %v1499 = vlaneseq
      %v1500 = vshrl.u32 %v1499, 7
      %v1501 = vsub.s32 0, %v1500
      %v1502 = vrot.slane %v1498, %v1501
      %v1507 = vunpack.c.l.b16 %v1494
      %v1508 = vunpack.c.l.b16 %v1495
      %v1509 = vunpack.c.l.b16 %v1496
      %v1510 = vunpack.c.l.b16 %v1497
      %v1511 = vpack.c.b16 %v1508, %v1507
      %v1512 = vpack.c.b16 %v1510, %v1509
      %1515 = vmatprep.subr.bf16.mxu0 0
      %1516 = vmatpush1.bf16.msra.mxu0 %v1511
      %1517 = vmatprep.subr.bf16.mxu0 0
      %1518 = vmatpush1.bf16.msra.mxu0 %v1512
      %1519 = vmatprep.subr.bf16.mxu0 0
      %1520 = vmatpush1.bf16.msra.mxu0 0
      %1521 = vmatprep.subr.bf16.mxu0 0
      %1522 = vmatpush1.bf16.msra.mxu0 0
      %1523 = vmatprep.subr.bf16.mxu0 0
      %1524 = vmatpush1.bf16.msra.mxu0 0
      %1525 = vmatprep.subr.bf16.mxu0 0
      %1526 = vmatpush1.bf16.msra.mxu0 0
      %1527 = vmatprep.subr.bf16.mxu0 0
      %1528 = vmatpush1.bf16.msra.mxu0 0
      %1529 = vmatprep.subr.bf16.mxu0 0
      %1530 = vmatpush1.bf16.msra.mxu0 0
      %1531 = vmatprep.subr.bf16.mxu0 0
      %1532 = vmatpush1.bf16.msra.mxu0 0
      %1533 = vmatprep.subr.bf16.mxu0 0
      %1534 = vmatpush1.bf16.msra.mxu0 0
      %1535 = vmatprep.subr.bf16.mxu0 0
      %1536 = vmatpush1.bf16.msra.mxu0 0
      %1537 = vmatprep.subr.bf16.mxu0 0
      %1538 = vmatpush1.bf16.msra.mxu0 0
      %1539 = vmatprep.subr.bf16.mxu0 0
      %1540 = vmatpush1.bf16.msra.mxu0 0
      %1541 = vmatprep.subr.bf16.mxu0 0
      %1542 = vmatpush1.bf16.msra.mxu0 0
      %1543 = vmatprep.subr.bf16.mxu0 0
      %1544 = vmatpush1.bf16.msra.mxu0 0
      %1545 = vmatprep.subr.bf16.mxu0 0
      %1546 = vmatpush1.bf16.msra.mxu0 0
      %1547 = vmatprep.mubr.bf16.mxu0 0
      %1548 = vmatmul.mubr.bf16.gmra.mrb[0].mxu0 %v1389
      %v1549 = vpop.f32.mrb[0].mxu0
      %v1550 = vadd.f32 %v1502, %v1549
      %v1551 = vpop.f32.mrb[0].mxu0
      %v1552 = vpop.f32.mrb[0].mxu0
      %v1553 = vpop.f32.mrb[0].mxu0
      %1554 = vdwg.mxu0
      %v1555 = vpack.c.bf16 %v1426, %v1426
      %v1556 = vpack.c.bf16 %v1488, %v1488
      %v1557 = vpack.c.bf16 %v1550, %v1550
      %v1559 = vsel %vm622, %v1555, 0
      %v1562 = vsel %vm622, %v1556, 0
      %1564 = vmatprep.subr.bf16.mxu0 0
      %1565 = vmatpush1.bf16.xpose.msra.mxu0 %v1562
      %1566 = vmatprep.subr.bf16.mxu0 0
      %1567 = vmatpush1.bf16.xpose.msra.mxu0 0
      %1568 = vmatprep.subr.bf16.mxu0 0
      %1569 = vmatpush1.bf16.xpose.msra.mxu0 0
      %1570 = vmatprep.subr.bf16.mxu0 0
      %1571 = vmatpush1.bf16.xpose.msra.mxu0 0
      %1572 = vmatprep.subr.bf16.mxu0 0
      %1573 = vmatpush1.bf16.xpose.msra.mxu0 0
      %1574 = vmatprep.subr.bf16.mxu0 0
      %1575 = vmatpush1.bf16.xpose.msra.mxu0 0
      %1576 = vmatprep.subr.bf16.mxu0 0
      %1577 = vmatpush1.bf16.xpose.msra.mxu0 0
      %1578 = vmatprep.subr.bf16.mxu0 0
      %1579 = vmatpush1.bf16.xpose.msra.mxu0 0
      %1580 = vmatprep.subr.bf16.mxu0 0
      %1581 = vmatpush1.bf16.xpose.msra.mxu0 0
      %1582 = vmatprep.subr.bf16.mxu0 0
      %1583 = vmatpush1.bf16.xpose.msra.mxu0 0
      %1584 = vmatprep.subr.bf16.mxu0 0
      %1585 = vmatpush1.bf16.xpose.msra.mxu0 0
      %1586 = vmatprep.subr.bf16.mxu0 0
      %1587 = vmatpush1.bf16.xpose.msra.mxu0 0
      %1588 = vmatprep.subr.bf16.mxu0 0
      %1589 = vmatpush1.bf16.xpose.msra.mxu0 0
      %1590 = vmatprep.subr.bf16.mxu0 0
      %1591 = vmatpush1.bf16.xpose.msra.mxu0 0
      %1592 = vmatprep.subr.bf16.mxu0 0
      %1593 = vmatpush1.bf16.xpose.msra.mxu0 0
      %1594 = vmatprep.subr.bf16.mxu0 0
      %1595 = vmatpush1.bf16.xpose.msra.mxu0 0
      %1596 = vmatprep.mubr.bf16.mxu0 0
      %1597 = vmatmul.mubr.bf16.gmra.mrb[0].mxu0 %v1559
      %v1598 = vpop.f32.mrb[0].mxu0
      %v1599 = vadd.f32 0.0, %v1598
      %v1600 = vpop.f32.mrb[0].mxu0
      %v1601 = vpop.f32.mrb[0].mxu0
      %v1602 = vpop.f32.mrb[0].mxu0
      %1603 = vdwg.mxu0
      %v1604 = vmul.f32 %v1599, 0.25
      %v1605 = vadd.f32 %v1604, %v254
      %v1606 = vmul.f32 %v1605, 1.442695
      %v1607 = vpow.pop %v1606
      %v1608 = vsel %vm673, %v1607, 0.0
      %1609 = vadd.xlane.f32.xlu0 %v1608
      %v1610 = vpop.xlane.xlu0 %1609
      %v1611 = vrcp.pop %v1610
      %v1612 = vmul.f32 %v1607, %v1611
      %v1613 = vpack.c.bf16 %v1612, %v1612
      %v1615 = vsel %vm673, %v1613, 0
      %v1618 = vsel %vm683, %v1557, 0
      %1620 = vmatprep.subr.bf16.mxu0 0
      %1621 = vmatpush1.bf16.msra.mxu0 %v1618
      %1622 = vmatprep.subr.bf16.mxu0 0
      %1623 = vmatpush1.bf16.msra.mxu0 0
      %1624 = vmatprep.subr.bf16.mxu0 0
      %1625 = vmatpush1.bf16.msra.mxu0 0
      %1626 = vmatprep.subr.bf16.mxu0 0
      %1627 = vmatpush1.bf16.msra.mxu0 0
      %1628 = vmatprep.subr.bf16.mxu0 0
      %1629 = vmatpush1.bf16.msra.mxu0 0
      %1630 = vmatprep.subr.bf16.mxu0 0
      %1631 = vmatpush1.bf16.msra.mxu0 0
      %1632 = vmatprep.subr.bf16.mxu0 0
      %1633 = vmatpush1.bf16.msra.mxu0 0
      %1634 = vmatprep.subr.bf16.mxu0 0
      %1635 = vmatpush1.bf16.msra.mxu0 0
      %1636 = vmatprep.subr.bf16.mxu0 0
      %1637 = vmatpush1.bf16.msra.mxu0 0
      %1638 = vmatprep.subr.bf16.mxu0 0
      %1639 = vmatpush1.bf16.msra.mxu0 0
      %1640 = vmatprep.subr.bf16.mxu0 0
      %1641 = vmatpush1.bf16.msra.mxu0 0
      %1642 = vmatprep.subr.bf16.mxu0 0
      %1643 = vmatpush1.bf16.msra.mxu0 0
      %1644 = vmatprep.subr.bf16.mxu0 0
      %1645 = vmatpush1.bf16.msra.mxu0 0
      %1646 = vmatprep.subr.bf16.mxu0 0
      %1647 = vmatpush1.bf16.msra.mxu0 0
      %1648 = vmatprep.subr.bf16.mxu0 0
      %1649 = vmatpush1.bf16.msra.mxu0 0
      %1650 = vmatprep.subr.bf16.mxu0 0
      %1651 = vmatpush1.bf16.msra.mxu0 0
      %1652 = vmatprep.mubr.bf16.mxu0 0
      %1653 = vmatmul.mubr.bf16.gmra.mrb[0].mxu0 %v1615
      %v1654 = vpop.f32.mrb[0].mxu0
      %v1655 = vadd.f32 0.0, %v1654
      %v1656 = vpop.f32.mrb[0].mxu0
      %v1657 = vpop.f32.mrb[0].mxu0
      %v1658 = vpop.f32.mrb[0].mxu0
      %1659 = vdwg.mxu0
      %v1660 = vld [vmem:[%s3 + $0xb0] sm:$0xf]
      %v1661 = vld [vmem:[%s3 + $0xb4] sm:$0xf]
      %v1662 = vpack.c.bf16 %v1655, %v1655
      %s1663 = scalar_lea.vmem %s2, 112
      %v1664 = vld [vmem:[%s1663] sm:$0xf]
      %v1665 = vld [vmem:[%s1663 + $0x4] sm:$0xf]
      %v1666 = vld [vmem:[%s1663 + $0x8] sm:$0xf]
      %v1667 = vld [vmem:[%s1663 + $0xc] sm:$0xf]
      %v1668 = vld [vmem:[%s5 + $0x10] sm:$0x1]
      %v1669 = vlaneseq
      %v1670 = vshrl.u32 %v1669, 7
      %v1671 = vsub.s32 0, %v1670
      %v1672 = vrot.slane %v1668, %v1671
      %v1677 = vunpack.c.l.b16 %v1664
      %v1678 = vunpack.c.l.b16 %v1665
      %v1679 = vunpack.c.l.b16 %v1666
      %v1680 = vunpack.c.l.b16 %v1667
      %v1681 = vpack.c.b16 %v1678, %v1677
      %v1682 = vpack.c.b16 %v1680, %v1679
      %1685 = vmatprep.subr.bf16.mxu0 0
      %1686 = vmatpush1.bf16.msra.mxu0 %v1681
      %1687 = vmatprep.subr.bf16.mxu0 0
      %1688 = vmatpush1.bf16.msra.mxu0 %v1682
      %1689 = vmatprep.subr.bf16.mxu0 0
      %1690 = vmatpush1.bf16.msra.mxu0 0
      %1691 = vmatprep.subr.bf16.mxu0 0
      %1692 = vmatpush1.bf16.msra.mxu0 0
      %1693 = vmatprep.subr.bf16.mxu0 0
      %1694 = vmatpush1.bf16.msra.mxu0 0
      %1695 = vmatprep.subr.bf16.mxu0 0
      %1696 = vmatpush1.bf16.msra.mxu0 0
      %1697 = vmatprep.subr.bf16.mxu0 0
      %1698 = vmatpush1.bf16.msra.mxu0 0
      %1699 = vmatprep.subr.bf16.mxu0 0
      %1700 = vmatpush1.bf16.msra.mxu0 0
      %1701 = vmatprep.subr.bf16.mxu0 0
      %1702 = vmatpush1.bf16.msra.mxu0 0
      %1703 = vmatprep.subr.bf16.mxu0 0
      %1704 = vmatpush1.bf16.msra.mxu0 0
      %1705 = vmatprep.subr.bf16.mxu0 0
      %1706 = vmatpush1.bf16.msra.mxu0 0
      %1707 = vmatprep.subr.bf16.mxu0 0
      %1708 = vmatpush1.bf16.msra.mxu0 0
      %1709 = vmatprep.subr.bf16.mxu0 0
      %1710 = vmatpush1.bf16.msra.mxu0 0
      %1711 = vmatprep.subr.bf16.mxu0 0
      %1712 = vmatpush1.bf16.msra.mxu0 0
      %1713 = vmatprep.subr.bf16.mxu0 0
      %1714 = vmatpush1.bf16.msra.mxu0 0
      %1715 = vmatprep.subr.bf16.mxu0 0
      %1716 = vmatpush1.bf16.msra.mxu0 0
      %1717 = vmatprep.mubr.bf16.mxu0 0
      %1718 = vmatmul.mubr.bf16.gmra.mrb[0].mxu0 %v1389
      %v1719 = vpop.f32.mrb[0].mxu0
      %v1720 = vadd.f32 %v1672, %v1719
      %v1721 = vpop.f32.mrb[0].mxu0
      %v1722 = vpop.f32.mrb[0].mxu0
      %v1723 = vpop.f32.mrb[0].mxu0
      %1724 = vdwg.mxu0
      %s1725 = scalar_lea.vmem %s2, 144
      %v1726 = vld [vmem:[%s1725] sm:$0xf]
      %v1727 = vld [vmem:[%s1725 + $0x4] sm:$0xf]
      %v1728 = vld [vmem:[%s1725 + $0x8] sm:$0xf]
      %v1729 = vld [vmem:[%s1725 + $0xc] sm:$0xf]
      %v1730 = vld [vmem:[%s5 + $0x12] sm:$0x1]
      %v1731 = vlaneseq
      %v1732 = vshrl.u32 %v1731, 7
      %v1733 = vsub.s32 0, %v1732
      %v1734 = vrot.slane %v1730, %v1733
      %v1739 = vunpack.c.l.b16 %v1726
      %v1740 = vunpack.c.l.b16 %v1727
      %v1741 = vunpack.c.l.b16 %v1728
      %v1742 = vunpack.c.l.b16 %v1729
      %v1743 = vpack.c.b16 %v1740, %v1739
      %v1744 = vpack.c.b16 %v1742, %v1741
      %1747 = vmatprep.subr.bf16.mxu0 0
      %1748 = vmatpush1.bf16.msra.mxu0 %v1743
      %1749 = vmatprep.subr.bf16.mxu0 0
      %1750 = vmatpush1.bf16.msra.mxu0 %v1744
      %1751 = vmatprep.subr.bf16.mxu0 0
      %1752 = vmatpush1.bf16.msra.mxu0 0
      %1753 = vmatprep.subr.bf16.mxu0 0
      %1754 = vmatpush1.bf16.msra.mxu0 0
      %1755 = vmatprep.subr.bf16.mxu0 0
      %1756 = vmatpush1.bf16.msra.mxu0 0
      %1757 = vmatprep.subr.bf16.mxu0 0
      %1758 = vmatpush1.bf16.msra.mxu0 0
      %1759 = vmatprep.subr.bf16.mxu0 0
      %1760 = vmatpush1.bf16.msra.mxu0 0
      %1761 = vmatprep.subr.bf16.mxu0 0
      %1762 = vmatpush1.bf16.msra.mxu0 0
      %1763 = vmatprep.subr.bf16.mxu0 0
      %1764 = vmatpush1.bf16.msra.mxu0 0
      %1765 = vmatprep.subr.bf16.mxu0 0
      %1766 = vmatpush1.bf16.msra.mxu0 0
      %1767 = vmatprep.subr.bf16.mxu0 0
      %1768 = vmatpush1.bf16.msra.mxu0 0
      %1769 = vmatprep.subr.bf16.mxu0 0
      %1770 = vmatpush1.bf16.msra.mxu0 0
      %1771 = vmatprep.subr.bf16.mxu0 0
      %1772 = vmatpush1.bf16.msra.mxu0 0
      %1773 = vmatprep.subr.bf16.mxu0 0
      %1774 = vmatpush1.bf16.msra.mxu0 0
      %1775 = vmatprep.subr.bf16.mxu0 0
      %1776 = vmatpush1.bf16.msra.mxu0 0
      %1777 = vmatprep.subr.bf16.mxu0 0
      %1778 = vmatpush1.bf16.msra.mxu0 0
      %1779 = vmatprep.mubr.bf16.mxu0 0
      %1780 = vmatmul.mubr.bf16.gmra.mrb[0].mxu0 %v1389
      %v1781 = vpop.f32.mrb[0].mxu0
      %v1782 = vadd.f32 %v1734, %v1781
      %v1783 = vpop.f32.mrb[0].mxu0
      %v1784 = vpop.f32.mrb[0].mxu0
      %v1785 = vpop.f32.mrb[0].mxu0
      %1786 = vdwg.mxu0
      %s1787 = scalar_lea.vmem %s2, 176
      %v1788 = vld [vmem:[%s1787] sm:$0xf]
      %v1789 = vld [vmem:[%s1787 + $0x4] sm:$0xf]
      %v1790 = vld [vmem:[%s1787 + $0x8] sm:$0xf]
      %v1791 = vld [vmem:[%s1787 + $0xc] sm:$0xf]
      %v1792 = vld [vmem:[%s5 + $0x14] sm:$0x1]
      %v1793 = vlaneseq
      %v1794 = vshrl.u32 %v1793, 7
      %v1795 = vsub.s32 0, %v1794
      %v1796 = vrot.slane %v1792, %v1795
      %v1801 = vunpack.c.l.b16 %v1788
      %v1802 = vunpack.c.l.b16 %v1789
      %v1803 = vunpack.c.l.b16 %v1790
      %v1804 = vunpack.c.l.b16 %v1791
      %v1805 = vpack.c.b16 %v1802, %v1801
      %v1806 = vpack.c.b16 %v1804, %v1803
      %1809 = vmatprep.subr.bf16.mxu0 0
      %1810 = vmatpush1.bf16.msra.mxu0 %v1805
      %1811 = vmatprep.subr.bf16.mxu0 0
      %1812 = vmatpush1.bf16.msra.mxu0 %v1806
      %1813 = vmatprep.subr.bf16.mxu0 0
      %1814 = vmatpush1.bf16.msra.mxu0 0
      %1815 = vmatprep.subr.bf16.mxu0 0
      %1816 = vmatpush1.bf16.msra.mxu0 0
      %1817 = vmatprep.subr.bf16.mxu0 0
      %1818 = vmatpush1.bf16.msra.mxu0 0
      %1819 = vmatprep.subr.bf16.mxu0 0
      %1820 = vmatpush1.bf16.msra.mxu0 0
      %1821 = vmatprep.subr.bf16.mxu0 0
      %1822 = vmatpush1.bf16.msra.mxu0 0
      %1823 = vmatprep.subr.bf16.mxu0 0
      %1824 = vmatpush1.bf16.msra.mxu0 0
      %1825 = vmatprep.subr.bf16.mxu0 0
      %1826 = vmatpush1.bf16.msra.mxu0 0
      %1827 = vmatprep.subr.bf16.mxu0 0
      %1828 = vmatpush1.bf16.msra.mxu0 0
      %1829 = vmatprep.subr.bf16.mxu0 0
      %1830 = vmatpush1.bf16.msra.mxu0 0
      %1831 = vmatprep.subr.bf16.mxu0 0
      %1832 = vmatpush1.bf16.msra.mxu0 0
      %1833 = vmatprep.subr.bf16.mxu0 0
      %1834 = vmatpush1.bf16.msra.mxu0 0
      %1835 = vmatprep.subr.bf16.mxu0 0
      %1836 = vmatpush1.bf16.msra.mxu0 0
      %1837 = vmatprep.subr.bf16.mxu0 0
      %1838 = vmatpush1.bf16.msra.mxu0 0
      %1839 = vmatprep.subr.bf16.mxu0 0
      %1840 = vmatpush1.bf16.msra.mxu0 0
      %1841 = vmatprep.mubr.bf16.mxu0 0
      %1842 = vmatmul.mubr.bf16.gmra.mrb[0].mxu0 %v1389
      %v1843 = vpop.f32.mrb[0].mxu0
      %v1844 = vadd.f32 %v1796, %v1843
      %v1845 = vpop.f32.mrb[0].mxu0
      %v1846 = vpop.f32.mrb[0].mxu0
      %v1847 = vpop.f32.mrb[0].mxu0
      %1848 = vdwg.mxu0
      %v1849 = vpack.c.bf16 %v1720, %v1720
      %v1850 = vpack.c.bf16 %v1782, %v1782
      %v1851 = vpack.c.bf16 %v1844, %v1844
      %v1853 = vsel %vm622, %v1849, 0
      %v1856 = vsel %vm622, %v1850, 0
      %1858 = vmatprep.subr.bf16.mxu0 0
      %1859 = vmatpush1.bf16.xpose.msra.mxu0 %v1856
      %1860 = vmatprep.subr.bf16.mxu0 0
      %1861 = vmatpush1.bf16.xpose.msra.mxu0 0
      %1862 = vmatprep.subr.bf16.mxu0 0
      %1863 = vmatpush1.bf16.xpose.msra.mxu0 0
      %1864 = vmatprep.subr.bf16.mxu0 0
      %1865 = vmatpush1.bf16.xpose.msra.mxu0 0
      %1866 = vmatprep.subr.bf16.mxu0 0
      %1867 = vmatpush1.bf16.xpose.msra.mxu0 0
      %1868 = vmatprep.subr.bf16.mxu0 0
      %1869 = vmatpush1.bf16.xpose.msra.mxu0 0
      %1870 = vmatprep.subr.bf16.mxu0 0
      %1871 = vmatpush1.bf16.xpose.msra.mxu0 0
      %1872 = vmatprep.subr.bf16.mxu0 0
      %1873 = vmatpush1.bf16.xpose.msra.mxu0 0
      %1874 = vmatprep.subr.bf16.mxu0 0
      %1875 = vmatpush1.bf16.xpose.msra.mxu0 0
      %1876 = vmatprep.subr.bf16.mxu0 0
      %1877 = vmatpush1.bf16.xpose.msra.mxu0 0
      %1878 = vmatprep.subr.bf16.mxu0 0
      %1879 = vmatpush1.bf16.xpose.msra.mxu0 0
      %1880 = vmatprep.subr.bf16.mxu0 0
      %1881 = vmatpush1.bf16.xpose.msra.mxu0 0
      %1882 = vmatprep.subr.bf16.mxu0 0
      %1883 = vmatpush1.bf16.xpose.msra.mxu0 0
      %1884 = vmatprep.subr.bf16.mxu0 0
      %1885 = vmatpush1.bf16.xpose.msra.mxu0 0
      %1886 = vmatprep.subr.bf16.mxu0 0
      %1887 = vmatpush1.bf16.xpose.msra.mxu0 0
      %1888 = vmatprep.subr.bf16.mxu0 0
      %1889 = vmatpush1.bf16.xpose.msra.mxu0 0
      %1890 = vmatprep.mubr.bf16.mxu0 0
      %1891 = vmatmul.mubr.bf16.gmra.mrb[0].mxu0 %v1853
      %v1892 = vpop.f32.mrb[0].mxu0
      %v1893 = vadd.f32 0.0, %v1892
      %v1894 = vpop.f32.mrb[0].mxu0
      %v1895 = vpop.f32.mrb[0].mxu0
      %v1896 = vpop.f32.mrb[0].mxu0
      %1897 = vdwg.mxu0
      %v1898 = vmul.f32 %v1893, 0.25
      %v1899 = vadd.f32 %v1898, %v254
      %v1900 = vmul.f32 %v1899, 1.442695
      %v1901 = vpow.pop %v1900
      %v1902 = vsel %vm673, %v1901, 0.0
      %1903 = vadd.xlane.f32.xlu0 %v1902
      %v1904 = vpop.xlane.xlu0 %1903
      %v1905 = vrcp.pop %v1904
      %v1906 = vmul.f32 %v1901, %v1905
      %v1907 = vpack.c.bf16 %v1906, %v1906
      %v1909 = vsel %vm673, %v1907, 0
      %v1912 = vsel %vm683, %v1851, 0
      %1914 = vmatprep.subr.bf16.mxu0 0
      %1915 = vmatpush1.bf16.msra.mxu0 %v1912
      %1916 = vmatprep.subr.bf16.mxu0 0
      %1917 = vmatpush1.bf16.msra.mxu0 0
      %1918 = vmatprep.subr.bf16.mxu0 0
      %1919 = vmatpush1.bf16.msra.mxu0 0
      %1920 = vmatprep.subr.bf16.mxu0 0
      %1921 = vmatpush1.bf16.msra.mxu0 0
      %1922 = vmatprep.subr.bf16.mxu0 0
      %1923 = vmatpush1.bf16.msra.mxu0 0
      %1924 = vmatprep.subr.bf16.mxu0 0
      %1925 = vmatpush1.bf16.msra.mxu0 0
      %1926 = vmatprep.subr.bf16.mxu0 0
      %1927 = vmatpush1.bf16.msra.mxu0 0
      %1928 = vmatprep.subr.bf16.mxu0 0
      %1929 = vmatpush1.bf16.msra.mxu0 0
      %1930 = vmatprep.subr.bf16.mxu0 0
      %1931 = vmatpush1.bf16.msra.mxu0 0
      %1932 = vmatprep.subr.bf16.mxu0 0
      %1933 = vmatpush1.bf16.msra.mxu0 0
      %1934 = vmatprep.subr.bf16.mxu0 0
      %1935 = vmatpush1.bf16.msra.mxu0 0
      %1936 = vmatprep.subr.bf16.mxu0 0
      %1937 = vmatpush1.bf16.msra.mxu0 0
      %1938 = vmatprep.subr.bf16.mxu0 0
      %1939 = vmatpush1.bf16.msra.mxu0 0
      %1940 = vmatprep.subr.bf16.mxu0 0
      %1941 = vmatpush1.bf16.msra.mxu0 0
      %1942 = vmatprep.subr.bf16.mxu0 0
      %1943 = vmatpush1.bf16.msra.mxu0 0
      %1944 = vmatprep.subr.bf16.mxu0 0
      %1945 = vmatpush1.bf16.msra.mxu0 0
      %1946 = vmatprep.mubr.bf16.mxu0 0
      %1947 = vmatmul.mubr.bf16.gmra.mrb[0].mxu0 %v1909
      %v1948 = vpop.f32.mrb[0].mxu0
      %v1949 = vadd.f32 0.0, %v1948
      %v1950 = vpop.f32.mrb[0].mxu0
      %v1951 = vpop.f32.mrb[0].mxu0
      %v1952 = vpop.f32.mrb[0].mxu0
      %1953 = vdwg.mxu0
      %v1954 = vld [vmem:[%s3 + $0xb8] sm:$0xf]
      %v1955 = vld [vmem:[%s3 + $0xbc] sm:$0xf]
      %v1956 = vpack.c.bf16 %v1949, %v1949
      %v1959 = vunpack.c.l.b16 %v1954
      %v1960 = vunpack.c.l.b16 %v1955
      %v1961 = vpack.c.b16 %v1960, %v1959
      %v1964 = vsel %vm622, %v1956, 0
      %1966 = vmatprep.subr.bf16.mxu0 0
      %1967 = vmatpush1.bf16.msra.mxu0 %v1961
      %1968 = vmatprep.subr.bf16.mxu0 0
      %1969 = vmatpush1.bf16.msra.mxu0 0
      %1970 = vmatprep.subr.bf16.mxu0 0
      %1971 = vmatpush1.bf16.msra.mxu0 0
      %1972 = vmatprep.subr.bf16.mxu0 0
      %1973 = vmatpush1.bf16.msra.mxu0 0
      %1974 = vmatprep.subr.bf16.mxu0 0
      %1975 = vmatpush1.bf16.msra.mxu0 0
      %1976 = vmatprep.subr.bf16.mxu0 0
      %1977 = vmatpush1.bf16.msra.mxu0 0
      %1978 = vmatprep.subr.bf16.mxu0 0
      %1979 = vmatpush1.bf16.msra.mxu0 0
      %1980 = vmatprep.subr.bf16.mxu0 0
      %1981 = vmatpush1.bf16.msra.mxu0 0
      %1982 = vmatprep.subr.bf16.mxu0 0
      %1983 = vmatpush1.bf16.msra.mxu0 0
      %1984 = vmatprep.subr.bf16.mxu0 0
      %1985 = vmatpush1.bf16.msra.mxu0 0
      %1986 = vmatprep.subr.bf16.mxu0 0
      %1987 = vmatpush1.bf16.msra.mxu0 0
      %1988 = vmatprep.subr.bf16.mxu0 0
      %1989 = vmatpush1.bf16.msra.mxu0 0
      %1990 = vmatprep.subr.bf16.mxu0 0
      %1991 = vmatpush1.bf16.msra.mxu0 0
      %1992 = vmatprep.subr.bf16.mxu0 0
      %1993 = vmatpush1.bf16.msra.mxu0 0
      %1994 = vmatprep.subr.bf16.mxu0 0
      %1995 = vmatpush1.bf16.msra.mxu0 0
      %1996 = vmatprep.subr.bf16.mxu0 0
      %1997 = vmatpush1.bf16.msra.mxu0 0
      %1998 = vmatprep.mubr.bf16.mxu0 0
      %1999 = vmatmul.mubr.bf16.gmra.mrb[0].mxu0 %v1964
      %v2000 = vpop.f32.mrb[0].mxu0
      %v2001 = vadd.f32 0.0, %v2000
      %v2002 = vpop.f32.mrb[0].mxu0
      %v2003 = vpop.f32.mrb[0].mxu0
      %v2004 = vpop.f32.mrb[0].mxu0
      %2005 = vdwg.mxu0
      %v2008 = vunpack.c.l.b16 %v1660
      %v2009 = vunpack.c.l.b16 %v1661
      %v2010 = vpack.c.b16 %v2009, %v2008
      %v2013 = vsel %vm622, %v1662, 0
      %2015 = vmatprep.subr.bf16.mxu0 0
      %2016 = vmatpush1.bf16.msra.mxu0 %v2010
      %2017 = vmatprep.subr.bf16.mxu0 0
      %2018 = vmatpush1.bf16.msra.mxu0 0
      %2019 = vmatprep.subr.bf16.mxu0 0
      %2020 = vmatpush1.bf16.msra.mxu0 0
      %2021 = vmatprep.subr.bf16.mxu0 0
      %2022 = vmatpush1.bf16.msra.mxu0 0
      %2023 = vmatprep.subr.bf16.mxu0 0
      %2024 = vmatpush1.bf16.msra.mxu0 0
      %2025 = vmatprep.subr.bf16.mxu0 0
      %2026 = vmatpush1.bf16.msra.mxu0 0
      %2027 = vmatprep.subr.bf16.mxu0 0
      %2028 = vmatpush1.bf16.msra.mxu0 0
      %2029 = vmatprep.subr.bf16.mxu0 0
      %2030 = vmatpush1.bf16.msra.mxu0 0
      %2031 = vmatprep.subr.bf16.mxu0 0
      %2032 = vmatpush1.bf16.msra.mxu0 0
      %2033 = vmatprep.subr.bf16.mxu0 0
      %2034 = vmatpush1.bf16.msra.mxu0 0
      %2035 = vmatprep.subr.bf16.mxu0 0
      %2036 = vmatpush1.bf16.msra.mxu0 0
      %2037 = vmatprep.subr.bf16.mxu0 0
      %2038 = vmatpush1.bf16.msra.mxu0 0
      %2039 = vmatprep.subr.bf16.mxu0 0
      %2040 = vmatpush1.bf16.msra.mxu0 0
      %2041 = vmatprep.subr.bf16.mxu0 0
      %2042 = vmatpush1.bf16.msra.mxu0 0
      %2043 = vmatprep.subr.bf16.mxu0 0
      %2044 = vmatpush1.bf16.msra.mxu0 0
      %2045 = vmatprep.subr.bf16.mxu0 0
      %2046 = vmatpush1.bf16.msra.mxu0 0
      %2047 = vmatprep.mubr.bf16.mxu0 0
      %2048 = vmatmul.mubr.bf16.gmra.mrb[0].mxu0 %v2013
      %v2049 = vpop.f32.mrb[0].mxu0
      %v2050 = vadd.f32 %v2001, %v2049
      %v2051 = vpop.f32.mrb[0].mxu0
      %v2052 = vpop.f32.mrb[0].mxu0
      %v2053 = vpop.f32.mrb[0].mxu0
      %2054 = vdwg.mxu0
      %v2055 = vadd.f32 %v1339, %v2050
      %v2056 = vld [vmem:[%s5 + $0x15] sm:$0x1]
      %v2057 = vlaneseq
      %v2058 = vshrl.u32 %v2057, 7
      %v2059 = vsub.s32 0, %v2058
      %v2060 = vrot.slane %v2056, %v2059
      %v2061 = vadd.f32 %v2055, %v2060
      %v2062 = vld [vmem:[%s5 + $0x16] sm:$0x1]
      %v2063 = vld [vmem:[%s5 + $0x17] sm:$0x1]
      %v2064 = vsel %vm405, %v2061, 0.0
      %2065 = vadd.xlane.f32.xlu0 %v2064
      %v2066 = vpop.xlane.xlu0 %2065
      %v2067 = vmul.f32 %v2066, %v409
      %v2068 = vsub.f32 %v2061, %v2067
      %v2069 = vmul.f32 %v2068, %v2068
      %v2070 = vsel %vm405, %v2069, 0.0
      %2071 = vadd.xlane.f32.xlu0 %v2070
      %v2072 = vpop.xlane.xlu0 %2071
      %v2073 = vmul.f32 %v2072, %v409
      %v2074 = vadd.f32 %v2073, 1e-12
      %v2075 = vrsqrt.pop %v2074
      %v2076 = vmul.f32 %v2068, %v2075
      %v2077 = vlaneseq
      %v2078 = vshrl.u32 %v2077, 7
      %v2079 = vsub.s32 0, %v2078
      %v2080 = vrot.slane %v2062, %v2079
      %v2081 = vmul.f32 %v2076, %v2080
      %v2082 = vlaneseq
      %v2083 = vshrl.u32 %v2082, 7
      %v2084 = vsub.s32 0, %v2083
      %v2085 = vrot.slane %v2063, %v2084
      %v2086 = vadd.f32 %v2081, %v2085
      %s2087 = scalar_lea.vmem %s4, 16
      %v2088 = vld [vmem:[%s2087] sm:$0xf]
      %v2089 = vld [vmem:[%s2087 + $0x4] sm:$0xf]
      %v2090 = vld [vmem:[%s2087 + $0x8] sm:$0xf]
      %v2091 = vld [vmem:[%s2087 + $0xc] sm:$0xf]
      %v2092 = vpack.c.bf16 %v2086, %v2086
      %v2093 = vld [vmem:[%s5 + $0x18] sm:$0x1]
      %v2094 = vlaneseq
      %v2095 = vshrl.u32 %v2094, 7
      %v2096 = vsub.s32 0, %v2095
      %v2097 = vrot.slane %v2093, %v2096
      %v2102 = vunpack.c.l.b16 %v2088
      %v2103 = vunpack.c.l.b16 %v2089
      %v2104 = vunpack.c.l.b16 %v2090
      %v2105 = vunpack.c.l.b16 %v2091
      %v2106 = vpack.c.b16 %v2103, %v2102
      %v2107 = vpack.c.b16 %v2105, %v2104
      %v2111 = vsel %vm405, %v2092, 0
      %2113 = vmatprep.subr.bf16.mxu0 0
      %2114 = vmatpush1.bf16.msra.mxu0 %v2106
      %2115 = vmatprep.subr.bf16.mxu0 0
      %2116 = vmatpush1.bf16.msra.mxu0 %v2107
      %2117 = vmatprep.subr.bf16.mxu0 0
      %2118 = vmatpush1.bf16.msra.mxu0 0
      %2119 = vmatprep.subr.bf16.mxu0 0
      %2120 = vmatpush1.bf16.msra.mxu0 0
      %2121 = vmatprep.subr.bf16.mxu0 0
      %2122 = vmatpush1.bf16.msra.mxu0 0
      %2123 = vmatprep.subr.bf16.mxu0 0
      %2124 = vmatpush1.bf16.msra.mxu0 0
      %2125 = vmatprep.subr.bf16.mxu0 0
      %2126 = vmatpush1.bf16.msra.mxu0 0
      %2127 = vmatprep.subr.bf16.mxu0 0
      %2128 = vmatpush1.bf16.msra.mxu0 0
      %2129 = vmatprep.subr.bf16.mxu0 0
      %2130 = vmatpush1.bf16.msra.mxu0 0
      %2131 = vmatprep.subr.bf16.mxu0 0
      %2132 = vmatpush1.bf16.msra.mxu0 0
      %2133 = vmatprep.subr.bf16.mxu0 0
      %2134 = vmatpush1.bf16.msra.mxu0 0
      %2135 = vmatprep.subr.bf16.mxu0 0
      %2136 = vmatpush1.bf16.msra.mxu0 0
      %2137 = vmatprep.subr.bf16.mxu0 0
      %2138 = vmatpush1.bf16.msra.mxu0 0
      %2139 = vmatprep.subr.bf16.mxu0 0
      %2140 = vmatpush1.bf16.msra.mxu0 0
      %2141 = vmatprep.subr.bf16.mxu0 0
      %2142 = vmatpush1.bf16.msra.mxu0 0
      %2143 = vmatprep.subr.bf16.mxu0 0
      %2144 = vmatpush1.bf16.msra.mxu0 0
      %2145 = vmatprep.mubr.bf16.mxu0 0
      %2146 = vmatmul.mubr.bf16.gmra.mrb[0].mxu0 %v2111
      %v2147 = vpop.f32.mrb[0].mxu0
      %v2148 = vadd.f32 %v2097, %v2147
      %v2149 = vpop.f32.mrb[0].mxu0
      %v2150 = vpop.f32.mrb[0].mxu0
      %v2151 = vpop.f32.mrb[0].mxu0
      %2152 = vdwg.mxu0
      %v2153 = vmul.f32 %v2148, %v2148
      %v2154 = vmul.f32 %v2148, %v2153
      %v2155 = vmul.f32 %v2154, 0.044715
      %v2156 = vadd.f32 %v2148, %v2155
      %v2157 = vmul.f32 %v2156, 0.7978846
      %v2158 = vtanh.pop %v2157
      %v2159 = vadd.f32 %v2158, 1.0
      %v2160 = vmul.f32 %v2159, 0.5
      %v2161 = vmul.f32 %v2148, %v2160
      %v2162 = vld [vmem:[%s3 + $0xc0] sm:$0xf]
      %v2163 = vld [vmem:[%s3 + $0xc4] sm:$0xf]
      %v2164 = vld [vmem:[%s3 + $0xc8] sm:$0xf]
      %v2165 = vld [vmem:[%s3 + $0xcc] sm:$0xf]
      %v2166 = vld [vmem:[%s3 + $0xd0] sm:$0xf]
      %v2167 = vld [vmem:[%s3 + $0xd4] sm:$0xf]
      %v2168 = vld [vmem:[%s3 + $0xd8] sm:$0xf]
      %v2169 = vld [vmem:[%s3 + $0xdc] sm:$0xf]
      %v2170 = vld [vmem:[%s3 + $0xe0] sm:$0xf]
      %v2171 = vld [vmem:[%s3 + $0xe4] sm:$0xf]
      %v2172 = vld [vmem:[%s3 + $0xe8] sm:$0xf]
      %v2173 = vld [vmem:[%s3 + $0xec] sm:$0xf]
      %v2174 = vld [vmem:[%s3 + $0xf0] sm:$0xf]
      %v2175 = vld [vmem:[%s3 + $0xf4] sm:$0xf]
      %v2176 = vld [vmem:[%s3 + $0xf8] sm:$0xf]
      %v2177 = vld [vmem:[%s3 + $0xfc] sm:$0xf]
      %v2178 = vpack.c.bf16 %v2161, %v2161
      %v2195 = vunpack.c.l.b16 %v2162
      %v2196 = vunpack.c.l.b16 %v2163
      %v2197 = vunpack.c.l.b16 %v2164
      %v2198 = vunpack.c.l.b16 %v2165
      %v2199 = vunpack.c.l.b16 %v2166
      %v2200 = vunpack.c.l.b16 %v2167
      %v2201 = vunpack.c.l.b16 %v2168
      %v2202 = vunpack.c.l.b16 %v2169
      %v2203 = vunpack.c.l.b16 %v2170
      %v2204 = vunpack.c.l.b16 %v2171
      %v2205 = vunpack.c.l.b16 %v2172
      %v2206 = vunpack.c.l.b16 %v2173
      %v2207 = vunpack.c.l.b16 %v2174
      %v2208 = vunpack.c.l.b16 %v2175
      %v2209 = vunpack.c.l.b16 %v2176
      %v2210 = vunpack.c.l.b16 %v2177
      %v2211 = vpack.c.b16 %v2196, %v2195
      %v2212 = vpack.c.b16 %v2198, %v2197
      %v2213 = vpack.c.b16 %v2200, %v2199
      %v2214 = vpack.c.b16 %v2202, %v2201
      %v2215 = vpack.c.b16 %v2204, %v2203
      %v2216 = vpack.c.b16 %v2206, %v2205
      %v2217 = vpack.c.b16 %v2208, %v2207
      %v2218 = vpack.c.b16 %v2210, %v2209
      %2227 = vmatprep.subr.bf16.mxu0 0
      %2228 = vmatpush1.bf16.msra.mxu0 %v2211
      %2229 = vmatprep.subr.bf16.mxu0 0
      %2230 = vmatpush1.bf16.msra.mxu0 %v2212
      %2231 = vmatprep.subr.bf16.mxu0 0
      %2232 = vmatpush1.bf16.msra.mxu0 %v2213
      %2233 = vmatprep.subr.bf16.mxu0 0
      %2234 = vmatpush1.bf16.msra.mxu0 %v2214
      %2235 = vmatprep.subr.bf16.mxu0 0
      %2236 = vmatpush1.bf16.msra.mxu0 %v2215
      %2237 = vmatprep.subr.bf16.mxu0 0
      %2238 = vmatpush1.bf16.msra.mxu0 %v2216
      %2239 = vmatprep.subr.bf16.mxu0 0
      %2240 = vmatpush1.bf16.msra.mxu0 %v2217
      %2241 = vmatprep.subr.bf16.mxu0 0
      %2242 = vmatpush1.bf16.msra.mxu0 %v2218
      %2243 = vmatprep.subr.bf16.mxu0 0
      %2244 = vmatpush1.bf16.msra.mxu0 0
      %2245 = vmatprep.subr.bf16.mxu0 0
      %2246 = vmatpush1.bf16.msra.mxu0 0
      %2247 = vmatprep.subr.bf16.mxu0 0
      %2248 = vmatpush1.bf16.msra.mxu0 0
      %2249 = vmatprep.subr.bf16.mxu0 0
      %2250 = vmatpush1.bf16.msra.mxu0 0
      %2251 = vmatprep.subr.bf16.mxu0 0
      %2252 = vmatpush1.bf16.msra.mxu0 0
      %2253 = vmatprep.subr.bf16.mxu0 0
      %2254 = vmatpush1.bf16.msra.mxu0 0
      %2255 = vmatprep.subr.bf16.mxu0 0
      %2256 = vmatpush1.bf16.msra.mxu0 0
      %2257 = vmatprep.subr.bf16.mxu0 0
      %2258 = vmatpush1.bf16.msra.mxu0 0
      %2259 = vmatprep.mubr.bf16.mxu0 0
      %2260 = vmatmul.mubr.bf16.gmra.mrb[0].mxu0 %v2178
      %v2261 = vpop.f32.mrb[0].mxu0
      %v2262 = vadd.f32 0.0, %v2261
      %v2263 = vpop.f32.mrb[0].mxu0
      %v2264 = vpop.f32.mrb[0].mxu0
      %v2265 = vpop.f32.mrb[0].mxu0
      %2266 = vdwg.mxu0
      %v2267 = vadd.f32 %v2061, %v2262
      %v2268 = vld [vmem:[%s5 + $0x19] sm:$0x1]
      %v2269 = vlaneseq
      %v2270 = vshrl.u32 %v2269, 7
      %v2271 = vsub.s32 0, %v2270
      %v2272 = vrot.slane %v2268, %v2271
      %v2273 = vadd.f32 %v2267, %v2272
      %v2274 = vld [vmem:[%s5 + $0x1a] sm:$0x1]
      %v2275 = vld [vmem:[%s5 + $0x1b] sm:$0x1]
      %v2276 = vsel %vm405, %v2273, 0.0
      %2277 = vadd.xlane.f32.xlu0 %v2276
      %v2278 = vpop.xlane.xlu0 %2277
      %v2279 = vmul.f32 %v2278, %v409
      %v2280 = vsub.f32 %v2273, %v2279
      %v2281 = vmul.f32 %v2280, %v2280
      %v2282 = vsel %vm405, %v2281, 0.0
      %2283 = vadd.xlane.f32.xlu0 %v2282
      %v2284 = vpop.xlane.xlu0 %2283
      %v2285 = vmul.f32 %v2284, %v409
      %v2286 = vadd.f32 %v2285, 1e-12
      %v2287 = vrsqrt.pop %v2286
      %v2288 = vmul.f32 %v2280, %v2287
      %v2289 = vlaneseq
      %v2290 = vshrl.u32 %v2289, 7
      %v2291 = vsub.s32 0, %v2290
      %v2292 = vrot.slane %v2274, %v2291
      %v2293 = vmul.f32 %v2288, %v2292
      %v2294 = vlaneseq
      %v2295 = vshrl.u32 %v2294, 7
      %v2296 = vsub.s32 0, %v2295
      %v2297 = vrot.slane %v2275, %v2296
      %v2298 = vadd.f32 %v2293, %v2297
      %2299 = vst.msk [vmem:[%s249] sm:$0xff] %vm405, %v2298
      %p2300 = scmp.lt.s32.totalorder %s17, 1
      %s2301 = scalar_select %p2300, %s17, 1
      %s2302 = smul.addr %s2301, 8
      %s2303 = scalar_lea.vmem %s6, %s2302
      // Predicated region
      $region45: #{image_encoder_forward.1} parent=43 // pred_check
        %p2304 = pneg %p166
      $region46: #{image_encoder_forward.1} parent=43 // pred_check_branch
        %2306 = sbr.rel (%p2304) target = $region48
      $region47: #{image_encoder_forward.1} parent=43 // pred_region
        _
      $region48: #{image_encoder_forward.1} parent=43 // pred_fallthru
        _
    $region44: #{image_encoder_forward.1} parent=5 // pred_fallthru
      _
    %p2307 = scmp.le.s32.totalorder 2, %s12
    // Predicated region
    $region49: #{image_encoder_forward.1} parent=5 // pred_check
      %p2308 = pneg %p2307
    $region50: #{image_encoder_forward.1} parent=5 // pred_check_branch
      %2310 = sbr.rel (%p2308) target = $region52
    $region51: #{image_encoder_forward.1} parent=5 // pred_region
      %s2311 = ssub.s32 %s12, 2
      // Predicated region
      $region53: #{image_encoder_forward.1} parent=51 // pred_check
        %p2312 = pneg %p172
      $region54: #{image_encoder_forward.1} parent=51 // pred_check_branch
        %2314 = sbr.rel (%p2312) target = $region56
      $region55: #{image_encoder_forward.1} parent=51 // pred_region
        %p2315 = scmp.lt.s32.totalorder %s18, 1
        %s2316 = scalar_select %p2315, %s18, 1
        %s2317 = smul.addr %s2316, 8
        %s2318 = scalar_lea.vmem %s6, %s2317
      $region56: #{image_encoder_forward.1} parent=51 // pred_fallthru
        _
    $region52: #{image_encoder_forward.1} parent=5 // pred_fallthru
      _
  $region6: #{image_encoder_forward.1} parent=0 // loop_footer
    %s16 = sadd.s32 1, %s12
  $region7: #{image_encoder_forward.1} parent=0 // loop_footer_branch
    %11 = sbr.rel target = $region3
  $region8: #{image_encoder_forward.1} parent=0 // loop_exit
    _

</llo_original>
